<compile_context>
chip_gen: v5e
topology: v5e:2x2
jax: 0.10.0
libtpu: 0.0.40
codegen_flags: <defaults>
</compile_context>

<pallas_src>
import functools

import numpy as np
import jax
import jax.numpy as jnp
from jax.experimental import pallas as pl
from jax.experimental.pallas import tpu as pltpu

# ---------------------------------------------------------------------------
# Scaled-down stand-in for wtcnn1dnc_config.yml / params / LABEL_DICT
# ---------------------------------------------------------------------------
W_OUT = 3
LABEL_DICT_LEN = 4
NUM_CHAINS = 2
EMB_SIZE = 8                 # CWT scales == conv input channels
SIG_LEN = 64                 # per-chain signal length (scaled down)
BATCH = 2
CONV_LAYERS = [
    dict(out_channels=16, kernel_size=3, stride=1, padding=1,
         pooling_kernel_size=2, pooling_stride=2, pooling_padding=0),
    dict(out_channels=32, kernel_size=3, stride=1, padding=1,
         pooling_kernel_size=2, pooling_stride=2, pooling_padding=0),
]
CHAIN_OUT_DIM = 32           # real model: 512
FF_DIM = 128                 # real model: 2048
CWT_TAPS = 17
CWT_TAPS_PAD = 24            # padded to a multiple of 8 sublanes
BN_EPS = 1e-5


# ---------------------------------------------------------------------------
# Fused kernel: |CWT| -> conv1 -> pool1 -> conv2 -> pool2 -> per-chain FC ->
#               classifier -> classifier_binary
# ---------------------------------------------------------------------------
def wtcnn_kernel(patches_ref, wav_ref,
                 w1_ref, b1l_ref, tap1_ref, cm1_ref, sel1_ref,
                 w2_ref, b2l_ref, tap2_ref, cm2_ref,
                 selcol_ref, fw1t_ref, fb1t_ref, fw2_ref, fb2t_ref,
                 colm_ref, ecol_ref,
                 cw1_ref, cb1_ref, cw2_ref, cb2_ref,
                 bw1a_ref, bw1b_ref, bb1_ref, bw2_ref, bb2_ref,
                 out_ref, out2_ref,
                 *, nc, convs, l2):
    f32 = jnp.float32

    def conv_bn_relu(x, w_ref, bias_lanes, tap_ref, cm_ref, K, pad):
        """Conv1d(stride=1,'same') + folded BN + ReLU on lane-packed batches.

        x          : (Cin, lanes) with lanes = (chain, batch, time)
        w_ref[c]   : (Cout, K*Cin) per-chain weight, row index k*Cin + ci
        bias_lanes : (Cout, lanes) chain-resolved bias (precomputed)
        tap_ref[k] : (1, lanes) validity mask for tap offset k - pad
        cm_ref[c]  : (1, lanes) chain-c lane mask
        """
        wtot = x.shape[1]
        rows = []
        for k in range(K):
            d = k - pad
            if d == 0:
                rows.append(x)
            else:
                rows.append(pltpu.roll(x, shift=(-d) % wtot, axis=1) * tap_ref[k])
        pt = jnp.concatenate(rows, axis=0)                      # (K*Cin, lanes)
        y = bias_lanes
        for c in range(nc):
            y = y + jnp.dot(w_ref[c], pt,
                            preferred_element_type=f32) * cm_ref[c]
        return jnp.maximum(y, 0.0)

    # ---- |CWT|: one MXU matmul against wrapper-built Toeplitz patches ----
    h = jnp.abs(jnp.dot(wav_ref[...], patches_ref[...],
                        preferred_element_type=f32))            # (S, NC*B*L)

    # ---- conv1 + BN + ReLU + MaxPool1d(2,2) ----
    k1, p1 = convs[0]
    y1 = conv_bn_relu(h, w1_ref, b1l_ref[...], tap1_ref, cm1_ref, k1, p1)
    w0 = y1.shape[1]
    m1 = jnp.maximum(y1, pltpu.roll(y1, shift=w0 - 1, axis=1))   # max(y[t], y[t+1])
    h1 = jnp.dot(m1, sel1_ref[...], preferred_element_type=f32)  # (C1, NC*B*L/2)

    # ---- conv2 + BN + ReLU + MaxPool1d(2,2) (compaction folded into selcol) ----
    k2, p2 = convs[1]
    y2 = conv_bn_relu(h1, w2_ref, b2l_ref[...], tap2_ref, cm2_ref, k2, p2)
    w1t = y2.shape[1]
    m2 = jnp.maximum(y2, pltpu.roll(y2, shift=w1t - 1, axis=1))  # pooled at even lanes
    # Chain-block-diagonal copy so the FC1 selection automatically picks the
    # right chain's features (off-chain lanes are zeroed).
    m2bd = jnp.concatenate([m2 * cm2_ref[c] for c in range(nc)], axis=0)

    # ---- per-chain FC1: nn.Flatten + Linear folded into L2 selection matmuls.
    # acc[f, c*B+b] accumulates sum_{co,t} W1_c[f, co*L2+t] * pooled_c[b, co, t].
    acc = fb1t_ref[...]                                          # (FF, NC*B)
    for t in range(l2):
        g = jnp.dot(m2bd, selcol_ref[t], preferred_element_type=f32)      # (NC*C2, NC*B)
        acc = acc + jnp.dot(fw1t_ref[t], g, preferred_element_type=f32)   # (FF, NC*B)
    a1 = jnp.maximum(acc, 0.0)

    # ---- per-chain FC2 ----
    ft = fb2t_ref[...]                                           # (CHAIN_OUT, NC*B)
    for c in range(nc):
        ft = ft + jnp.dot(fw2_ref[c], a1, preferred_element_type=f32) * colm_ref[c]
    feat = jnp.maximum(ft, 0.0)

    # chain concat -> (NC*CHAIN_OUT, B) in (features, batch) orientation
    xcat = jnp.concatenate(
        [jnp.dot(feat, ecol_ref[c], preferred_element_type=f32) for c in range(nc)],
        axis=0)

    # ---- classifier (FC: Linear+ReLU, Linear+ReLU) ----
    hcl = jnp.maximum(jnp.dot(cw1_ref[...], xcat, preferred_element_type=f32)
                      + cb1_ref[...], 0.0)
    outT = jnp.maximum(jnp.dot(cw2_ref[...], hcl, preferred_element_type=f32)
                       + cb2_ref[...], 0.0)
    out_ref[...] = outT                                          # (W_OUT*LD, B)

    # ---- classifier_binary on concat([xcat, out]); first Linear pre-split ----
    hb = jnp.maximum(jnp.dot(bw1a_ref[...], xcat, preferred_element_type=f32)
                     + jnp.dot(bw1b_ref[...], outT, preferred_element_type=f32)
                     + bb1_ref[...], 0.0)
    out2_ref[...] = jnp.maximum(jnp.dot(bw2_ref[...], hb, preferred_element_type=f32)
                                + bb2_ref[...], 0.0)             # (W_OUT*2, B)


# ---------------------------------------------------------------------------
# Wrapper
# ---------------------------------------------------------------------------
def build_cwt_patches(x):
    """x: (B, NC, L) -> (CWT_TAPS_PAD, NC*B*L) Toeplitz patches for 'same'
    cross-correlation; lanes ordered (chain, batch, time)."""
    B, NC, L = x.shape
    K = CWT_TAPS
    pad_l = K // 2
    pad_r = K - 1 - pad_l
    xp = jnp.pad(x, ((0, 0), (0, 0), (pad_l, pad_r)))               # (B, NC, L+K-1)
    sl = jnp.stack([xp[:, :, k:k + L] for k in range(K)], axis=0)    # (K, B, NC, L)
    pt = jnp.transpose(sl, (0, 2, 1, 3)).reshape(K, NC * B * L)
    return jnp.pad(pt, ((0, CWT_TAPS_PAD - K), (0, 0)))


def model_forward(x, params):
    B, NC, L = x.shape
    assert NC * B == params["fb1t"].shape[1]
    patches = build_cwt_patches(x)

    operands = [patches, params["wav"],
                params["w1"], params["b1l"], params["tap1"], params["cm1"], params["sel1"],
                params["w2"], params["b2l"], params["tap2"], params["cm2"],
                params["selcol"], params["fw1t"], params["fb1t"], params["fw2"], params["fb2t"],
                params["colm"], params["ecol"],
                params["cw1"], params["cb1"], params["cw2"], params["cb2"],
                params["bw1a"], params["bw1b"], params["bb1"], params["bw2"], params["bb2"]]

    vmem = pl.BlockSpec(memory_space=pltpu.MemorySpace.VMEM)
    out_dim = params["cw2"].shape[0]
    out2_dim = params["bw2"].shape[0]
    convs = tuple((lc["kernel_size"], lc["padding"]) for lc in CONV_LAYERS)

    outT, out2T = pl.pallas_call(
        functools.partial(wtcnn_kernel, nc=NC, convs=convs,
                          l2=params["selcol"].shape[0]),
        out_shape=(jax.ShapeDtypeStruct((out_dim, B), jnp.float32),
                   jax.ShapeDtypeStruct((out2_dim, B), jnp.float32)),
        in_specs=[vmem] * len(operands),
        out_specs=(vmem, vmem),
    )(*operands)

    out = outT.T.reshape(B, W_OUT, -1)
    out2 = out2T.T.reshape(B, W_OUT, -1)
    return out, out2


# ---------------------------------------------------------------------------
# Parameter / constant construction (deterministic, in-script)
# ---------------------------------------------------------------------------
def make_wavelet_bank():
    scales = np.geomspace(1.0, 1000.0, num=EMB_SIZE)
    time = np.linspace(0.0, 4.0 * W_OUT, num=1024 * W_OUT)
    sample_period = float(np.diff(time).mean())
    t = (np.arange(CWT_TAPS) - CWT_TAPS // 2) * sample_period
    wav = np.zeros((EMB_SIZE, CWT_TAPS_PAD), np.float32)
    for i, a in enumerate(scales):
        ts = t / a
        psi = np.exp(-0.5 * ts * ts) * np.cos(5.0 * ts)             # Morlet
        wav[i, :CWT_TAPS] = psi / np.sqrt(a) * sample_period
    return wav


def init_params(key, B=BATCH):
    NC, S, L = NUM_CHAINS, EMB_SIZE, SIG_LEN
    keys = jax.random.split(key, NC + 2)

    def linear(k, din, dout):
        k1, k2 = jax.random.split(k)
        w = jax.random.normal(k1, (dout, din), jnp.float32) * 0.05   # torch layout (out, in)
        b = jax.random.normal(k2, (dout,), jnp.float32) * 0.05
        return w, b

    conv_w = [[] for _ in CONV_LAYERS]
    conv_b = [[] for _ in CONV_LAYERS]
    fc1_w, fc1_b, fc2_w, fc2_b = [], [], [], []

    in_ch, seg = S, L
    for ci in range(NC):
        lkeys = jax.random.split(keys[ci], len(CONV_LAYERS) + 1)
        in_ch, seg = S, L
        for li, lc in enumerate(CONV_LAYERS):
            K, P = lc["kernel_size"], lc["pooling_stride"]
            assert lc["stride"] == 1 and 2 * lc["padding"] == K - 1
            assert lc["pooling_kernel_size"] == P and lc["pooling_padding"] == 0
            assert seg % P == 0
            lk = jax.random.split(lkeys[li], 6)
            Cout = lc["out_channels"]
            w = jax.random.normal(lk[0], (Cout, in_ch, K), jnp.float32) * 0.1
            cbias = jax.random.normal(lk[1], (Cout,), jnp.float32) * 0.1
            gamma = 0.5 + jax.random.uniform(lk[2], (Cout,), jnp.float32)
            beta = jax.random.normal(lk[3], (Cout,), jnp.float32) * 0.1
            rmean = jax.random.normal(lk[4], (Cout,), jnp.float32) * 0.1
            rvar = 0.5 + jax.random.uniform(lk[5], (Cout,), jnp.float32)
            bn_s = gamma / jnp.sqrt(rvar + BN_EPS)
            # Fold BN into conv; weight rows ordered k*Cin + ci.
            w_mat = jnp.transpose(w * bn_s[:, None, None], (0, 2, 1)).reshape(Cout, K * in_ch)
            bias = (cbias - rmean) * bn_s + beta
            conv_w[li].append(w_mat)
            conv_b[li].append(np.asarray(bias))
            seg //= P
            in_ch = Cout
        flat_dim = in_ch * seg
        kf1, kf2 = jax.random.split(lkeys[-1])
        w1, b1 = linear(kf1, flat_dim, FF_DIM)
        w2, b2 = linear(kf2, FF_DIM, CHAIN_OUT_DIM)
        fc1_w.append(np.asarray(w1)); fc1_b.append(np.asarray(b1))
        fc2_w.append(np.asarray(w2)); fc2_b.append(np.asarray(b2))

    C2, L2 = in_ch, seg

    cls_in = CHAIN_OUT_DIM * NC
    ck1, ck2 = jax.random.split(keys[-2])
    cw1, cb1 = linear(ck1, cls_in, FF_DIM)
    cw2, cb2 = linear(ck2, FF_DIM, W_OUT * LABEL_DICT_LEN)
    bk1, bk2 = jax.random.split(keys[-1])
    bw1, bb1 = linear(bk1, cls_in + W_OUT * LABEL_DICT_LEN, FF_DIM)
    bw2, bb2 = linear(bk2, FF_DIM, W_OUT * 2)

    # ---- precomputed masks / selection matrices (all 0/1 f32) ----
    tap_masks, chain_masks, bias_lanes, w_stacked = [], [], [], []
    seg_i = L
    for li, lc in enumerate(CONV_LAYERS):
        K = lc["kernel_size"]
        lanes = NC * B * seg_i
        col = np.arange(lanes) % seg_i
        tm = np.zeros((K, 1, lanes), np.float32)
        for k in range(K):
            d = k - lc["padding"]
            tm[k, 0] = ((col + d >= 0) & (col + d < seg_i)).astype(np.float32)
        tap_masks.append(tm)
        cm = np.zeros((NC, 1, lanes), np.float32)
        bl = np.zeros((lc["out_channels"], lanes), np.float32)
        for c in range(NC):
            cm[c, 0, c * B * seg_i:(c + 1) * B * seg_i] = 1.0
            bl[:, c * B * seg_i:(c + 1) * B * seg_i] = conv_b[li][c][:, None]
        chain_masks.append(cm)
        bias_lanes.append(bl)
        w_stacked.append(jnp.stack(conv_w[li], axis=0))
        seg_i //= lc["pooling_stride"]

    # pool1 lane compaction
    n0 = NC * B * L
    sel1 = (np.arange(n0)[:, None] == 2 * np.arange(n0 // 2)[None, :]).astype(np.float32)

    # FC1 per-position selection (also does pool2 compaction + flatten)
    seg1 = L // 2
    lanes2 = NC * B * seg1
    selcol = np.zeros((L2, lanes2, NC * B), np.float32)
    for t in range(L2):
        for c in range(NC):
            for b in range(B):
                selcol[t, c * B * seg1 + b * seg1 + 2 * t, c * B + b] = 1.0

    # FC1 weights: fw1t[t, f, c*C2+co] = W1_c[f, co*L2 + t]   (torch flatten order)
    fw1t = np.zeros((L2, FF_DIM, NC * C2), np.float32)
    fb1t = np.zeros((FF_DIM, NC * B), np.float32)
    fb2t = np.zeros((CHAIN_OUT_DIM, NC * B), np.float32)
    for c in range(NC):
        wr = fc1_w[c].reshape(FF_DIM, C2, L2)
        fw1t[:, :, c * C2:(c + 1) * C2] = np.transpose(wr, (2, 0, 1))
        for b in range(B):
            fb1t[:, c * B + b] = fc1_b[c]
            fb2t[:, c * B + b] = fc2_b[c]

    colm = np.zeros((NC, 1, NC * B), np.float32)
    ecol = np.zeros((NC, NC * B, B), np.float32)
    for c in range(NC):
        colm[c, 0, c * B:(c + 1) * B] = 1.0
        for b in range(B):
            ecol[c, c * B + b, b] = 1.0

    j = jnp.asarray
    return dict(
        wav=j(make_wavelet_bank()),
        w1=w_stacked[0], b1l=j(bias_lanes[0]), tap1=j(tap_masks[0]),
        cm1=j(chain_masks[0]), sel1=j(sel1),
        w2=w_stacked[1], b2l=j(bias_lanes[1]), tap2=j(tap_masks[1]),
        cm2=j(chain_masks[1]),
        selcol=j(selcol), fw1t=j(fw1t), fb1t=j(fb1t),
        fw2=jnp.stack([j(w) for w in fc2_w], axis=0), fb2t=j(fb2t),
        colm=j(colm), ecol=j(ecol),
        cw1=j(cw1), cb1=j(np.asarray(cb1)[:, None]),
        cw2=j(cw2), cb2=j(np.asarray(cb2)[:, None]),
        bw1a=j(np.asarray(bw1)[:, :cls_in]), bw1b=j(np.asarray(bw1)[:, cls_in:]),
        bb1=j(np.asarray(bb1)[:, None]),
        bw2=j(bw2), bb2=j(np.asarray(bb2)[:, None]),
    )


if __name__ == "__main__":
    key = jax.random.PRNGKey(0)
    pkey, xkey = jax.random.split(key)
    params = init_params(pkey, B=BATCH)
    x = jax.random.normal(xkey, (BATCH, NUM_CHAINS, SIG_LEN), jnp.float32)
    fwd = jax.jit(model_forward)
    out, out2 = fwd(x, params)
    jax.block_until_ready((out, out2))
    assert out.shape == (BATCH, W_OUT, LABEL_DICT_LEN), out.shape
    assert out2.shape == (BATCH, W_OUT, 2), out2.shape
    assert out.dtype == jnp.float32 and out2.dtype == jnp.float32
    print("KERNEL_OK")
</pallas_src>

<mosaic_0001>
module attributes {stable_mosaic.version = 11 : i64} {
  func.func @wtcnn_kernel(%arg0: memref<24x256xf32, #tpu.memory_space<vmem>>, %arg1: memref<8x24xf32, #tpu.memory_space<vmem>>, %arg2: memref<2x16x24xf32, #tpu.memory_space<vmem>>, %arg3: memref<16x256xf32, #tpu.memory_space<vmem>>, %arg4: memref<3x1x256xf32, #tpu.memory_space<vmem>>, %arg5: memref<2x1x256xf32, #tpu.memory_space<vmem>>, %arg6: memref<256x128xf32, #tpu.memory_space<vmem>>, %arg7: memref<2x32x48xf32, #tpu.memory_space<vmem>>, %arg8: memref<32x128xf32, #tpu.memory_space<vmem>>, %arg9: memref<3x1x128xf32, #tpu.memory_space<vmem>>, %arg10: memref<2x1x128xf32, #tpu.memory_space<vmem>>, %arg11: memref<16x128x4xf32, #tpu.memory_space<vmem>>, %arg12: memref<16x128x64xf32, #tpu.memory_space<vmem>>, %arg13: memref<128x4xf32, #tpu.memory_space<vmem>>, %arg14: memref<2x32x128xf32, #tpu.memory_space<vmem>>, %arg15: memref<32x4xf32, #tpu.memory_space<vmem>>, %arg16: memref<2x1x4xf32, #tpu.memory_space<vmem>>, %arg17: memref<2x4x2xf32, #tpu.memory_space<vmem>>, %arg18: memref<128x64xf32, #tpu.memory_space<vmem>>, %arg19: memref<128x1xf32, #tpu.memory_space<vmem>>, %arg20: memref<12x128xf32, #tpu.memory_space<vmem>>, %arg21: memref<12x1xf32, #tpu.memory_space<vmem>>, %arg22: memref<128x64xf32, #tpu.memory_space<vmem>>, %arg23: memref<128x12xf32, #tpu.memory_space<vmem>>, %arg24: memref<128x1xf32, #tpu.memory_space<vmem>>, %arg25: memref<6x128xf32, #tpu.memory_space<vmem>>, %arg26: memref<6x1xf32, #tpu.memory_space<vmem>>, %arg27: memref<12x2xf32, #tpu.memory_space<vmem>>, %arg28: memref<6x2xf32, #tpu.memory_space<vmem>>) attributes {dimension_semantics = [], scalar_prefetch = 0 : i64, scratch_operands = 0 : i64, tpu.core_type = #tpu.core_type<tc>} {
    %c0 = arith.constant 0 : index
    %c0_0 = arith.constant 0 : index
    %0 = vector.load %arg1[%c0, %c0_0] : memref<8x24xf32, #tpu.memory_space<vmem>>, vector<8x24xf32>
    %c0_1 = arith.constant 0 : index
    %c0_2 = arith.constant 0 : index
    %1 = vector.load %arg0[%c0_1, %c0_2] : memref<24x256xf32, #tpu.memory_space<vmem>>, vector<24x256xf32>
    %cst = arith.constant dense<0.000000e+00> : vector<8x256xf32>
    %2 = tpu.matmul %0, %1, %cst {dimension_numbers = #tpu.dot_dimension_numbers<[1], [0], [0], [1], [0, 0, 1, 1], [], []>} : vector<8x24xf32>, vector<24x256xf32>, vector<8x256xf32> -> vector<8x256xf32>
    %3 = math.absf %2 : vector<8x256xf32>
    %c0_3 = arith.constant 0 : index
    %c0_4 = arith.constant 0 : index
    %4 = vector.load %arg3[%c0_3, %c0_4] : memref<16x256xf32, #tpu.memory_space<vmem>>, vector<16x256xf32>
    %c1_i32 = arith.constant 1 : i32
    %5 = tpu.dynamic_rotate %3 by %c1_i32 dim 1 : vector<8x256xf32>, i32 -> vector<8x256xf32>
    %c0_5 = arith.constant 0 : index
    %c0_6 = arith.constant 0 : index
    %c0_7 = arith.constant 0 : index
    %6 = vector.load %arg4[%c0_5, %c0_6, %c0_7] : memref<3x1x256xf32, #tpu.memory_space<vmem>>, vector<1x1x256xf32>
    %7 = vector.shape_cast %6 : vector<1x1x256xf32> to vector<1x256xf32>
    %8 = vector.broadcast %7 : vector<1x256xf32> to vector<8x256xf32>
    %9 = arith.mulf %5, %8 : vector<8x256xf32>
    %c255_i32 = arith.constant 255 : i32
    %10 = tpu.dynamic_rotate %3 by %c255_i32 dim 1 : vector<8x256xf32>, i32 -> vector<8x256xf32>
    %c2 = arith.constant 2 : index
    %c0_8 = arith.constant 0 : index
    %c0_9 = arith.constant 0 : index
    %11 = vector.load %arg4[%c2, %c0_8, %c0_9] : memref<3x1x256xf32, #tpu.memory_space<vmem>>, vector<1x1x256xf32>
    %12 = vector.shape_cast %11 : vector<1x1x256xf32> to vector<1x256xf32>
    %13 = vector.broadcast %12 : vector<1x256xf32> to vector<8x256xf32>
    %14 = arith.mulf %10, %13 : vector<8x256xf32>
    %15 = tpu.concatenate %9, %3, %14 in 0 : vector<8x256xf32>, vector<8x256xf32>, vector<8x256xf32> -> vector<24x256xf32>
    %c0_10 = arith.constant 0 : index
    %c0_11 = arith.constant 0 : index
    %c0_12 = arith.constant 0 : index
    %16 = vector.load %arg2[%c0_10, %c0_11, %c0_12] : memref<2x16x24xf32, #tpu.memory_space<vmem>>, vector<1x16x24xf32>
    %17 = vector.shape_cast %16 : vector<1x16x24xf32> to vector<16x24xf32>
    %cst_13 = arith.constant dense<0.000000e+00> : vector<16x256xf32>
    %18 = tpu.matmul %17, %15, %cst_13 {dimension_numbers = #tpu.dot_dimension_numbers<[1], [0], [0], [1], [0, 0, 1, 1], [], []>} : vector<16x24xf32>, vector<24x256xf32>, vector<16x256xf32> -> vector<16x256xf32>
    %c0_14 = arith.constant 0 : index
    %c0_15 = arith.constant 0 : index
    %c0_16 = arith.constant 0 : index
    %19 = vector.load %arg5[%c0_14, %c0_15, %c0_16] : memref<2x1x256xf32, #tpu.memory_space<vmem>>, vector<1x1x256xf32>
    %20 = vector.shape_cast %19 : vector<1x1x256xf32> to vector<1x256xf32>
    %21 = vector.broadcast %20 : vector<1x256xf32> to vector<16x256xf32>
    %22 = arith.mulf %18, %21 : vector<16x256xf32>
    %23 = arith.addf %4, %22 : vector<16x256xf32>
    %c1 = arith.constant 1 : index
    %c0_17 = arith.constant 0 : index
    %c0_18 = arith.constant 0 : index
    %24 = vector.load %arg2[%c1, %c0_17, %c0_18] : memref<2x16x24xf32, #tpu.memory_space<vmem>>, vector<1x16x24xf32>
    %25 = vector.shape_cast %24 : vector<1x16x24xf32> to vector<16x24xf32>
    %cst_19 = arith.constant dense<0.000000e+00> : vector<16x256xf32>
    %26 = tpu.matmul %25, %15, %cst_19 {dimension_numbers = #tpu.dot_dimension_numbers<[1], [0], [0], [1], [0, 0, 1, 1], [], []>} : vector<16x24xf32>, vector<24x256xf32>, vector<16x256xf32> -> vector<16x256xf32>
    %c1_20 = arith.constant 1 : index
    %c0_21 = arith.constant 0 : index
    %c0_22 = arith.constant 0 : index
    %27 = vector.load %arg5[%c1_20, %c0_21, %c0_22] : memref<2x1x256xf32, #tpu.memory_space<vmem>>, vector<1x1x256xf32>
    %28 = vector.shape_cast %27 : vector<1x1x256xf32> to vector<1x256xf32>
    %29 = vector.broadcast %28 : vector<1x256xf32> to vector<16x256xf32>
    %30 = arith.mulf %26, %29 : vector<16x256xf32>
    %31 = arith.addf %23, %30 : vector<16x256xf32>
    %cst_23 = arith.constant 0.000000e+00 : f32
    %32 = vector.broadcast %cst_23 : f32 to vector<16x256xf32>
    %33 = arith.maximumf %31, %32 : vector<16x256xf32>
    %c255_i32_24 = arith.constant 255 : i32
    %34 = tpu.dynamic_rotate %33 by %c255_i32_24 dim 1 : vector<16x256xf32>, i32 -> vector<16x256xf32>
    %35 = arith.maximumf %33, %34 : vector<16x256xf32>
    %c0_25 = arith.constant 0 : index
    %c0_26 = arith.constant 0 : index
    %36 = vector.load %arg6[%c0_25, %c0_26] : memref<256x128xf32, #tpu.memory_space<vmem>>, vector<256x128xf32>
    %cst_27 = arith.constant dense<0.000000e+00> : vector<16x128xf32>
    %37 = tpu.matmul %35, %36, %cst_27 {dimension_numbers = #tpu.dot_dimension_numbers<[1], [0], [0], [1], [0, 0, 1, 1], [], []>} : vector<16x256xf32>, vector<256x128xf32>, vector<16x128xf32> -> vector<16x128xf32>
    %c0_28 = arith.constant 0 : index
    %c0_29 = arith.constant 0 : index
    %38 = vector.load %arg8[%c0_28, %c0_29] : memref<32x128xf32, #tpu.memory_space<vmem>>, vector<32x128xf32>
    %c1_i32_30 = arith.constant 1 : i32
    %39 = tpu.dynamic_rotate %37 by %c1_i32_30 dim 1 : vector<16x128xf32>, i32 -> vector<16x128xf32>
    %c0_31 = arith.constant 0 : index
    %c0_32 = arith.constant 0 : index
    %c0_33 = arith.constant 0 : index
    %40 = vector.load %arg9[%c0_31, %c0_32, %c0_33] : memref<3x1x128xf32, #tpu.memory_space<vmem>>, vector<1x1x128xf32>
    %41 = vector.shape_cast %40 : vector<1x1x128xf32> to vector<1x128xf32>
    %42 = vector.broadcast %41 : vector<1x128xf32> to vector<16x128xf32>
    %43 = arith.mulf %39, %42 : vector<16x128xf32>
    %c127_i32 = arith.constant 127 : i32
    %44 = tpu.dynamic_rotate %37 by %c127_i32 dim 1 : vector<16x128xf32>, i32 -> vector<16x128xf32>
    %c2_34 = arith.constant 2 : index
    %c0_35 = arith.constant 0 : index
    %c0_36 = arith.constant 0 : index
    %45 = vector.load %arg9[%c2_34, %c0_35, %c0_36] : memref<3x1x128xf32, #tpu.memory_space<vmem>>, vector<1x1x128xf32>
    %46 = vector.shape_cast %45 : vector<1x1x128xf32> to vector<1x128xf32>
    %47 = vector.broadcast %46 : vector<1x128xf32> to vector<16x128xf32>
    %48 = arith.mulf %44, %47 : vector<16x128xf32>
    %49 = tpu.concatenate %43, %37, %48 in 0 : vector<16x128xf32>, vector<16x128xf32>, vector<16x128xf32> -> vector<48x128xf32>
    %c0_37 = arith.constant 0 : index
    %c0_38 = arith.constant 0 : index
    %c0_39 = arith.constant 0 : index
    %50 = vector.load %arg7[%c0_37, %c0_38, %c0_39] : memref<2x32x48xf32, #tpu.memory_space<vmem>>, vector<1x32x48xf32>
    %51 = vector.shape_cast %50 : vector<1x32x48xf32> to vector<32x48xf32>
    %cst_40 = arith.constant dense<0.000000e+00> : vector<32x128xf32>
    %52 = tpu.matmul %51, %49, %cst_40 {dimension_numbers = #tpu.dot_dimension_numbers<[1], [0], [0], [1], [0, 0, 1, 1], [], []>} : vector<32x48xf32>, vector<48x128xf32>, vector<32x128xf32> -> vector<32x128xf32>
    %c0_41 = arith.constant 0 : index
    %c0_42 = arith.constant 0 : index
    %c0_43 = arith.constant 0 : index
    %53 = vector.load %arg10[%c0_41, %c0_42, %c0_43] : memref<2x1x128xf32, #tpu.memory_space<vmem>>, vector<1x1x128xf32>
    %54 = vector.shape_cast %53 : vector<1x1x128xf32> to vector<1x128xf32>
    %55 = vector.broadcast %54 : vector<1x128xf32> to vector<32x128xf32>
    %56 = arith.mulf %52, %55 : vector<32x128xf32>
    %57 = arith.addf %38, %56 : vector<32x128xf32>
    %c1_44 = arith.constant 1 : index
    %c0_45 = arith.constant 0 : index
    %c0_46 = arith.constant 0 : index
    %58 = vector.load %arg7[%c1_44, %c0_45, %c0_46] : memref<2x32x48xf32, #tpu.memory_space<vmem>>, vector<1x32x48xf32>
    %59 = vector.shape_cast %58 : vector<1x32x48xf32> to vector<32x48xf32>
    %cst_47 = arith.constant dense<0.000000e+00> : vector<32x128xf32>
    %60 = tpu.matmul %59, %49, %cst_47 {dimension_numbers = #tpu.dot_dimension_numbers<[1], [0], [0], [1], [0, 0, 1, 1], [], []>} : vector<32x48xf32>, vector<48x128xf32>, vector<32x128xf32> -> vector<32x128xf32>
    %c1_48 = arith.constant 1 : index
    %c0_49 = arith.constant 0 : index
    %c0_50 = arith.constant 0 : index
    %61 = vector.load %arg10[%c1_48, %c0_49, %c0_50] : memref<2x1x128xf32, #tpu.memory_space<vmem>>, vector<1x1x128xf32>
    %62 = vector.shape_cast %61 : vector<1x1x128xf32> to vector<1x128xf32>
    %63 = vector.broadcast %62 : vector<1x128xf32> to vector<32x128xf32>
    %64 = arith.mulf %60, %63 : vector<32x128xf32>
    %65 = arith.addf %57, %64 : vector<32x128xf32>
    %cst_51 = arith.constant 0.000000e+00 : f32
    %66 = vector.broadcast %cst_51 : f32 to vector<32x128xf32>
    %67 = arith.maximumf %65, %66 : vector<32x128xf32>
    %c127_i32_52 = arith.constant 127 : i32
    %68 = tpu.dynamic_rotate %67 by %c127_i32_52 dim 1 : vector<32x128xf32>, i32 -> vector<32x128xf32>
    %69 = arith.maximumf %67, %68 : vector<32x128xf32>
    %c0_53 = arith.constant 0 : index
    %c0_54 = arith.constant 0 : index
    %c0_55 = arith.constant 0 : index
    %70 = vector.load %arg10[%c0_53, %c0_54, %c0_55] : memref<2x1x128xf32, #tpu.memory_space<vmem>>, vector<1x1x128xf32>
    %71 = vector.shape_cast %70 : vector<1x1x128xf32> to vector<1x128xf32>
    %72 = vector.broadcast %71 : vector<1x128xf32> to vector<32x128xf32>
    %73 = arith.mulf %69, %72 : vector<32x128xf32>
    %c1_56 = arith.constant 1 : index
    %c0_57 = arith.constant 0 : index
    %c0_58 = arith.constant 0 : index
    %74 = vector.load %arg10[%c1_56, %c0_57, %c0_58] : memref<2x1x128xf32, #tpu.memory_space<vmem>>, vector<1x1x128xf32>
    %75 = vector.shape_cast %74 : vector<1x1x128xf32> to vector<1x128xf32>
    %76 = vector.broadcast %75 : vector<1x128xf32> to vector<32x128xf32>
    %77 = arith.mulf %69, %76 : vector<32x128xf32>
    %78 = tpu.concatenate %73, %77 in 0 : vector<32x128xf32>, vector<32x128xf32> -> vector<64x128xf32>
    %c0_59 = arith.constant 0 : index
    %c0_60 = arith.constant 0 : index
    %79 = vector.load %arg13[%c0_59, %c0_60] : memref<128x4xf32, #tpu.memory_space<vmem>>, vector<128x4xf32>
    %c0_61 = arith.constant 0 : index
    %c0_62 = arith.constant 0 : index
    %c0_63 = arith.constant 0 : index
    %80 = vector.load %arg11[%c0_61, %c0_62, %c0_63] : memref<16x128x4xf32, #tpu.memory_space<vmem>>, vector<1x128x4xf32>
    %81 = vector.shape_cast %80 : vector<1x128x4xf32> to vector<128x4xf32>
    %cst_64 = arith.constant dense<0.000000e+00> : vector<64x4xf32>
    %82 = tpu.matmul %78, %81, %cst_64 {dimension_numbers = #tpu.dot_dimension_numbers<[1], [0], [0], [1], [0, 0, 1, 1], [], []>} : vector<64x128xf32>, vector<128x4xf32>, vector<64x4xf32> -> vector<64x4xf32>
    %c0_65 = arith.constant 0 : index
    %c0_66 = arith.constant 0 : index
    %c0_67 = arith.constant 0 : index
    %83 = vector.load %arg12[%c0_65, %c0_66, %c0_67] : memref<16x128x64xf32, #tpu.memory_space<vmem>>, vector<1x128x64xf32>
    %84 = vector.shape_cast %83 : vector<1x128x64xf32> to vector<128x64xf32>
    %cst_68 = arith.constant dense<0.000000e+00> : vector<128x4xf32>
    %85 = tpu.matmul %84, %82, %cst_68 {dimension_numbers = #tpu.dot_dimension_numbers<[1], [0], [0], [1], [0, 0, 1, 1], [], []>} : vector<128x64xf32>, vector<64x4xf32>, vector<128x4xf32> -> vector<128x4xf32>
    %86 = arith.addf %79, %85 : vector<128x4xf32>
    %c1_69 = arith.constant 1 : index
    %c0_70 = arith.constant 0 : index
    %c0_71 = arith.constant 0 : index
    %87 = vector.load %arg11[%c1_69, %c0_70, %c0_71] : memref<16x128x4xf32, #tpu.memory_space<vmem>>, vector<1x128x4xf32>
    %88 = vector.shape_cast %87 : vector<1x128x4xf32> to vector<128x4xf32>
    %cst_72 = arith.constant dense<0.000000e+00> : vector<64x4xf32>
    %89 = tpu.matmul %78, %88, %cst_72 {dimension_numbers = #tpu.dot_dimension_numbers<[1], [0], [0], [1], [0, 0, 1, 1], [], []>} : vector<64x128xf32>, vector<128x4xf32>, vector<64x4xf32> -> vector<64x4xf32>
    %c1_73 = arith.constant 1 : index
    %c0_74 = arith.constant 0 : index
    %c0_75 = arith.constant 0 : index
    %90 = vector.load %arg12[%c1_73, %c0_74, %c0_75] : memref<16x128x64xf32, #tpu.memory_space<vmem>>, vector<1x128x64xf32>
    %91 = vector.shape_cast %90 : vector<1x128x64xf32> to vector<128x64xf32>
    %cst_76 = arith.constant dense<0.000000e+00> : vector<128x4xf32>
    %92 = tpu.matmul %91, %89, %cst_76 {dimension_numbers = #tpu.dot_dimension_numbers<[1], [0], [0], [1], [0, 0, 1, 1], [], []>} : vector<128x64xf32>, vector<64x4xf32>, vector<128x4xf32> -> vector<128x4xf32>
    %93 = arith.addf %86, %92 : vector<128x4xf32>
    %c2_77 = arith.constant 2 : index
    %c0_78 = arith.constant 0 : index
    %c0_79 = arith.constant 0 : index
    %94 = vector.load %arg11[%c2_77, %c0_78, %c0_79] : memref<16x128x4xf32, #tpu.memory_space<vmem>>, vector<1x128x4xf32>
    %95 = vector.shape_cast %94 : vector<1x128x4xf32> to vector<128x4xf32>
    %cst_80 = arith.constant dense<0.000000e+00> : vector<64x4xf32>
    %96 = tpu.matmul %78, %95, %cst_80 {dimension_numbers = #tpu.dot_dimension_numbers<[1], [0], [0], [1], [0, 0, 1, 1], [], []>} : vector<64x128xf32>, vector<128x4xf32>, vector<64x4xf32> -> vector<64x4xf32>
    %c2_81 = arith.constant 2 : index
    %c0_82 = arith.constant 0 : index
    %c0_83 = arith.constant 0 : index
    %97 = vector.load %arg12[%c2_81, %c0_82, %c0_83] : memref<16x128x64xf32, #tpu.memory_space<vmem>>, vector<1x128x64xf32>
    %98 = vector.shape_cast %97 : vector<1x128x64xf32> to vector<128x64xf32>
    %cst_84 = arith.constant dense<0.000000e+00> : vector<128x4xf32>
    %99 = tpu.matmul %98, %96, %cst_84 {dimension_numbers = #tpu.dot_dimension_numbers<[1], [0], [0], [1], [0, 0, 1, 1], [], []>} : vector<128x64xf32>, vector<64x4xf32>, vector<128x4xf32> -> vector<128x4xf32>
    %100 = arith.addf %93, %99 : vector<128x4xf32>
    %c3 = arith.constant 3 : index
    %c0_85 = arith.constant 0 : index
    %c0_86 = arith.constant 0 : index
    %101 = vector.load %arg11[%c3, %c0_85, %c0_86] : memref<16x128x4xf32, #tpu.memory_space<vmem>>, vector<1x128x4xf32>
    %102 = vector.shape_cast %101 : vector<1x128x4xf32> to vector<128x4xf32>
    %cst_87 = arith.constant dense<0.000000e+00> : vector<64x4xf32>
    %103 = tpu.matmul %78, %102, %cst_87 {dimension_numbers = #tpu.dot_dimension_numbers<[1], [0], [0], [1], [0, 0, 1, 1], [], []>} : vector<64x128xf32>, vector<128x4xf32>, vector<64x4xf32> -> vector<64x4xf32>
    %c3_88 = arith.constant 3 : index
    %c0_89 = arith.constant 0 : index
    %c0_90 = arith.constant 0 : index
    %104 = vector.load %arg12[%c3_88, %c0_89, %c0_90] : memref<16x128x64xf32, #tpu.memory_space<vmem>>, vector<1x128x64xf32>
    %105 = vector.shape_cast %104 : vector<1x128x64xf32> to vector<128x64xf32>
    %cst_91 = arith.constant dense<0.000000e+00> : vector<128x4xf32>
    %106 = tpu.matmul %105, %103, %cst_91 {dimension_numbers = #tpu.dot_dimension_numbers<[1], [0], [0], [1], [0, 0, 1, 1], [], []>} : vector<128x64xf32>, vector<64x4xf32>, vector<128x4xf32> -> vector<128x4xf32>
    %107 = arith.addf %100, %106 : vector<128x4xf32>
    %c4 = arith.constant 4 : index
    %c0_92 = arith.constant 0 : index
    %c0_93 = arith.constant 0 : index
    %108 = vector.load %arg11[%c4, %c0_92, %c0_93] : memref<16x128x4xf32, #tpu.memory_space<vmem>>, vector<1x128x4xf32>
    %109 = vector.shape_cast %108 : vector<1x128x4xf32> to vector<128x4xf32>
    %cst_94 = arith.constant dense<0.000000e+00> : vector<64x4xf32>
    %110 = tpu.matmul %78, %109, %cst_94 {dimension_numbers = #tpu.dot_dimension_numbers<[1], [0], [0], [1], [0, 0, 1, 1], [], []>} : vector<64x128xf32>, vector<128x4xf32>, vector<64x4xf32> -> vector<64x4xf32>
    %c4_95 = arith.constant 4 : index
    %c0_96 = arith.constant 0 : index
    %c0_97 = arith.constant 0 : index
    %111 = vector.load %arg12[%c4_95, %c0_96, %c0_97] : memref<16x128x64xf32, #tpu.memory_space<vmem>>, vector<1x128x64xf32>
    %112 = vector.shape_cast %111 : vector<1x128x64xf32> to vector<128x64xf32>
    %cst_98 = arith.constant dense<0.000000e+00> : vector<128x4xf32>
    %113 = tpu.matmul %112, %110, %cst_98 {dimension_numbers = #tpu.dot_dimension_numbers<[1], [0], [0], [1], [0, 0, 1, 1], [], []>} : vector<128x64xf32>, vector<64x4xf32>, vector<128x4xf32> -> vector<128x4xf32>
    %114 = arith.addf %107, %113 : vector<128x4xf32>
    %c5 = arith.constant 5 : index
    %c0_99 = arith.constant 0 : index
    %c0_100 = arith.constant 0 : index
    %115 = vector.load %arg11[%c5, %c0_99, %c0_100] : memref<16x128x4xf32, #tpu.memory_space<vmem>>, vector<1x128x4xf32>
    %116 = vector.shape_cast %115 : vector<1x128x4xf32> to vector<128x4xf32>
    %cst_101 = arith.constant dense<0.000000e+00> : vector<64x4xf32>
    %117 = tpu.matmul %78, %116, %cst_101 {dimension_numbers = #tpu.dot_dimension_numbers<[1], [0], [0], [1], [0, 0, 1, 1], [], []>} : vector<64x128xf32>, vector<128x4xf32>, vector<64x4xf32> -> vector<64x4xf32>
    %c5_102 = arith.constant 5 : index
    %c0_103 = arith.constant 0 : index
    %c0_104 = arith.constant 0 : index
    %118 = vector.load %arg12[%c5_102, %c0_103, %c0_104] : memref<16x128x64xf32, #tpu.memory_space<vmem>>, vector<1x128x64xf32>
    %119 = vector.shape_cast %118 : vector<1x128x64xf32> to vector<128x64xf32>
    %cst_105 = arith.constant dense<0.000000e+00> : vector<128x4xf32>
    %120 = tpu.matmul %119, %117, %cst_105 {dimension_numbers = #tpu.dot_dimension_numbers<[1], [0], [0], [1], [0, 0, 1, 1], [], []>} : vector<128x64xf32>, vector<64x4xf32>, vector<128x4xf32> -> vector<128x4xf32>
    %121 = arith.addf %114, %120 : vector<128x4xf32>
    %c6 = arith.constant 6 : index
    %c0_106 = arith.constant 0 : index
    %c0_107 = arith.constant 0 : index
    %122 = vector.load %arg11[%c6, %c0_106, %c0_107] : memref<16x128x4xf32, #tpu.memory_space<vmem>>, vector<1x128x4xf32>
    %123 = vector.shape_cast %122 : vector<1x128x4xf32> to vector<128x4xf32>
    %cst_108 = arith.constant dense<0.000000e+00> : vector<64x4xf32>
    %124 = tpu.matmul %78, %123, %cst_108 {dimension_numbers = #tpu.dot_dimension_numbers<[1], [0], [0], [1], [0, 0, 1, 1], [], []>} : vector<64x128xf32>, vector<128x4xf32>, vector<64x4xf32> -> vector<64x4xf32>
    %c6_109 = arith.constant 6 : index
    %c0_110 = arith.constant 0 : index
    %c0_111 = arith.constant 0 : index
    %125 = vector.load %arg12[%c6_109, %c0_110, %c0_111] : memref<16x128x64xf32, #tpu.memory_space<vmem>>, vector<1x128x64xf32>
    %126 = vector.shape_cast %125 : vector<1x128x64xf32> to vector<128x64xf32>
    %cst_112 = arith.constant dense<0.000000e+00> : vector<128x4xf32>
    %127 = tpu.matmul %126, %124, %cst_112 {dimension_numbers = #tpu.dot_dimension_numbers<[1], [0], [0], [1], [0, 0, 1, 1], [], []>} : vector<128x64xf32>, vector<64x4xf32>, vector<128x4xf32> -> vector<128x4xf32>
    %128 = arith.addf %121, %127 : vector<128x4xf32>
    %c7 = arith.constant 7 : index
    %c0_113 = arith.constant 0 : index
    %c0_114 = arith.constant 0 : index
    %129 = vector.load %arg11[%c7, %c0_113, %c0_114] : memref<16x128x4xf32, #tpu.memory_space<vmem>>, vector<1x128x4xf32>
    %130 = vector.shape_cast %129 : vector<1x128x4xf32> to vector<128x4xf32>
    %cst_115 = arith.constant dense<0.000000e+00> : vector<64x4xf32>
    %131 = tpu.matmul %78, %130, %cst_115 {dimension_numbers = #tpu.dot_dimension_numbers<[1], [0], [0], [1], [0, 0, 1, 1], [], []>} : vector<64x128xf32>, vector<128x4xf32>, vector<64x4xf32> -> vector<64x4xf32>
    %c7_116 = arith.constant 7 : index
    %c0_117 = arith.constant 0 : index
    %c0_118 = arith.constant 0 : index
    %132 = vector.load %arg12[%c7_116, %c0_117, %c0_118] : memref<16x128x64xf32, #tpu.memory_space<vmem>>, vector<1x128x64xf32>
    %133 = vector.shape_cast %132 : vector<1x128x64xf32> to vector<128x64xf32>
    %cst_119 = arith.constant dense<0.000000e+00> : vector<128x4xf32>
    %134 = tpu.matmul %133, %131, %cst_119 {dimension_numbers = #tpu.dot_dimension_numbers<[1], [0], [0], [1], [0, 0, 1, 1], [], []>} : vector<128x64xf32>, vector<64x4xf32>, vector<128x4xf32> -> vector<128x4xf32>
    %135 = arith.addf %128, %134 : vector<128x4xf32>
    %c8 = arith.constant 8 : index
    %c0_120 = arith.constant 0 : index
    %c0_121 = arith.constant 0 : index
    %136 = vector.load %arg11[%c8, %c0_120, %c0_121] : memref<16x128x4xf32, #tpu.memory_space<vmem>>, vector<1x128x4xf32>
    %137 = vector.shape_cast %136 : vector<1x128x4xf32> to vector<128x4xf32>
    %cst_122 = arith.constant dense<0.000000e+00> : vector<64x4xf32>
    %138 = tpu.matmul %78, %137, %cst_122 {dimension_numbers = #tpu.dot_dimension_numbers<[1], [0], [0], [1], [0, 0, 1, 1], [], []>} : vector<64x128xf32>, vector<128x4xf32>, vector<64x4xf32> -> vector<64x4xf32>
    %c8_123 = arith.constant 8 : index
    %c0_124 = arith.constant 0 : index
    %c0_125 = arith.constant 0 : index
    %139 = vector.load %arg12[%c8_123, %c0_124, %c0_125] : memref<16x128x64xf32, #tpu.memory_space<vmem>>, vector<1x128x64xf32>
    %140 = vector.shape_cast %139 : vector<1x128x64xf32> to vector<128x64xf32>
    %cst_126 = arith.constant dense<0.000000e+00> : vector<128x4xf32>
    %141 = tpu.matmul %140, %138, %cst_126 {dimension_numbers = #tpu.dot_dimension_numbers<[1], [0], [0], [1], [0, 0, 1, 1], [], []>} : vector<128x64xf32>, vector<64x4xf32>, vector<128x4xf32> -> vector<128x4xf32>
    %142 = arith.addf %135, %141 : vector<128x4xf32>
    %c9 = arith.constant 9 : index
    %c0_127 = arith.constant 0 : index
    %c0_128 = arith.constant 0 : index
    %143 = vector.load %arg11[%c9, %c0_127, %c0_128] : memref<16x128x4xf32, #tpu.memory_space<vmem>>, vector<1x128x4xf32>
    %144 = vector.shape_cast %143 : vector<1x128x4xf32> to vector<128x4xf32>
    %cst_129 = arith.constant dense<0.000000e+00> : vector<64x4xf32>
    %145 = tpu.matmul %78, %144, %cst_129 {dimension_numbers = #tpu.dot_dimension_numbers<[1], [0], [0], [1], [0, 0, 1, 1], [], []>} : vector<64x128xf32>, vector<128x4xf32>, vector<64x4xf32> -> vector<64x4xf32>
    %c9_130 = arith.constant 9 : index
    %c0_131 = arith.constant 0 : index
    %c0_132 = arith.constant 0 : index
    %146 = vector.load %arg12[%c9_130, %c0_131, %c0_132] : memref<16x128x64xf32, #tpu.memory_space<vmem>>, vector<1x128x64xf32>
    %147 = vector.shape_cast %146 : vector<1x128x64xf32> to vector<128x64xf32>
    %cst_133 = arith.constant dense<0.000000e+00> : vector<128x4xf32>
    %148 = tpu.matmul %147, %145, %cst_133 {dimension_numbers = #tpu.dot_dimension_numbers<[1], [0], [0], [1], [0, 0, 1, 1], [], []>} : vector<128x64xf32>, vector<64x4xf32>, vector<128x4xf32> -> vector<128x4xf32>
    %149 = arith.addf %142, %148 : vector<128x4xf32>
    %c10 = arith.constant 10 : index
    %c0_134 = arith.constant 0 : index
    %c0_135 = arith.constant 0 : index
    %150 = vector.load %arg11[%c10, %c0_134, %c0_135] : memref<16x128x4xf32, #tpu.memory_space<vmem>>, vector<1x128x4xf32>
    %151 = vector.shape_cast %150 : vector<1x128x4xf32> to vector<128x4xf32>
    %cst_136 = arith.constant dense<0.000000e+00> : vector<64x4xf32>
    %152 = tpu.matmul %78, %151, %cst_136 {dimension_numbers = #tpu.dot_dimension_numbers<[1], [0], [0], [1], [0, 0, 1, 1], [], []>} : vector<64x128xf32>, vector<128x4xf32>, vector<64x4xf32> -> vector<64x4xf32>
    %c10_137 = arith.constant 10 : index
    %c0_138 = arith.constant 0 : index
    %c0_139 = arith.constant 0 : index
    %153 = vector.load %arg12[%c10_137, %c0_138, %c0_139] : memref<16x128x64xf32, #tpu.memory_space<vmem>>, vector<1x128x64xf32>
    %154 = vector.shape_cast %153 : vector<1x128x64xf32> to vector<128x64xf32>
    %cst_140 = arith.constant dense<0.000000e+00> : vector<128x4xf32>
    %155 = tpu.matmul %154, %152, %cst_140 {dimension_numbers = #tpu.dot_dimension_numbers<[1], [0], [0], [1], [0, 0, 1, 1], [], []>} : vector<128x64xf32>, vector<64x4xf32>, vector<128x4xf32> -> vector<128x4xf32>
    %156 = arith.addf %149, %155 : vector<128x4xf32>
    %c11 = arith.constant 11 : index
    %c0_141 = arith.constant 0 : index
    %c0_142 = arith.constant 0 : index
    %157 = vector.load %arg11[%c11, %c0_141, %c0_142] : memref<16x128x4xf32, #tpu.memory_space<vmem>>, vector<1x128x4xf32>
    %158 = vector.shape_cast %157 : vector<1x128x4xf32> to vector<128x4xf32>
    %cst_143 = arith.constant dense<0.000000e+00> : vector<64x4xf32>
    %159 = tpu.matmul %78, %158, %cst_143 {dimension_numbers = #tpu.dot_dimension_numbers<[1], [0], [0], [1], [0, 0, 1, 1], [], []>} : vector<64x128xf32>, vector<128x4xf32>, vector<64x4xf32> -> vector<64x4xf32>
    %c11_144 = arith.constant 11 : index
    %c0_145 = arith.constant 0 : index
    %c0_146 = arith.constant 0 : index
    %160 = vector.load %arg12[%c11_144, %c0_145, %c0_146] : memref<16x128x64xf32, #tpu.memory_space<vmem>>, vector<1x128x64xf32>
    %161 = vector.shape_cast %160 : vector<1x128x64xf32> to vector<128x64xf32>
    %cst_147 = arith.constant dense<0.000000e+00> : vector<128x4xf32>
    %162 = tpu.matmul %161, %159, %cst_147 {dimension_numbers = #tpu.dot_dimension_numbers<[1], [0], [0], [1], [0, 0, 1, 1], [], []>} : vector<128x64xf32>, vector<64x4xf32>, vector<128x4xf32> -> vector<128x4xf32>
    %163 = arith.addf %156, %162 : vector<128x4xf32>
    %c12 = arith.constant 12 : index
    %c0_148 = arith.constant 0 : index
    %c0_149 = arith.constant 0 : index
    %164 = vector.load %arg11[%c12, %c0_148, %c0_149] : memref<16x128x4xf32, #tpu.memory_space<vmem>>, vector<1x128x4xf32>
    %165 = vector.shape_cast %164 : vector<1x128x4xf32> to vector<128x4xf32>
    %cst_150 = arith.constant dense<0.000000e+00> : vector<64x4xf32>
    %166 = tpu.matmul %78, %165, %cst_150 {dimension_numbers = #tpu.dot_dimension_numbers<[1], [0], [0], [1], [0, 0, 1, 1], [], []>} : vector<64x128xf32>, vector<128x4xf32>, vector<64x4xf32> -> vector<64x4xf32>
    %c12_151 = arith.constant 12 : index
    %c0_152 = arith.constant 0 : index
    %c0_153 = arith.constant 0 : index
    %167 = vector.load %arg12[%c12_151, %c0_152, %c0_153] : memref<16x128x64xf32, #tpu.memory_space<vmem>>, vector<1x128x64xf32>
    %168 = vector.shape_cast %167 : vector<1x128x64xf32> to vector<128x64xf32>
    %cst_154 = arith.constant dense<0.000000e+00> : vector<128x4xf32>
    %169 = tpu.matmul %168, %166, %cst_154 {dimension_numbers = #tpu.dot_dimension_numbers<[1], [0], [0], [1], [0, 0, 1, 1], [], []>} : vector<128x64xf32>, vector<64x4xf32>, vector<128x4xf32> -> vector<128x4xf32>
    %170 = arith.addf %163, %169 : vector<128x4xf32>
    %c13 = arith.constant 13 : index
    %c0_155 = arith.constant 0 : index
    %c0_156 = arith.constant 0 : index
    %171 = vector.load %arg11[%c13, %c0_155, %c0_156] : memref<16x128x4xf32, #tpu.memory_space<vmem>>, vector<1x128x4xf32>
    %172 = vector.shape_cast %171 : vector<1x128x4xf32> to vector<128x4xf32>
    %cst_157 = arith.constant dense<0.000000e+00> : vector<64x4xf32>
    %173 = tpu.matmul %78, %172, %cst_157 {dimension_numbers = #tpu.dot_dimension_numbers<[1], [0], [0], [1], [0, 0, 1, 1], [], []>} : vector<64x128xf32>, vector<128x4xf32>, vector<64x4xf32> -> vector<64x4xf32>
    %c13_158 = arith.constant 13 : index
    %c0_159 = arith.constant 0 : index
    %c0_160 = arith.constant 0 : index
    %174 = vector.load %arg12[%c13_158, %c0_159, %c0_160] : memref<16x128x64xf32, #tpu.memory_space<vmem>>, vector<1x128x64xf32>
    %175 = vector.shape_cast %174 : vector<1x128x64xf32> to vector<128x64xf32>
    %cst_161 = arith.constant dense<0.000000e+00> : vector<128x4xf32>
    %176 = tpu.matmul %175, %173, %cst_161 {dimension_numbers = #tpu.dot_dimension_numbers<[1], [0], [0], [1], [0, 0, 1, 1], [], []>} : vector<128x64xf32>, vector<64x4xf32>, vector<128x4xf32> -> vector<128x4xf32>
    %177 = arith.addf %170, %176 : vector<128x4xf32>
    %c14 = arith.constant 14 : index
    %c0_162 = arith.constant 0 : index
    %c0_163 = arith.constant 0 : index
    %178 = vector.load %arg11[%c14, %c0_162, %c0_163] : memref<16x128x4xf32, #tpu.memory_space<vmem>>, vector<1x128x4xf32>
    %179 = vector.shape_cast %178 : vector<1x128x4xf32> to vector<128x4xf32>
    %cst_164 = arith.constant dense<0.000000e+00> : vector<64x4xf32>
    %180 = tpu.matmul %78, %179, %cst_164 {dimension_numbers = #tpu.dot_dimension_numbers<[1], [0], [0], [1], [0, 0, 1, 1], [], []>} : vector<64x128xf32>, vector<128x4xf32>, vector<64x4xf32> -> vector<64x4xf32>
    %c14_165 = arith.constant 14 : index
    %c0_166 = arith.constant 0 : index
    %c0_167 = arith.constant 0 : index
    %181 = vector.load %arg12[%c14_165, %c0_166, %c0_167] : memref<16x128x64xf32, #tpu.memory_space<vmem>>, vector<1x128x64xf32>
    %182 = vector.shape_cast %181 : vector<1x128x64xf32> to vector<128x64xf32>
    %cst_168 = arith.constant dense<0.000000e+00> : vector<128x4xf32>
    %183 = tpu.matmul %182, %180, %cst_168 {dimension_numbers = #tpu.dot_dimension_numbers<[1], [0], [0], [1], [0, 0, 1, 1], [], []>} : vector<128x64xf32>, vector<64x4xf32>, vector<128x4xf32> -> vector<128x4xf32>
    %184 = arith.addf %177, %183 : vector<128x4xf32>
    %c15 = arith.constant 15 : index
    %c0_169 = arith.constant 0 : index
    %c0_170 = arith.constant 0 : index
    %185 = vector.load %arg11[%c15, %c0_169, %c0_170] : memref<16x128x4xf32, #tpu.memory_space<vmem>>, vector<1x128x4xf32>
    %186 = vector.shape_cast %185 : vector<1x128x4xf32> to vector<128x4xf32>
    %cst_171 = arith.constant dense<0.000000e+00> : vector<64x4xf32>
    %187 = tpu.matmul %78, %186, %cst_171 {dimension_numbers = #tpu.dot_dimension_numbers<[1], [0], [0], [1], [0, 0, 1, 1], [], []>} : vector<64x128xf32>, vector<128x4xf32>, vector<64x4xf32> -> vector<64x4xf32>
    %c15_172 = arith.constant 15 : index
    %c0_173 = arith.constant 0 : index
    %c0_174 = arith.constant 0 : index
    %188 = vector.load %arg12[%c15_172, %c0_173, %c0_174] : memref<16x128x64xf32, #tpu.memory_space<vmem>>, vector<1x128x64xf32>
    %189 = vector.shape_cast %188 : vector<1x128x64xf32> to vector<128x64xf32>
    %cst_175 = arith.constant dense<0.000000e+00> : vector<128x4xf32>
    %190 = tpu.matmul %189, %187, %cst_175 {dimension_numbers = #tpu.dot_dimension_numbers<[1], [0], [0], [1], [0, 0, 1, 1], [], []>} : vector<128x64xf32>, vector<64x4xf32>, vector<128x4xf32> -> vector<128x4xf32>
    %191 = arith.addf %184, %190 : vector<128x4xf32>
    %cst_176 = arith.constant 0.000000e+00 : f32
    %192 = vector.broadcast %cst_176 : f32 to vector<128x4xf32>
    %193 = arith.maximumf %191, %192 : vector<128x4xf32>
    %c0_177 = arith.constant 0 : index
    %c0_178 = arith.constant 0 : index
    %194 = vector.load %arg15[%c0_177, %c0_178] : memref<32x4xf32, #tpu.memory_space<vmem>>, vector<32x4xf32>
    %c0_179 = arith.constant 0 : index
    %c0_180 = arith.constant 0 : index
    %c0_181 = arith.constant 0 : index
    %195 = vector.load %arg14[%c0_179, %c0_180, %c0_181] : memref<2x32x128xf32, #tpu.memory_space<vmem>>, vector<1x32x128xf32>
    %196 = vector.shape_cast %195 : vector<1x32x128xf32> to vector<32x128xf32>
    %cst_182 = arith.constant dense<0.000000e+00> : vector<32x4xf32>
    %197 = tpu.matmul %196, %193, %cst_182 {dimension_numbers = #tpu.dot_dimension_numbers<[1], [0], [0], [1], [0, 0, 1, 1], [], []>} : vector<32x128xf32>, vector<128x4xf32>, vector<32x4xf32> -> vector<32x4xf32>
    %c0_183 = arith.constant 0 : index
    %c0_184 = arith.constant 0 : index
    %c0_185 = arith.constant 0 : index
    %198 = vector.load %arg16[%c0_183, %c0_184, %c0_185] : memref<2x1x4xf32, #tpu.memory_space<vmem>>, vector<1x1x4xf32>
    %199 = vector.shape_cast %198 : vector<1x1x4xf32> to vector<1x4xf32>
    %200 = vector.broadcast %199 : vector<1x4xf32> to vector<32x4xf32>
    %201 = arith.mulf %197, %200 : vector<32x4xf32>
    %202 = arith.addf %194, %201 : vector<32x4xf32>
    %c1_186 = arith.constant 1 : index
    %c0_187 = arith.constant 0 : index
    %c0_188 = arith.constant 0 : index
    %203 = vector.load %arg14[%c1_186, %c0_187, %c0_188] : memref<2x32x128xf32, #tpu.memory_space<vmem>>, vector<1x32x128xf32>
    %204 = vector.shape_cast %203 : vector<1x32x128xf32> to vector<32x128xf32>
    %cst_189 = arith.constant dense<0.000000e+00> : vector<32x4xf32>
    %205 = tpu.matmul %204, %193, %cst_189 {dimension_numbers = #tpu.dot_dimension_numbers<[1], [0], [0], [1], [0, 0, 1, 1], [], []>} : vector<32x128xf32>, vector<128x4xf32>, vector<32x4xf32> -> vector<32x4xf32>
    %c1_190 = arith.constant 1 : index
    %c0_191 = arith.constant 0 : index
    %c0_192 = arith.constant 0 : index
    %206 = vector.load %arg16[%c1_190, %c0_191, %c0_192] : memref<2x1x4xf32, #tpu.memory_space<vmem>>, vector<1x1x4xf32>
    %207 = vector.shape_cast %206 : vector<1x1x4xf32> to vector<1x4xf32>
    %208 = vector.broadcast %207 : vector<1x4xf32> to vector<32x4xf32>
    %209 = arith.mulf %205, %208 : vector<32x4xf32>
    %210 = arith.addf %202, %209 : vector<32x4xf32>
    %cst_193 = arith.constant 0.000000e+00 : f32
    %211 = vector.broadcast %cst_193 : f32 to vector<32x4xf32>
    %212 = arith.maximumf %210, %211 : vector<32x4xf32>
    %c0_194 = arith.constant 0 : index
    %c0_195 = arith.constant 0 : index
    %c0_196 = arith.constant 0 : index
    %213 = vector.load %arg17[%c0_194, %c0_195, %c0_196] : memref<2x4x2xf32, #tpu.memory_space<vmem>>, vector<1x4x2xf32>
    %214 = vector.shape_cast %213 : vector<1x4x2xf32> to vector<4x2xf32>
    %cst_197 = arith.constant dense<0.000000e+00> : vector<32x2xf32>
    %215 = tpu.matmul %212, %214, %cst_197 {dimension_numbers = #tpu.dot_dimension_numbers<[1], [0], [0], [1], [0, 0, 1, 1], [], []>} : vector<32x4xf32>, vector<4x2xf32>, vector<32x2xf32> -> vector<32x2xf32>
    %c1_198 = arith.constant 1 : index
    %c0_199 = arith.constant 0 : index
    %c0_200 = arith.constant 0 : index
    %216 = vector.load %arg17[%c1_198, %c0_199, %c0_200] : memref<2x4x2xf32, #tpu.memory_space<vmem>>, vector<1x4x2xf32>
    %217 = vector.shape_cast %216 : vector<1x4x2xf32> to vector<4x2xf32>
    %cst_201 = arith.constant dense<0.000000e+00> : vector<32x2xf32>
    %218 = tpu.matmul %212, %217, %cst_201 {dimension_numbers = #tpu.dot_dimension_numbers<[1], [0], [0], [1], [0, 0, 1, 1], [], []>} : vector<32x4xf32>, vector<4x2xf32>, vector<32x2xf32> -> vector<32x2xf32>
    %219 = tpu.concatenate %215, %218 in 0 : vector<32x2xf32>, vector<32x2xf32> -> vector<64x2xf32>
    %c0_202 = arith.constant 0 : index
    %c0_203 = arith.constant 0 : index
    %220 = vector.load %arg18[%c0_202, %c0_203] : memref<128x64xf32, #tpu.memory_space<vmem>>, vector<128x64xf32>
    %cst_204 = arith.constant dense<0.000000e+00> : vector<128x2xf32>
    %221 = tpu.matmul %220, %219, %cst_204 {dimension_numbers = #tpu.dot_dimension_numbers<[1], [0], [0], [1], [0, 0, 1, 1], [], []>} : vector<128x64xf32>, vector<64x2xf32>, vector<128x2xf32> -> vector<128x2xf32>
    %c0_205 = arith.constant 0 : index
    %c0_206 = arith.constant 0 : index
    %222 = vector.load %arg19[%c0_205, %c0_206] : memref<128x1xf32, #tpu.memory_space<vmem>>, vector<128x1xf32>
    %223 = vector.broadcast %222 : vector<128x1xf32> to vector<128x2xf32>
    %224 = arith.addf %221, %223 : vector<128x2xf32>
    %cst_207 = arith.constant 0.000000e+00 : f32
    %225 = vector.broadcast %cst_207 : f32 to vector<128x2xf32>
    %226 = arith.maximumf %224, %225 : vector<128x2xf32>
    %c0_208 = arith.constant 0 : index
    %c0_209 = arith.constant 0 : index
    %227 = vector.load %arg20[%c0_208, %c0_209] : memref<12x128xf32, #tpu.memory_space<vmem>>, vector<12x128xf32>
    %cst_210 = arith.constant dense<0.000000e+00> : vector<12x2xf32>
    %228 = tpu.matmul %227, %226, %cst_210 {dimension_numbers = #tpu.dot_dimension_numbers<[1], [0], [0], [1], [0, 0, 1, 1], [], []>} : vector<12x128xf32>, vector<128x2xf32>, vector<12x2xf32> -> vector<12x2xf32>
    %c0_211 = arith.constant 0 : index
    %c0_212 = arith.constant 0 : index
    %229 = vector.load %arg21[%c0_211, %c0_212] : memref<12x1xf32, #tpu.memory_space<vmem>>, vector<12x1xf32>
    %230 = vector.broadcast %229 : vector<12x1xf32> to vector<12x2xf32>
    %231 = arith.addf %228, %230 : vector<12x2xf32>
    %cst_213 = arith.constant 0.000000e+00 : f32
    %232 = vector.broadcast %cst_213 : f32 to vector<12x2xf32>
    %233 = arith.maximumf %231, %232 : vector<12x2xf32>
    %c0_214 = arith.constant 0 : index
    %c0_215 = arith.constant 0 : index
    %234 = vector.load %arg27[%c0_214, %c0_215] : memref<12x2xf32, #tpu.memory_space<vmem>>, vector<12x2xf32>
    tpu.vector_store %arg27[%c0_214, %c0_215], %233 {strides = array<i32>} : memref<12x2xf32, #tpu.memory_space<vmem>>, vector<12x2xf32>,
    %c0_216 = arith.constant 0 : index
    %c0_217 = arith.constant 0 : index
    %235 = vector.load %arg22[%c0_216, %c0_217] : memref<128x64xf32, #tpu.memory_space<vmem>>, vector<128x64xf32>
    %cst_218 = arith.constant dense<0.000000e+00> : vector<128x2xf32>
    %236 = tpu.matmul %235, %219, %cst_218 {dimension_numbers = #tpu.dot_dimension_numbers<[1], [0], [0], [1], [0, 0, 1, 1], [], []>} : vector<128x64xf32>, vector<64x2xf32>, vector<128x2xf32> -> vector<128x2xf32>
    %c0_219 = arith.constant 0 : index
    %c0_220 = arith.constant 0 : index
    %237 = vector.load %arg23[%c0_219, %c0_220] : memref<128x12xf32, #tpu.memory_space<vmem>>, vector<128x12xf32>
    %cst_221 = arith.constant dense<0.000000e+00> : vector<128x2xf32>
    %238 = tpu.matmul %237, %233, %cst_221 {dimension_numbers = #tpu.dot_dimension_numbers<[1], [0], [0], [1], [0, 0, 1, 1], [], []>} : vector<128x12xf32>, vector<12x2xf32>, vector<128x2xf32> -> vector<128x2xf32>
    %239 = arith.addf %236, %238 : vector<128x2xf32>
    %c0_222 = arith.constant 0 : index
    %c0_223 = arith.constant 0 : index
    %240 = vector.load %arg24[%c0_222, %c0_223] : memref<128x1xf32, #tpu.memory_space<vmem>>, vector<128x1xf32>
    %241 = vector.broadcast %240 : vector<128x1xf32> to vector<128x2xf32>
    %242 = arith.addf %239, %241 : vector<128x2xf32>
    %cst_224 = arith.constant 0.000000e+00 : f32
    %243 = vector.broadcast %cst_224 : f32 to vector<128x2xf32>
    %244 = arith.maximumf %242, %243 : vector<128x2xf32>
    %c0_225 = arith.constant 0 : index
    %c0_226 = arith.constant 0 : index
    %245 = vector.load %arg25[%c0_225, %c0_226] : memref<6x128xf32, #tpu.memory_space<vmem>>, vector<6x128xf32>
    %cst_227 = arith.constant dense<0.000000e+00> : vector<6x2xf32>
    %246 = tpu.matmul %245, %244, %cst_227 {dimension_numbers = #tpu.dot_dimension_numbers<[1], [0], [0], [1], [0, 0, 1, 1], [], []>} : vector<6x128xf32>, vector<128x2xf32>, vector<6x2xf32> -> vector<6x2xf32>
    %c0_228 = arith.constant 0 : index
    %c0_229 = arith.constant 0 : index
    %247 = vector.load %arg26[%c0_228, %c0_229] : memref<6x1xf32, #tpu.memory_space<vmem>>, vector<6x1xf32>
    %248 = vector.broadcast %247 : vector<6x1xf32> to vector<6x2xf32>
    %249 = arith.addf %246, %248 : vector<6x2xf32>
    %cst_230 = arith.constant 0.000000e+00 : f32
    %250 = vector.broadcast %cst_230 : f32 to vector<6x2xf32>
    %251 = arith.maximumf %249, %250 : vector<6x2xf32>
    %c0_231 = arith.constant 0 : index
    %c0_232 = arith.constant 0 : index
    %252 = vector.load %arg28[%c0_231, %c0_232] : memref<6x2xf32, #tpu.memory_space<vmem>>, vector<6x2xf32>
    tpu.vector_store %arg28[%c0_231, %c0_232], %251 {strides = array<i32>} : memref<6x2xf32, #tpu.memory_space<vmem>>, vector<6x2xf32>,
    return
  }
}

</mosaic_0001>

<llo_original>
// kernel: model_forward.1
$region0: #{model_forward.1}
  #allocation0 [shape = 'u32[]', space=smem, size = 0x4, offset = 0x4, fixed_abs, tag = 'smem constant byte address 0x4 - core index']
  #allocation1 [shape = 'u32[72,128]{1,0:T(1,128)}', space=vmem, size = 0x9000, scoped, tag = 'internal scratch']
  %s0 = inlined_call_operand.vmem [shape: f32[24,256], index: 0, kind: input, shape index: {}]
  %s1 = inlined_call_operand.vmem [shape: f32[8,24], index: 1, kind: input, shape index: {}]
  %s2 = inlined_call_operand.vmem [shape: f32[2,16,24], index: 2, kind: input, shape index: {}]
  %s3 = inlined_call_operand.vmem [shape: f32[16,256], index: 3, kind: input, shape index: {}]
  %s4 = inlined_call_operand.vmem [shape: f32[3,1,256], index: 4, kind: input, shape index: {}]
  %s5 = inlined_call_operand.vmem [shape: f32[2,1,256], index: 5, kind: input, shape index: {}]
  %s6 = inlined_call_operand.vmem [shape: f32[256,128], index: 6, kind: input, shape index: {}]
  %s7 = inlined_call_operand.vmem [shape: f32[2,32,48], index: 7, kind: input, shape index: {}]
  %s8 = inlined_call_operand.vmem [shape: f32[32,128], index: 8, kind: input, shape index: {}]
  %s9 = inlined_call_operand.vmem [shape: f32[3,1,128], index: 9, kind: input, shape index: {}]
  %s10 = inlined_call_operand.vmem [shape: f32[2,1,128], index: 10, kind: input, shape index: {}]
  %s11 = inlined_call_operand.vmem [shape: f32[16,128,4], index: 11, kind: input, shape index: {}]
  %s12 = inlined_call_operand.vmem [shape: f32[16,128,64], index: 12, kind: input, shape index: {}]
  %s13 = inlined_call_operand.vmem [shape: f32[128,4], index: 13, kind: input, shape index: {}]
  %s14 = inlined_call_operand.vmem [shape: f32[2,32,128], index: 14, kind: input, shape index: {}]
  %s15 = inlined_call_operand.vmem [shape: f32[32,4], index: 15, kind: input, shape index: {}]
  %s16 = inlined_call_operand.vmem [shape: f32[2,1,4], index: 16, kind: input, shape index: {}]
  %s17 = inlined_call_operand.vmem [shape: f32[2,4,2], index: 17, kind: input, shape index: {}]
  %s18 = inlined_call_operand.vmem [shape: f32[128,64], index: 18, kind: input, shape index: {}]
  %s19 = inlined_call_operand.vmem [shape: f32[128,1], index: 19, kind: input, shape index: {}]
  %s20 = inlined_call_operand.vmem [shape: f32[12,128], index: 20, kind: input, shape index: {}]
  %s21 = inlined_call_operand.vmem [shape: f32[12,1], index: 21, kind: input, shape index: {}]
  %s22 = inlined_call_operand.vmem [shape: f32[128,64], index: 22, kind: input, shape index: {}]
  %s23 = inlined_call_operand.vmem [shape: f32[128,12], index: 23, kind: input, shape index: {}]
  %s24 = inlined_call_operand.vmem [shape: f32[128,1], index: 24, kind: input, shape index: {}]
  %s25 = inlined_call_operand.vmem [shape: f32[6,128], index: 25, kind: input, shape index: {}]
  %s26 = inlined_call_operand.vmem [shape: f32[6,1], index: 26, kind: input, shape index: {}]
  %s27 = inlined_call_operand.vmem [shape: f32[12,2], index: 27, kind: output, shape index: {0}]
  %s28 = inlined_call_operand.vmem [shape: f32[6,2], index: 28, kind: output, shape index: {1}]
  %29 = xla_tuple %s27, %s28
  %s30 = sld [smem:[#allocation0]]
  $region126: #{model_forward.1} parent=0
    _
  %s32 = ssub.s32 1, %s30
  %s33 = scalar_select 0, %s32, %s30
  // Predicated region
  $region2: #{model_forward.1} parent=0 // pred_check
    _
  $region3: #{model_forward.1} parent=0 // pred_check_branch
    %35 = sbr.rel (0) target = $region5
  $region4: #{model_forward.1} parent=0 // pred_region
    _
  $region5: #{model_forward.1} parent=0 // pred_fallthru
    _
  // Predicated region
  $region6: #{model_forward.1} parent=0 // pred_check
    _
  $region7: #{model_forward.1} parent=0 // pred_check_branch
    %37 = sbr.rel (0) target = $region9
  $region8: #{model_forward.1} parent=0 // pred_region
    _
  $region9: #{model_forward.1} parent=0 // pred_fallthru
    _
  // Predicated region
  $region10: #{model_forward.1} parent=0 // pred_check
    _
  $region11: #{model_forward.1} parent=0 // pred_check_branch
    %39 = sbr.rel (0) target = $region13
  $region12: #{model_forward.1} parent=0 // pred_region
    _
  $region13: #{model_forward.1} parent=0 // pred_fallthru
    _
  // Predicated region
  $region14: #{model_forward.1} parent=0 // pred_check
    _
  $region15: #{model_forward.1} parent=0 // pred_check_branch
    %41 = sbr.rel (0) target = $region17
  $region16: #{model_forward.1} parent=0 // pred_region
    _
  $region17: #{model_forward.1} parent=0 // pred_fallthru
    _
  // Predicated region
  $region18: #{model_forward.1} parent=0 // pred_check
    _
  $region19: #{model_forward.1} parent=0 // pred_check_branch
    %43 = sbr.rel (0) target = $region21
  $region20: #{model_forward.1} parent=0 // pred_region
    _
  $region21: #{model_forward.1} parent=0 // pred_fallthru
    _
  // Predicated region
  $region22: #{model_forward.1} parent=0 // pred_check
    _
  $region23: #{model_forward.1} parent=0 // pred_check_branch
    %45 = sbr.rel (0) target = $region25
  $region24: #{model_forward.1} parent=0 // pred_region
    _
  $region25: #{model_forward.1} parent=0 // pred_fallthru
    _
  // Predicated region
  $region26: #{model_forward.1} parent=0 // pred_check
    _
  $region27: #{model_forward.1} parent=0 // pred_check_branch
    %47 = sbr.rel (0) target = $region29
  $region28: #{model_forward.1} parent=0 // pred_region
    _
  $region29: #{model_forward.1} parent=0 // pred_fallthru
    _
  // Predicated region
  $region30: #{model_forward.1} parent=0 // pred_check
    _
  $region31: #{model_forward.1} parent=0 // pred_check_branch
    %49 = sbr.rel (0) target = $region33
  $region32: #{model_forward.1} parent=0 // pred_region
    _
  $region33: #{model_forward.1} parent=0 // pred_fallthru
    _
  // Predicated region
  $region34: #{model_forward.1} parent=0 // pred_check
    _
  $region35: #{model_forward.1} parent=0 // pred_check_branch
    %51 = sbr.rel (0) target = $region37
  $region36: #{model_forward.1} parent=0 // pred_region
    _
  $region37: #{model_forward.1} parent=0 // pred_fallthru
    _
  // Predicated region
  $region38: #{model_forward.1} parent=0 // pred_check
    _
  $region39: #{model_forward.1} parent=0 // pred_check_branch
    %53 = sbr.rel (0) target = $region41
  $region40: #{model_forward.1} parent=0 // pred_region
    _
  $region41: #{model_forward.1} parent=0 // pred_fallthru
    _
  // Predicated region
  $region42: #{model_forward.1} parent=0 // pred_check
    _
  $region43: #{model_forward.1} parent=0 // pred_check_branch
    %55 = sbr.rel (0) target = $region45
  $region44: #{model_forward.1} parent=0 // pred_region
    _
  $region45: #{model_forward.1} parent=0 // pred_fallthru
    _
  // Predicated region
  $region46: #{model_forward.1} parent=0 // pred_check
    _
  $region47: #{model_forward.1} parent=0 // pred_check_branch
    %57 = sbr.rel (0) target = $region49
  $region48: #{model_forward.1} parent=0 // pred_region
    _
  $region49: #{model_forward.1} parent=0 // pred_fallthru
    _
  // Predicated region
  $region50: #{model_forward.1} parent=0 // pred_check
    _
  $region51: #{model_forward.1} parent=0 // pred_check_branch
    %59 = sbr.rel (0) target = $region53
  $region52: #{model_forward.1} parent=0 // pred_region
    _
  $region53: #{model_forward.1} parent=0 // pred_fallthru
    _
  // Predicated region
  $region54: #{model_forward.1} parent=0 // pred_check
    _
  $region55: #{model_forward.1} parent=0 // pred_check_branch
    %61 = sbr.rel (0) target = $region57
  $region56: #{model_forward.1} parent=0 // pred_region
    _
  $region57: #{model_forward.1} parent=0 // pred_fallthru
    _
  // Predicated region
  $region58: #{model_forward.1} parent=0 // pred_check
    _
  $region59: #{model_forward.1} parent=0 // pred_check_branch
    %63 = sbr.rel (0) target = $region61
  $region60: #{model_forward.1} parent=0 // pred_region
    _
  $region61: #{model_forward.1} parent=0 // pred_fallthru
    _
  // Predicated region
  $region62: #{model_forward.1} parent=0 // pred_check
    _
  $region63: #{model_forward.1} parent=0 // pred_check_branch
    %65 = sbr.rel (0) target = $region65
  $region64: #{model_forward.1} parent=0 // pred_region
    _
  $region65: #{model_forward.1} parent=0 // pred_fallthru
    _
  // Predicated region
  $region66: #{model_forward.1} parent=0 // pred_check
    _
  $region67: #{model_forward.1} parent=0 // pred_check_branch
    %67 = sbr.rel (0) target = $region69
  $region68: #{model_forward.1} parent=0 // pred_region
    _
  $region69: #{model_forward.1} parent=0 // pred_fallthru
    _
  // Predicated region
  $region70: #{model_forward.1} parent=0 // pred_check
    _
  $region71: #{model_forward.1} parent=0 // pred_check_branch
    %69 = sbr.rel (0) target = $region73
  $region72: #{model_forward.1} parent=0 // pred_region
    _
  $region73: #{model_forward.1} parent=0 // pred_fallthru
    _
  // Predicated region
  $region74: #{model_forward.1} parent=0 // pred_check
    _
  $region75: #{model_forward.1} parent=0 // pred_check_branch
    %71 = sbr.rel (0) target = $region77
  $region76: #{model_forward.1} parent=0 // pred_region
    _
  $region77: #{model_forward.1} parent=0 // pred_fallthru
    _
  // Predicated region
  $region78: #{model_forward.1} parent=0 // pred_check
    _
  $region79: #{model_forward.1} parent=0 // pred_check_branch
    %73 = sbr.rel (0) target = $region81
  $region80: #{model_forward.1} parent=0 // pred_region
    _
  $region81: #{model_forward.1} parent=0 // pred_fallthru
    _
  // Predicated region
  $region82: #{model_forward.1} parent=0 // pred_check
    _
  $region83: #{model_forward.1} parent=0 // pred_check_branch
    %75 = sbr.rel (0) target = $region85
  $region84: #{model_forward.1} parent=0 // pred_region
    _
  $region85: #{model_forward.1} parent=0 // pred_fallthru
    _
  // Predicated region
  $region86: #{model_forward.1} parent=0 // pred_check
    _
  $region87: #{model_forward.1} parent=0 // pred_check_branch
    %77 = sbr.rel (0) target = $region89
  $region88: #{model_forward.1} parent=0 // pred_region
    _
  $region89: #{model_forward.1} parent=0 // pred_fallthru
    _
  // Predicated region
  $region90: #{model_forward.1} parent=0 // pred_check
    _
  $region91: #{model_forward.1} parent=0 // pred_check_branch
    %79 = sbr.rel (0) target = $region93
  $region92: #{model_forward.1} parent=0 // pred_region
    _
  $region93: #{model_forward.1} parent=0 // pred_fallthru
    _
  // Predicated region
  $region94: #{model_forward.1} parent=0 // pred_check
    _
  $region95: #{model_forward.1} parent=0 // pred_check_branch
    %81 = sbr.rel (0) target = $region97
  $region96: #{model_forward.1} parent=0 // pred_region
    _
  $region97: #{model_forward.1} parent=0 // pred_fallthru
    _
  // Predicated region
  $region98: #{model_forward.1} parent=0 // pred_check
    _
  $region99: #{model_forward.1} parent=0 // pred_check_branch
    %83 = sbr.rel (0) target = $region101
  $region100: #{model_forward.1} parent=0 // pred_region
    _
  $region101: #{model_forward.1} parent=0 // pred_fallthru
    _
  // Predicated region
  $region102: #{model_forward.1} parent=0 // pred_check
    _
  $region103: #{model_forward.1} parent=0 // pred_check_branch
    %85 = sbr.rel (0) target = $region105
  $region104: #{model_forward.1} parent=0 // pred_region
    _
  $region105: #{model_forward.1} parent=0 // pred_fallthru
    _
  // Predicated region
  $region106: #{model_forward.1} parent=0 // pred_check
    _
  $region107: #{model_forward.1} parent=0 // pred_check_branch
    %87 = sbr.rel (0) target = $region109
  $region108: #{model_forward.1} parent=0 // pred_region
    _
  $region109: #{model_forward.1} parent=0 // pred_fallthru
    _
  %v88 = vld [vmem:[%s1] sm:$0xff]
  %v89 = vld [vmem:[%s0] sm:$0xff]
  %v90 = vld [vmem:[%s0 + $0x8] sm:$0xff]
  %v91 = vld [vmem:[%s0 + $0x10] sm:$0xff]
  %v92 = vld [vmem:[%s0 + $0x18] sm:$0xff]
  %v93 = vld [vmem:[%s0 + $0x20] sm:$0xff]
  %v94 = vld [vmem:[%s0 + $0x28] sm:$0xff]
  %vm95 = vcmask 195584
  %v97 = vsel %vm95, %v88, 0
  %99 = vmatpush.msra.mxu0 0.0
  %100 = vmatpush.msra.mxu0 0.0
  %101 = vmatpush.msra.mxu0 0.0
  %102 = vmatpush.msra.mxu0 0.0
  %103 = vmatpush.msra.mxu0 0.0
  %104 = vmatpush.msra.mxu0 0.0
  %105 = vmatpush.msra.mxu0 0.0
  %106 = vmatpush.msra.mxu0 0.0
  %107 = vmatpush.msra.mxu0 0.0
  %108 = vmatpush.msra.mxu0 0.0
  %109 = vmatpush.msra.mxu0 0.0
  %110 = vmatpush.msra.mxu0 0.0
  %111 = vmatpush.msra.mxu0 0.0
  %112 = vmatpush.msra.mxu0 %v93
  %113 = vmatpush.msra.mxu0 %v91
  %114 = vmatpush.msra.mxu0 %v89
  %115 = vmatmul.f32.gmra.mxu0 %v97
  %v116 = vpop.f32.mrf.mxu0
  %v117 = vadd.f32 0.0, %v116
  %118 = vdwg.mxu0
  %119 = vmatpush.msra.mxu0 0.0
  %120 = vmatpush.msra.mxu0 0.0
  %121 = vmatpush.msra.mxu0 0.0
  %122 = vmatpush.msra.mxu0 0.0
  %123 = vmatpush.msra.mxu0 0.0
  %124 = vmatpush.msra.mxu0 0.0
  %125 = vmatpush.msra.mxu0 0.0
  %126 = vmatpush.msra.mxu0 0.0
  %127 = vmatpush.msra.mxu0 0.0
  %128 = vmatpush.msra.mxu0 0.0
  %129 = vmatpush.msra.mxu0 0.0
  %130 = vmatpush.msra.mxu0 0.0
  %131 = vmatpush.msra.mxu0 0.0
  %132 = vmatpush.msra.mxu0 %v94
  %133 = vmatpush.msra.mxu0 %v92
  %134 = vmatpush.msra.mxu0 %v90
  %135 = vmatmul.f32.gmra.mxu0 %v97
  %v136 = vpop.f32.mrf.mxu0
  %v137 = vadd.f32 0.0, %v136
  %138 = vdwg.mxu0
  %v139 = vand.u32 2147483647, %v117
  %v140 = vand.u32 2147483647, %v137
  %v141 = vld [vmem:[%s3] sm:$0xff]
  %v142 = vld [vmem:[%s3 + $0x8] sm:$0xff]
  %v143 = vld [vmem:[%s3 + $0x10] sm:$0xff]
  %v144 = vld [vmem:[%s3 + $0x18] sm:$0xff]
  %145 = vrot.lane.b32.xlu0 %v139, 1
  %v146 = vpop.permute.xlu0 %145
  %147 = vrot.lane.b32.xlu0 %v140, 1
  %v148 = vpop.permute.xlu0 %147
  %v149 = vlaneseq
  %v150 = vand.u32 %v149, 127
  %vm151 = vcmp.lt.s32.totalorder %v150, 1
  %v152 = vsel %vm151, %v146, %v148
  %v153 = vsel %vm151, %v148, %v146
  %v154 = vld [vmem:[%s4] sm:$0x3]
  %v156 = vperm.slane %v154, 0
  %v157 = vperm.slane %v154, 1
  %v160 = vmul.f32 %v153, %v156
  %v161 = vmul.f32 %v152, %v157
  %162 = vrot.lane.b32.xlu0 %v139, 127
  %v163 = vpop.permute.xlu0 %162
  %164 = vrot.lane.b32.xlu0 %v140, 127
  %v165 = vpop.permute.xlu0 %164
  %vm166 = vcmp.lt.s32.totalorder %v150, 127
  %v167 = vsel %vm166, %v163, %v165
  %v168 = vsel %vm166, %v165, %v163
  %s169 = scalar_lea.vmem %s4, 4
  %v170 = vld [vmem:[%s169] sm:$0x3]
  %v172 = vperm.slane %v170, 0
  %v173 = vperm.slane %v170, 1
  %v176 = vmul.f32 %v167, %v172
  %v177 = vmul.f32 %v168, %v173
  %v178 = vld [vmem:[%s2] sm:$0xff]
  %v179 = vld [vmem:[%s2 + $0x8] sm:$0xff]
  %v181 = vsel %vm95, %v178, 0
  %v184 = vsel %vm95, %v179, 0
  %186 = vmatpush.msra.mxu0 0.0
  %187 = vmatpush.msra.mxu0 0.0
  %188 = vmatpush.msra.mxu0 0.0
  %189 = vmatpush.msra.mxu0 0.0
  %190 = vmatpush.msra.mxu0 0.0
  %191 = vmatpush.msra.mxu0 0.0
  %192 = vmatpush.msra.mxu0 0.0
  %193 = vmatpush.msra.mxu0 0.0
  %194 = vmatpush.msra.mxu0 0.0
  %195 = vmatpush.msra.mxu0 0.0
  %196 = vmatpush.msra.mxu0 0.0
  %197 = vmatpush.msra.mxu0 0.0
  %198 = vmatpush.msra.mxu0 0.0
  %199 = vmatpush.msra.mxu0 %v176
  %200 = vmatpush.msra.mxu0 %v139
  %201 = vmatpush.msra.mxu0 %v160
  %202 = vmatmul.f32.gmra.mxu0 %v181
  %v203 = vpop.f32.mrf.mxu0
  %v204 = vadd.f32 0.0, %v203
  %205 = vmatmul.f32.gmra.mxu0 %v184
  %v206 = vpop.f32.mrf.mxu0
  %v207 = vadd.f32 0.0, %v206
  %208 = vdwg.mxu0
  %209 = vmatpush.msra.mxu0 0.0
  %210 = vmatpush.msra.mxu0 0.0
  %211 = vmatpush.msra.mxu0 0.0
  %212 = vmatpush.msra.mxu0 0.0
  %213 = vmatpush.msra.mxu0 0.0
  %214 = vmatpush.msra.mxu0 0.0
  %215 = vmatpush.msra.mxu0 0.0
  %216 = vmatpush.msra.mxu0 0.0
  %217 = vmatpush.msra.mxu0 0.0
  %218 = vmatpush.msra.mxu0 0.0
  %219 = vmatpush.msra.mxu0 0.0
  %220 = vmatpush.msra.mxu0 0.0
  %221 = vmatpush.msra.mxu0 0.0
  %222 = vmatpush.msra.mxu0 %v177
  %223 = vmatpush.msra.mxu0 %v140
  %224 = vmatpush.msra.mxu0 %v161
  %225 = vmatmul.f32.gmra.mxu0 %v181
  %v226 = vpop.f32.mrf.mxu0
  %v227 = vadd.f32 0.0, %v226
  %228 = vmatmul.f32.gmra.mxu0 %v184
  %v229 = vpop.f32.mrf.mxu0
  %v230 = vadd.f32 0.0, %v229
  %231 = vdwg.mxu0
  %v232 = vld [vmem:[%s5] sm:$0x3]
  %v234 = vperm.slane %v232, 0
  %v235 = vperm.slane %v232, 1
  %v238 = vmul.f32 %v204, %v234
  %v239 = vmul.f32 %v227, %v235
  %v240 = vmul.f32 %v207, %v234
  %v241 = vmul.f32 %v230, %v235
  %v242 = vadd.f32 %v141, %v238
  %v243 = vadd.f32 %v142, %v239
  %v244 = vadd.f32 %v143, %v240
  %v245 = vadd.f32 %v144, %v241
  %s246 = scalar_lea.vmem %s2, 16
  %v247 = vld [vmem:[%s246] sm:$0xff]
  %v248 = vld [vmem:[%s246 + $0x8] sm:$0xff]
  %v250 = vsel %vm95, %v247, 0
  %v253 = vsel %vm95, %v248, 0
  %255 = vmatpush.msra.mxu0 0.0
  %256 = vmatpush.msra.mxu0 0.0
  %257 = vmatpush.msra.mxu0 0.0
  %258 = vmatpush.msra.mxu0 0.0
  %259 = vmatpush.msra.mxu0 0.0
  %260 = vmatpush.msra.mxu0 0.0
  %261 = vmatpush.msra.mxu0 0.0
  %262 = vmatpush.msra.mxu0 0.0
  %263 = vmatpush.msra.mxu0 0.0
  %264 = vmatpush.msra.mxu0 0.0
  %265 = vmatpush.msra.mxu0 0.0
  %266 = vmatpush.msra.mxu0 0.0
  %267 = vmatpush.msra.mxu0 0.0
  %268 = vmatpush.msra.mxu0 %v176
  %269 = vmatpush.msra.mxu0 %v139
  %270 = vmatpush.msra.mxu0 %v160
  %271 = vmatmul.f32.gmra.mxu0 %v250
  %v272 = vpop.f32.mrf.mxu0
  %v273 = vadd.f32 0.0, %v272
  %274 = vmatmul.f32.gmra.mxu0 %v253
  %v275 = vpop.f32.mrf.mxu0
  %v276 = vadd.f32 0.0, %v275
  %277 = vdwg.mxu0
  %278 = vmatpush.msra.mxu0 0.0
  %279 = vmatpush.msra.mxu0 0.0
  %280 = vmatpush.msra.mxu0 0.0
  %281 = vmatpush.msra.mxu0 0.0
  %282 = vmatpush.msra.mxu0 0.0
  %283 = vmatpush.msra.mxu0 0.0
  %284 = vmatpush.msra.mxu0 0.0
  %285 = vmatpush.msra.mxu0 0.0
  %286 = vmatpush.msra.mxu0 0.0
  %287 = vmatpush.msra.mxu0 0.0
  %288 = vmatpush.msra.mxu0 0.0
  %289 = vmatpush.msra.mxu0 0.0
  %290 = vmatpush.msra.mxu0 0.0
  %291 = vmatpush.msra.mxu0 %v177
  %292 = vmatpush.msra.mxu0 %v140
  %293 = vmatpush.msra.mxu0 %v161
  %294 = vmatmul.f32.gmra.mxu0 %v250
  %v295 = vpop.f32.mrf.mxu0
  %v296 = vadd.f32 0.0, %v295
  %297 = vmatmul.f32.gmra.mxu0 %v253
  %v298 = vpop.f32.mrf.mxu0
  %v299 = vadd.f32 0.0, %v298
  %300 = vdwg.mxu0
  %s301 = scalar_lea.vmem %s5, 2
  %v302 = vld [vmem:[%s301] sm:$0x3]
  %v304 = vperm.slane %v302, 0
  %v305 = vperm.slane %v302, 1
  %v308 = vmul.f32 %v273, %v304
  %v309 = vmul.f32 %v296, %v305
  %v310 = vmul.f32 %v276, %v304
  %v311 = vmul.f32 %v299, %v305
  %v312 = vadd.f32 %v242, %v308
  %v313 = vadd.f32 %v243, %v309
  %v314 = vadd.f32 %v244, %v310
  %v315 = vadd.f32 %v245, %v311
  %v316 = vmax.f32 %v312, 0.0
  %v317 = vmax.f32 %v313, 0.0
  %v318 = vmax.f32 %v314, 0.0
  %v319 = vmax.f32 %v315, 0.0
  %320 = vrot.lane.b32.xlu0 %v316, 127
  %v321 = vpop.permute.xlu0 %320
  %322 = vrot.lane.b32.xlu0 %v318, 127
  %v323 = vpop.permute.xlu0 %322
  %324 = vrot.lane.b32.xlu0 %v317, 127
  %v325 = vpop.permute.xlu0 %324
  %326 = vrot.lane.b32.xlu0 %v319, 127
  %v327 = vpop.permute.xlu0 %326
  %v328 = vsel %vm166, %v321, %v325
  %v329 = vsel %vm166, %v323, %v327
  %v330 = vsel %vm166, %v325, %v321
  %v331 = vsel %vm166, %v327, %v323
  %v332 = vmax.f32 %v316, %v328
  %v333 = vmax.f32 %v317, %v330
  %v334 = vmax.f32 %v318, %v329
  %v335 = vmax.f32 %v319, %v331
  %v336 = vld [vmem:[%s6] sm:$0xff]
  %v337 = vld [vmem:[%s6 + $0x8] sm:$0xff]
  %v338 = vld [vmem:[%s6 + $0x10] sm:$0xff]
  %v339 = vld [vmem:[%s6 + $0x18] sm:$0xff]
  %v340 = vld [vmem:[%s6 + $0x20] sm:$0xff]
  %v341 = vld [vmem:[%s6 + $0x28] sm:$0xff]
  %v342 = vld [vmem:[%s6 + $0x30] sm:$0xff]
  %v343 = vld [vmem:[%s6 + $0x38] sm:$0xff]
  %v344 = vld [vmem:[%s6 + $0x40] sm:$0xff]
  %v345 = vld [vmem:[%s6 + $0x48] sm:$0xff]
  %v346 = vld [vmem:[%s6 + $0x50] sm:$0xff]
  %v347 = vld [vmem:[%s6 + $0x58] sm:$0xff]
  %v348 = vld [vmem:[%s6 + $0x60] sm:$0xff]
  %v349 = vld [vmem:[%s6 + $0x68] sm:$0xff]
  %v350 = vld [vmem:[%s6 + $0x70] sm:$0xff]
  %v351 = vld [vmem:[%s6 + $0x78] sm:$0xff]
  %v352 = vld [vmem:[%s6 + $0x80] sm:$0xff]
  %v353 = vld [vmem:[%s6 + $0x88] sm:$0xff]
  %v354 = vld [vmem:[%s6 + $0x90] sm:$0xff]
  %v355 = vld [vmem:[%s6 + $0x98] sm:$0xff]
  %v356 = vld [vmem:[%s6 + $0xa0] sm:$0xff]
  %v357 = vld [vmem:[%s6 + $0xa8] sm:$0xff]
  %v358 = vld [vmem:[%s6 + $0xb0] sm:$0xff]
  %v359 = vld [vmem:[%s6 + $0xb8] sm:$0xff]
  %v360 = vld [vmem:[%s6 + $0xc0] sm:$0xff]
  %v361 = vld [vmem:[%s6 + $0xc8] sm:$0xff]
  %v362 = vld [vmem:[%s6 + $0xd0] sm:$0xff]
  %v363 = vld [vmem:[%s6 + $0xd8] sm:$0xff]
  %v364 = vld [vmem:[%s6 + $0xe0] sm:$0xff]
  %v365 = vld [vmem:[%s6 + $0xe8] sm:$0xff]
  %v366 = vld [vmem:[%s6 + $0xf0] sm:$0xff]
  %v367 = vld [vmem:[%s6 + $0xf8] sm:$0xff]
  %368 = vmatpush.msra.mxu0 %v351
  %369 = vmatpush.msra.mxu0 %v350
  %370 = vmatpush.msra.mxu0 %v349
  %371 = vmatpush.msra.mxu0 %v348
  %372 = vmatpush.msra.mxu0 %v347
  %373 = vmatpush.msra.mxu0 %v346
  %374 = vmatpush.msra.mxu0 %v345
  %375 = vmatpush.msra.mxu0 %v344
  %376 = vmatpush.msra.mxu0 %v343
  %377 = vmatpush.msra.mxu0 %v342
  %378 = vmatpush.msra.mxu0 %v341
  %379 = vmatpush.msra.mxu0 %v340
  %380 = vmatpush.msra.mxu0 %v339
  %381 = vmatpush.msra.mxu0 %v338
  %382 = vmatpush.msra.mxu0 %v337
  %383 = vmatpush.msra.mxu0 %v336
  %384 = vmatmul.f32.gmra.mxu0 %v332
  %v385 = vpop.f32.mrf.mxu0
  %v386 = vadd.f32 0.0, %v385
  %387 = vmatmul.f32.gmra.mxu0 %v334
  %v388 = vpop.f32.mrf.mxu0
  %v389 = vadd.f32 0.0, %v388
  %390 = vdwg.mxu0
  %391 = vmatpush.msra.mxu0 %v367
  %392 = vmatpush.msra.mxu0 %v366
  %393 = vmatpush.msra.mxu0 %v365
  %394 = vmatpush.msra.mxu0 %v364
  %395 = vmatpush.msra.mxu0 %v363
  %396 = vmatpush.msra.mxu0 %v362
  %397 = vmatpush.msra.mxu0 %v361
  %398 = vmatpush.msra.mxu0 %v360
  %399 = vmatpush.msra.mxu0 %v359
  %400 = vmatpush.msra.mxu0 %v358
  %401 = vmatpush.msra.mxu0 %v357
  %402 = vmatpush.msra.mxu0 %v356
  %403 = vmatpush.msra.mxu0 %v355
  %404 = vmatpush.msra.mxu0 %v354
  %405 = vmatpush.msra.mxu0 %v353
  %406 = vmatpush.msra.mxu0 %v352
  %407 = vmatmul.f32.gmra.mxu0 %v333
  %v408 = vpop.f32.mrf.mxu0
  %v409 = vadd.f32 %v386, %v408
  %410 = vmatmul.f32.gmra.mxu0 %v335
  %v411 = vpop.f32.mrf.mxu0
  %v412 = vadd.f32 %v389, %v411
  %413 = vdwg.mxu0
  %v414 = vld [vmem:[%s8] sm:$0xff]
  %v415 = vld [vmem:[%s8 + $0x8] sm:$0xff]
  %v416 = vld [vmem:[%s8 + $0x10] sm:$0xff]
  %v417 = vld [vmem:[%s8 + $0x18] sm:$0xff]
  %418 = vrot.lane.b32.xlu0 %v409, 1
  %v419 = vpop.permute.xlu0 %418
  %420 = vrot.lane.b32.xlu0 %v412, 1
  %v421 = vpop.permute.xlu0 %420
  %v422 = vld [vmem:[%s9] sm:$0x1]
  %v424 = vperm.slane %v422, 0
  %v426 = vmul.f32 %v419, %v424
  %v427 = vmul.f32 %v421, %v424
  %428 = vrot.lane.b32.xlu0 %v409, 127
  %v429 = vpop.permute.xlu0 %428
  %430 = vrot.lane.b32.xlu0 %v412, 127
  %v431 = vpop.permute.xlu0 %430
  %s432 = scalar_lea.vmem %s9, 2
  %v433 = vld [vmem:[%s432] sm:$0x1]
  %v435 = vperm.slane %v433, 0
  %v437 = vmul.f32 %v429, %v435
  %v438 = vmul.f32 %v431, %v435
  %v439 = vld [vmem:[%s7] sm:$0xff]
  %v440 = vld [vmem:[%s7 + $0x8] sm:$0xff]
  %v441 = vld [vmem:[%s7 + $0x10] sm:$0xff]
  %v442 = vld [vmem:[%s7 + $0x18] sm:$0xff]
  %vm443 = vcmask 392192
  %v445 = vsel %vm443, %v439, 0
  %v448 = vsel %vm443, %v440, 0
  %v451 = vsel %vm443, %v441, 0
  %v454 = vsel %vm443, %v442, 0
  %456 = vmatpush.msra.mxu0 0.0
  %457 = vmatpush.msra.mxu0 0.0
  %458 = vmatpush.msra.mxu0 0.0
  %459 = vmatpush.msra.mxu0 0.0
  %460 = vmatpush.msra.mxu0 0.0
  %461 = vmatpush.msra.mxu0 0.0
  %462 = vmatpush.msra.mxu0 0.0
  %463 = vmatpush.msra.mxu0 0.0
  %464 = vmatpush.msra.mxu0 0.0
  %465 = vmatpush.msra.mxu0 0.0
  %466 = vmatpush.msra.mxu0 %v438
  %467 = vmatpush.msra.mxu0 %v437
  %468 = vmatpush.msra.mxu0 %v412
  %469 = vmatpush.msra.mxu0 %v409
  %470 = vmatpush.msra.mxu0 %v427
  %471 = vmatpush.msra.mxu0 %v426
  %472 = vmatmul.f32.gmra.mxu0 %v445
  %v473 = vpop.f32.mrf.mxu0
  %v474 = vadd.f32 0.0, %v473
  %475 = vmatmul.f32.gmra.mxu0 %v448
  %v476 = vpop.f32.mrf.mxu0
  %v477 = vadd.f32 0.0, %v476
  %478 = vmatmul.f32.gmra.mxu0 %v451
  %v479 = vpop.f32.mrf.mxu0
  %v480 = vadd.f32 0.0, %v479
  %481 = vmatmul.f32.gmra.mxu0 %v454
  %v482 = vpop.f32.mrf.mxu0
  %v483 = vadd.f32 0.0, %v482
  %484 = vdwg.mxu0
  %v485 = vld [vmem:[%s10] sm:$0x1]
  %v487 = vperm.slane %v485, 0
  %v489 = vmul.f32 %v474, %v487
  %v490 = vmul.f32 %v477, %v487
  %v491 = vmul.f32 %v480, %v487
  %v492 = vmul.f32 %v483, %v487
  %v493 = vadd.f32 %v414, %v489
  %v494 = vadd.f32 %v415, %v490
  %v495 = vadd.f32 %v416, %v491
  %v496 = vadd.f32 %v417, %v492
  %s497 = scalar_lea.vmem %s7, 32
  %v498 = vld [vmem:[%s497] sm:$0xff]
  %v499 = vld [vmem:[%s497 + $0x8] sm:$0xff]
  %v500 = vld [vmem:[%s497 + $0x10] sm:$0xff]
  %v501 = vld [vmem:[%s497 + $0x18] sm:$0xff]
  %v503 = vsel %vm443, %v498, 0
  %v506 = vsel %vm443, %v499, 0
  %v509 = vsel %vm443, %v500, 0
  %v512 = vsel %vm443, %v501, 0
  %514 = vmatpush.msra.mxu0 0.0
  %515 = vmatpush.msra.mxu0 0.0
  %516 = vmatpush.msra.mxu0 0.0
  %517 = vmatpush.msra.mxu0 0.0
  %518 = vmatpush.msra.mxu0 0.0
  %519 = vmatpush.msra.mxu0 0.0
  %520 = vmatpush.msra.mxu0 0.0
  %521 = vmatpush.msra.mxu0 0.0
  %522 = vmatpush.msra.mxu0 0.0
  %523 = vmatpush.msra.mxu0 0.0
  %524 = vmatpush.msra.mxu0 %v438
  %525 = vmatpush.msra.mxu0 %v437
  %526 = vmatpush.msra.mxu0 %v412
  %527 = vmatpush.msra.mxu0 %v409
  %528 = vmatpush.msra.mxu0 %v427
  %529 = vmatpush.msra.mxu0 %v426
  %530 = vmatmul.f32.gmra.mxu0 %v503
  %v531 = vpop.f32.mrf.mxu0
  %v532 = vadd.f32 0.0, %v531
  %533 = vmatmul.f32.gmra.mxu0 %v506
  %v534 = vpop.f32.mrf.mxu0
  %v535 = vadd.f32 0.0, %v534
  %536 = vmatmul.f32.gmra.mxu0 %v509
  %v537 = vpop.f32.mrf.mxu0
  %v538 = vadd.f32 0.0, %v537
  %539 = vmatmul.f32.gmra.mxu0 %v512
  %v540 = vpop.f32.mrf.mxu0
  %v541 = vadd.f32 0.0, %v540
  %542 = vdwg.mxu0
  %s543 = scalar_lea.vmem %s10, 1
  %v544 = vld [vmem:[%s543] sm:$0x1]
  %v546 = vperm.slane %v544, 0
  %v548 = vmul.f32 %v532, %v546
  %v549 = vmul.f32 %v535, %v546
  %v550 = vmul.f32 %v538, %v546
  %v551 = vmul.f32 %v541, %v546
  %v552 = vadd.f32 %v493, %v548
  %v553 = vadd.f32 %v494, %v549
  %v554 = vadd.f32 %v495, %v550
  %v555 = vadd.f32 %v496, %v551
  %v556 = vmax.f32 %v552, 0.0
  %v557 = vmax.f32 %v553, 0.0
  %v558 = vmax.f32 %v554, 0.0
  %v559 = vmax.f32 %v555, 0.0
  %560 = vrot.lane.b32.xlu0 %v556, 127
  %v561 = vpop.permute.xlu0 %560
  %562 = vrot.lane.b32.xlu0 %v557, 127
  %v563 = vpop.permute.xlu0 %562
  %564 = vrot.lane.b32.xlu0 %v558, 127
  %v565 = vpop.permute.xlu0 %564
  %566 = vrot.lane.b32.xlu0 %v559, 127
  %v567 = vpop.permute.xlu0 %566
  %v568 = vmax.f32 %v556, %v561
  %v569 = vmax.f32 %v557, %v563
  %v570 = vmax.f32 %v558, %v565
  %v571 = vmax.f32 %v559, %v567
  %v572 = vmul.f32 %v568, %v487
  %v573 = vmul.f32 %v569, %v487
  %v574 = vmul.f32 %v570, %v487
  %v575 = vmul.f32 %v571, %v487
  %v576 = vmul.f32 %v568, %v546
  %v577 = vmul.f32 %v569, %v546
  %v578 = vmul.f32 %v570, %v546
  %v579 = vmul.f32 %v571, %v546
  %v580 = vld [vmem:[%s13] sm:$0xff]
  %v581 = vld [vmem:[%s13 + $0x8] sm:$0xff]
  %v582 = vld [vmem:[%s13 + $0x10] sm:$0xff]
  %v583 = vld [vmem:[%s13 + $0x18] sm:$0xff]
  %v584 = vld [vmem:[%s13 + $0x20] sm:$0xff]
  %v585 = vld [vmem:[%s13 + $0x28] sm:$0xff]
  %v586 = vld [vmem:[%s13 + $0x30] sm:$0xff]
  %v587 = vld [vmem:[%s13 + $0x38] sm:$0xff]
  %v588 = vld [vmem:[%s13 + $0x40] sm:$0xff]
  %v589 = vld [vmem:[%s13 + $0x48] sm:$0xff]
  %v590 = vld [vmem:[%s13 + $0x50] sm:$0xff]
  %v591 = vld [vmem:[%s13 + $0x58] sm:$0xff]
  %v592 = vld [vmem:[%s13 + $0x60] sm:$0xff]
  %v593 = vld [vmem:[%s13 + $0x68] sm:$0xff]
  %v594 = vld [vmem:[%s13 + $0x70] sm:$0xff]
  %v595 = vld [vmem:[%s13 + $0x78] sm:$0xff]
  %v596 = vld [vmem:[%s11] sm:$0xff]
  %v597 = vld [vmem:[%s11 + $0x8] sm:$0xff]
  %v598 = vld [vmem:[%s11 + $0x10] sm:$0xff]
  %v599 = vld [vmem:[%s11 + $0x18] sm:$0xff]
  %v600 = vld [vmem:[%s11 + $0x20] sm:$0xff]
  %v601 = vld [vmem:[%s11 + $0x28] sm:$0xff]
  %v602 = vld [vmem:[%s11 + $0x30] sm:$0xff]
  %v603 = vld [vmem:[%s11 + $0x38] sm:$0xff]
  %v604 = vld [vmem:[%s11 + $0x40] sm:$0xff]
  %v605 = vld [vmem:[%s11 + $0x48] sm:$0xff]
  %v606 = vld [vmem:[%s11 + $0x50] sm:$0xff]
  %v607 = vld [vmem:[%s11 + $0x58] sm:$0xff]
  %v608 = vld [vmem:[%s11 + $0x60] sm:$0xff]
  %v609 = vld [vmem:[%s11 + $0x68] sm:$0xff]
  %v610 = vld [vmem:[%s11 + $0x70] sm:$0xff]
  %v611 = vld [vmem:[%s11 + $0x78] sm:$0xff]
  %612 = vmatpush.msra.mxu0 %v611
  %613 = vmatpush.msra.mxu0 %v610
  %614 = vmatpush.msra.mxu0 %v609
  %615 = vmatpush.msra.mxu0 %v608
  %616 = vmatpush.msra.mxu0 %v607
  %617 = vmatpush.msra.mxu0 %v606
  %618 = vmatpush.msra.mxu0 %v605
  %619 = vmatpush.msra.mxu0 %v604
  %620 = vmatpush.msra.mxu0 %v603
  %621 = vmatpush.msra.mxu0 %v602
  %622 = vmatpush.msra.mxu0 %v601
  %623 = vmatpush.msra.mxu0 %v600
  %624 = vmatpush.msra.mxu0 %v599
  %625 = vmatpush.msra.mxu0 %v598
  %626 = vmatpush.msra.mxu0 %v597
  %627 = vmatpush.msra.mxu0 %v596
  %628 = vmatmul.f32.gmra.mxu0 %v572
  %v629 = vpop.f32.mrf.mxu0
  %v630 = vadd.f32 0.0, %v629
  %631 = vmatmul.f32.gmra.mxu0 %v573
  %v632 = vpop.f32.mrf.mxu0
  %v633 = vadd.f32 0.0, %v632
  %634 = vmatmul.f32.gmra.mxu0 %v574
  %v635 = vpop.f32.mrf.mxu0
  %v636 = vadd.f32 0.0, %v635
  %637 = vmatmul.f32.gmra.mxu0 %v575
  %v638 = vpop.f32.mrf.mxu0
  %v639 = vadd.f32 0.0, %v638
  %640 = vmatmul.f32.gmra.mxu0 %v576
  %v641 = vpop.f32.mrf.mxu0
  %v642 = vadd.f32 0.0, %v641
  %643 = vmatmul.f32.gmra.mxu0 %v577
  %v644 = vpop.f32.mrf.mxu0
  %v645 = vadd.f32 0.0, %v644
  %646 = vmatmul.f32.gmra.mxu0 %v578
  %v647 = vpop.f32.mrf.mxu0
  %v648 = vadd.f32 0.0, %v647
  %649 = vmatmul.f32.gmra.mxu0 %v579
  %v650 = vpop.f32.mrf.mxu0
  %v651 = vadd.f32 0.0, %v650
  %652 = vdwg.mxu0
  %v653 = vld [vmem:[%s12] sm:$0xff]
  %v654 = vld [vmem:[%s12 + $0x8] sm:$0xff]
  %v655 = vld [vmem:[%s12 + $0x10] sm:$0xff]
  %v656 = vld [vmem:[%s12 + $0x18] sm:$0xff]
  %v657 = vld [vmem:[%s12 + $0x20] sm:$0xff]
  %v658 = vld [vmem:[%s12 + $0x28] sm:$0xff]
  %v659 = vld [vmem:[%s12 + $0x30] sm:$0xff]
  %v660 = vld [vmem:[%s12 + $0x38] sm:$0xff]
  %v661 = vld [vmem:[%s12 + $0x40] sm:$0xff]
  %v662 = vld [vmem:[%s12 + $0x48] sm:$0xff]
  %v663 = vld [vmem:[%s12 + $0x50] sm:$0xff]
  %v664 = vld [vmem:[%s12 + $0x58] sm:$0xff]
  %v665 = vld [vmem:[%s12 + $0x60] sm:$0xff]
  %v666 = vld [vmem:[%s12 + $0x68] sm:$0xff]
  %v667 = vld [vmem:[%s12 + $0x70] sm:$0xff]
  %v668 = vld [vmem:[%s12 + $0x78] sm:$0xff]
  %vm669 = vcmask 523264
  %v671 = vsel %vm669, %v653, 0
  %v674 = vsel %vm669, %v654, 0
  %v677 = vsel %vm669, %v655, 0
  %v680 = vsel %vm669, %v656, 0
  %v683 = vsel %vm669, %v657, 0
  %v686 = vsel %vm669, %v658, 0
  %v689 = vsel %vm669, %v659, 0
  %v692 = vsel %vm669, %v660, 0
  %v695 = vsel %vm669, %v661, 0
  %v698 = vsel %vm669, %v662, 0
  %v701 = vsel %vm669, %v663, 0
  %v704 = vsel %vm669, %v664, 0
  %v707 = vsel %vm669, %v665, 0
  %v710 = vsel %vm669, %v666, 0
  %v713 = vsel %vm669, %v667, 0
  %v716 = vsel %vm669, %v668, 0
  %718 = vmatpush.msra.mxu0 0.0
  %719 = vmatpush.msra.mxu0 0.0
  %720 = vmatpush.msra.mxu0 0.0
  %721 = vmatpush.msra.mxu0 0.0
  %722 = vmatpush.msra.mxu0 0.0
  %723 = vmatpush.msra.mxu0 0.0
  %724 = vmatpush.msra.mxu0 0.0
  %725 = vmatpush.msra.mxu0 0.0
  %726 = vmatpush.msra.mxu0 %v651
  %727 = vmatpush.msra.mxu0 %v648
  %728 = vmatpush.msra.mxu0 %v645
  %729 = vmatpush.msra.mxu0 %v642
  %730 = vmatpush.msra.mxu0 %v639
  %731 = vmatpush.msra.mxu0 %v636
  %732 = vmatpush.msra.mxu0 %v633
  %733 = vmatpush.msra.mxu0 %v630
  %734 = vmatmul.f32.gmra.mxu0 %v671
  %v735 = vpop.f32.mrf.mxu0
  %v736 = vadd.f32 0.0, %v735
  %737 = vmatmul.f32.gmra.mxu0 %v674
  %v738 = vpop.f32.mrf.mxu0
  %v739 = vadd.f32 0.0, %v738
  %740 = vmatmul.f32.gmra.mxu0 %v677
  %v741 = vpop.f32.mrf.mxu0
  %v742 = vadd.f32 0.0, %v741
  %743 = vmatmul.f32.gmra.mxu0 %v680
  %v744 = vpop.f32.mrf.mxu0
  %v745 = vadd.f32 0.0, %v744
  %746 = vmatmul.f32.gmra.mxu0 %v683
  %v747 = vpop.f32.mrf.mxu0
  %v748 = vadd.f32 0.0, %v747
  %749 = vmatmul.f32.gmra.mxu0 %v686
  %v750 = vpop.f32.mrf.mxu0
  %v751 = vadd.f32 0.0, %v750
  %752 = vmatmul.f32.gmra.mxu0 %v689
  %v753 = vpop.f32.mrf.mxu0
  %v754 = vadd.f32 0.0, %v753
  %755 = vmatmul.f32.gmra.mxu0 %v692
  %v756 = vpop.f32.mrf.mxu0
  %v757 = vadd.f32 0.0, %v756
  %758 = vmatmul.f32.gmra.mxu0 %v695
  %v759 = vpop.f32.mrf.mxu0
  %v760 = vadd.f32 0.0, %v759
  %761 = vmatmul.f32.gmra.mxu0 %v698
  %v762 = vpop.f32.mrf.mxu0
  %v763 = vadd.f32 0.0, %v762
  %764 = vmatmul.f32.gmra.mxu0 %v701
  %v765 = vpop.f32.mrf.mxu0
  %v766 = vadd.f32 0.0, %v765
  %767 = vmatmul.f32.gmra.mxu0 %v704
  %v768 = vpop.f32.mrf.mxu0
  %v769 = vadd.f32 0.0, %v768
  %770 = vmatmul.f32.gmra.mxu0 %v707
  %v771 = vpop.f32.mrf.mxu0
  %v772 = vadd.f32 0.0, %v771
  %773 = vmatmul.f32.gmra.mxu0 %v710
  %v774 = vpop.f32.mrf.mxu0
  %v775 = vadd.f32 0.0, %v774
  %776 = vmatmul.f32.gmra.mxu0 %v713
  %v777 = vpop.f32.mrf.mxu0
  %v778 = vadd.f32 0.0, %v777
  %779 = vmatmul.f32.gmra.mxu0 %v716
  %v780 = vpop.f32.mrf.mxu0
  %v781 = vadd.f32 0.0, %v780
  %782 = vdwg.mxu0
  %v783 = vadd.f32 %v580, %v736
  %v784 = vadd.f32 %v581, %v739
  %v785 = vadd.f32 %v582, %v742
  %v786 = vadd.f32 %v583, %v745
  %v787 = vadd.f32 %v584, %v748
  %v788 = vadd.f32 %v585, %v751
  %v789 = vadd.f32 %v586, %v754
  %v790 = vadd.f32 %v587, %v757
  %v791 = vadd.f32 %v588, %v760
  %v792 = vadd.f32 %v589, %v763
  %v793 = vadd.f32 %v590, %v766
  %v794 = vadd.f32 %v591, %v769
  %v795 = vadd.f32 %v592, %v772
  %v796 = vadd.f32 %v593, %v775
  %v797 = vadd.f32 %v594, %v778
  %v798 = vadd.f32 %v595, %v781
  %s799 = scalar_lea.vmem %s11, 128
  %v800 = vld [vmem:[%s799] sm:$0xff]
  %v801 = vld [vmem:[%s799 + $0x8] sm:$0xff]
  %v802 = vld [vmem:[%s799 + $0x10] sm:$0xff]
  %v803 = vld [vmem:[%s799 + $0x18] sm:$0xff]
  %v804 = vld [vmem:[%s799 + $0x20] sm:$0xff]
  %v805 = vld [vmem:[%s799 + $0x28] sm:$0xff]
  %v806 = vld [vmem:[%s799 + $0x30] sm:$0xff]
  %v807 = vld [vmem:[%s799 + $0x38] sm:$0xff]
  %v808 = vld [vmem:[%s799 + $0x40] sm:$0xff]
  %v809 = vld [vmem:[%s799 + $0x48] sm:$0xff]
  %v810 = vld [vmem:[%s799 + $0x50] sm:$0xff]
  %v811 = vld [vmem:[%s799 + $0x58] sm:$0xff]
  %v812 = vld [vmem:[%s799 + $0x60] sm:$0xff]
  %v813 = vld [vmem:[%s799 + $0x68] sm:$0xff]
  %v814 = vld [vmem:[%s799 + $0x70] sm:$0xff]
  %v815 = vld [vmem:[%s799 + $0x78] sm:$0xff]
  %816 = vmatpush.msra.mxu0 %v815
  %817 = vmatpush.msra.mxu0 %v814
  %818 = vmatpush.msra.mxu0 %v813
  %819 = vmatpush.msra.mxu0 %v812
  %820 = vmatpush.msra.mxu0 %v811
  %821 = vmatpush.msra.mxu0 %v810
  %822 = vmatpush.msra.mxu0 %v809
  %823 = vmatpush.msra.mxu0 %v808
  %824 = vmatpush.msra.mxu0 %v807
  %825 = vmatpush.msra.mxu0 %v806
  %826 = vmatpush.msra.mxu0 %v805
  %827 = vmatpush.msra.mxu0 %v804
  %828 = vmatpush.msra.mxu0 %v803
  %829 = vmatpush.msra.mxu0 %v802
  %830 = vmatpush.msra.mxu0 %v801
  %831 = vmatpush.msra.mxu0 %v800
  %832 = vmatmul.f32.gmra.mxu0 %v572
  %v833 = vpop.f32.mrf.mxu0
  %v834 = vadd.f32 0.0, %v833
  %835 = vmatmul.f32.gmra.mxu0 %v573
  %v836 = vpop.f32.mrf.mxu0
  %v837 = vadd.f32 0.0, %v836
  %838 = vmatmul.f32.gmra.mxu0 %v574
  %v839 = vpop.f32.mrf.mxu0
  %v840 = vadd.f32 0.0, %v839
  %841 = vmatmul.f32.gmra.mxu0 %v575
  %v842 = vpop.f32.mrf.mxu0
  %v843 = vadd.f32 0.0, %v842
  %844 = vmatmul.f32.gmra.mxu0 %v576
  %v845 = vpop.f32.mrf.mxu0
  %v846 = vadd.f32 0.0, %v845
  %847 = vmatmul.f32.gmra.mxu0 %v577
  %v848 = vpop.f32.mrf.mxu0
  %v849 = vadd.f32 0.0, %v848
  %850 = vmatmul.f32.gmra.mxu0 %v578
  %v851 = vpop.f32.mrf.mxu0
  %v852 = vadd.f32 0.0, %v851
  %853 = vmatmul.f32.gmra.mxu0 %v579
  %v854 = vpop.f32.mrf.mxu0
  %v855 = vadd.f32 0.0, %v854
  %856 = vdwg.mxu0
  %s857 = scalar_lea.vmem %s12, 128
  %v858 = vld [vmem:[%s857] sm:$0xff]
  %v859 = vld [vmem:[%s857 + $0x8] sm:$0xff]
  %v860 = vld [vmem:[%s857 + $0x10] sm:$0xff]
  %v861 = vld [vmem:[%s857 + $0x18] sm:$0xff]
  %v862 = vld [vmem:[%s857 + $0x20] sm:$0xff]
  %v863 = vld [vmem:[%s857 + $0x28] sm:$0xff]
  %v864 = vld [vmem:[%s857 + $0x30] sm:$0xff]
  %v865 = vld [vmem:[%s857 + $0x38] sm:$0xff]
  %v866 = vld [vmem:[%s857 + $0x40] sm:$0xff]
  %v867 = vld [vmem:[%s857 + $0x48] sm:$0xff]
  %v868 = vld [vmem:[%s857 + $0x50] sm:$0xff]
  %v869 = vld [vmem:[%s857 + $0x58] sm:$0xff]
  %v870 = vld [vmem:[%s857 + $0x60] sm:$0xff]
  %v871 = vld [vmem:[%s857 + $0x68] sm:$0xff]
  %v872 = vld [vmem:[%s857 + $0x70] sm:$0xff]
  %v873 = vld [vmem:[%s857 + $0x78] sm:$0xff]
  %v875 = vsel %vm669, %v858, 0
  %v878 = vsel %vm669, %v859, 0
  %v881 = vsel %vm669, %v860, 0
  %v884 = vsel %vm669, %v861, 0
  %v887 = vsel %vm669, %v862, 0
  %v890 = vsel %vm669, %v863, 0
  %v893 = vsel %vm669, %v864, 0
  %v896 = vsel %vm669, %v865, 0
  %v899 = vsel %vm669, %v866, 0
  %v902 = vsel %vm669, %v867, 0
  %v905 = vsel %vm669, %v868, 0
  %v908 = vsel %vm669, %v869, 0
  %v911 = vsel %vm669, %v870, 0
  %v914 = vsel %vm669, %v871, 0
  %v917 = vsel %vm669, %v872, 0
  %v920 = vsel %vm669, %v873, 0
  %922 = vmatpush.msra.mxu0 0.0
  %923 = vmatpush.msra.mxu0 0.0
  %924 = vmatpush.msra.mxu0 0.0
  %925 = vmatpush.msra.mxu0 0.0
  %926 = vmatpush.msra.mxu0 0.0
  %927 = vmatpush.msra.mxu0 0.0
  %928 = vmatpush.msra.mxu0 0.0
  %929 = vmatpush.msra.mxu0 0.0
  %930 = vmatpush.msra.mxu0 %v855
  %931 = vmatpush.msra.mxu0 %v852
  %932 = vmatpush.msra.mxu0 %v849
  %933 = vmatpush.msra.mxu0 %v846
  %934 = vmatpush.msra.mxu0 %v843
  %935 = vmatpush.msra.mxu0 %v840
  %936 = vmatpush.msra.mxu0 %v837
  %937 = vmatpush.msra.mxu0 %v834
  %938 = vmatmul.f32.gmra.mxu0 %v875
  %v939 = vpop.f32.mrf.mxu0
  %v940 = vadd.f32 0.0, %v939
  %941 = vmatmul.f32.gmra.mxu0 %v878
  %v942 = vpop.f32.mrf.mxu0
  %v943 = vadd.f32 0.0, %v942
  %944 = vmatmul.f32.gmra.mxu0 %v881
  %v945 = vpop.f32.mrf.mxu0
  %v946 = vadd.f32 0.0, %v945
  %947 = vmatmul.f32.gmra.mxu0 %v884
  %v948 = vpop.f32.mrf.mxu0
  %v949 = vadd.f32 0.0, %v948
  %950 = vmatmul.f32.gmra.mxu0 %v887
  %v951 = vpop.f32.mrf.mxu0
  %v952 = vadd.f32 0.0, %v951
  %953 = vmatmul.f32.gmra.mxu0 %v890
  %v954 = vpop.f32.mrf.mxu0
  %v955 = vadd.f32 0.0, %v954
  %956 = vmatmul.f32.gmra.mxu0 %v893
  %v957 = vpop.f32.mrf.mxu0
  %v958 = vadd.f32 0.0, %v957
  %959 = vmatmul.f32.gmra.mxu0 %v896
  %v960 = vpop.f32.mrf.mxu0
  %v961 = vadd.f32 0.0, %v960
  %962 = vmatmul.f32.gmra.mxu0 %v899
  %v963 = vpop.f32.mrf.mxu0
  %v964 = vadd.f32 0.0, %v963
  %965 = vmatmul.f32.gmra.mxu0 %v902
  %v966 = vpop.f32.mrf.mxu0
  %v967 = vadd.f32 0.0, %v966
  %968 = vmatmul.f32.gmra.mxu0 %v905
  %v969 = vpop.f32.mrf.mxu0
  %v970 = vadd.f32 0.0, %v969
  %971 = vmatmul.f32.gmra.mxu0 %v908
  %v972 = vpop.f32.mrf.mxu0
  %v973 = vadd.f32 0.0, %v972
  %974 = vmatmul.f32.gmra.mxu0 %v911
  %v975 = vpop.f32.mrf.mxu0
  %v976 = vadd.f32 0.0, %v975
  %977 = vmatmul.f32.gmra.mxu0 %v914
  %v978 = vpop.f32.mrf.mxu0
  %v979 = vadd.f32 0.0, %v978
  %980 = vmatmul.f32.gmra.mxu0 %v917
  %v981 = vpop.f32.mrf.mxu0
  %v982 = vadd.f32 0.0, %v981
  %983 = vmatmul.f32.gmra.mxu0 %v920
  %v984 = vpop.f32.mrf.mxu0
  %v985 = vadd.f32 0.0, %v984
  %986 = vdwg.mxu0
  %v987 = vadd.f32 %v783, %v940
  %v988 = vadd.f32 %v784, %v943
  %v989 = vadd.f32 %v785, %v946
  %v990 = vadd.f32 %v786, %v949
  %v991 = vadd.f32 %v787, %v952
  %v992 = vadd.f32 %v788, %v955
  %v993 = vadd.f32 %v789, %v958
  %v994 = vadd.f32 %v790, %v961
  %v995 = vadd.f32 %v791, %v964
  %v996 = vadd.f32 %v792, %v967
  %v997 = vadd.f32 %v793, %v970
  %v998 = vadd.f32 %v794, %v973
  %v999 = vadd.f32 %v795, %v976
  %v1000 = vadd.f32 %v796, %v979
  %v1001 = vadd.f32 %v797, %v982
  %v1002 = vadd.f32 %v798, %v985
  %s1003 = scalar_lea.vmem %s11, 256
  %v1004 = vld [vmem:[%s1003] sm:$0xff]
  %v1005 = vld [vmem:[%s1003 + $0x8] sm:$0xff]
  %v1006 = vld [vmem:[%s1003 + $0x10] sm:$0xff]
  %v1007 = vld [vmem:[%s1003 + $0x18] sm:$0xff]
  %v1008 = vld [vmem:[%s1003 + $0x20] sm:$0xff]
  %v1009 = vld [vmem:[%s1003 + $0x28] sm:$0xff]
  %v1010 = vld [vmem:[%s1003 + $0x30] sm:$0xff]
  %v1011 = vld [vmem:[%s1003 + $0x38] sm:$0xff]
  %v1012 = vld [vmem:[%s1003 + $0x40] sm:$0xff]
  %v1013 = vld [vmem:[%s1003 + $0x48] sm:$0xff]
  %v1014 = vld [vmem:[%s1003 + $0x50] sm:$0xff]
  %v1015 = vld [vmem:[%s1003 + $0x58] sm:$0xff]
  %v1016 = vld [vmem:[%s1003 + $0x60] sm:$0xff]
  %v1017 = vld [vmem:[%s1003 + $0x68] sm:$0xff]
  %v1018 = vld [vmem:[%s1003 + $0x70] sm:$0xff]
  %v1019 = vld [vmem:[%s1003 + $0x78] sm:$0xff]
  %1020 = vmatpush.msra.mxu0 %v1019
  %1021 = vmatpush.msra.mxu0 %v1018
  %1022 = vmatpush.msra.mxu0 %v1017
  %1023 = vmatpush.msra.mxu0 %v1016
  %1024 = vmatpush.msra.mxu0 %v1015
  %1025 = vmatpush.msra.mxu0 %v1014
  %1026 = vmatpush.msra.mxu0 %v1013
  %1027 = vmatpush.msra.mxu0 %v1012
  %1028 = vmatpush.msra.mxu0 %v1011
  %1029 = vmatpush.msra.mxu0 %v1010
  %1030 = vmatpush.msra.mxu0 %v1009
  %1031 = vmatpush.msra.mxu0 %v1008
  %1032 = vmatpush.msra.mxu0 %v1007
  %1033 = vmatpush.msra.mxu0 %v1006
  %1034 = vmatpush.msra.mxu0 %v1005
  %1035 = vmatpush.msra.mxu0 %v1004
  %1036 = vmatmul.f32.gmra.mxu0 %v572
  %v1037 = vpop.f32.mrf.mxu0
  %v1038 = vadd.f32 0.0, %v1037
  %1039 = vmatmul.f32.gmra.mxu0 %v573
  %v1040 = vpop.f32.mrf.mxu0
  %v1041 = vadd.f32 0.0, %v1040
  %1042 = vmatmul.f32.gmra.mxu0 %v574
  %v1043 = vpop.f32.mrf.mxu0
  %v1044 = vadd.f32 0.0, %v1043
  %1045 = vmatmul.f32.gmra.mxu0 %v575
  %v1046 = vpop.f32.mrf.mxu0
  %v1047 = vadd.f32 0.0, %v1046
  %1048 = vmatmul.f32.gmra.mxu0 %v576
  %v1049 = vpop.f32.mrf.mxu0
  %v1050 = vadd.f32 0.0, %v1049
  %1051 = vmatmul.f32.gmra.mxu0 %v577
  %v1052 = vpop.f32.mrf.mxu0
  %v1053 = vadd.f32 0.0, %v1052
  %1054 = vmatmul.f32.gmra.mxu0 %v578
  %v1055 = vpop.f32.mrf.mxu0
  %v1056 = vadd.f32 0.0, %v1055
  %1057 = vmatmul.f32.gmra.mxu0 %v579
  %v1058 = vpop.f32.mrf.mxu0
  %v1059 = vadd.f32 0.0, %v1058
  %1060 = vdwg.mxu0
  %s1061 = scalar_lea.vmem %s12, 256
  %v1062 = vld [vmem:[%s1061] sm:$0xff]
  %v1063 = vld [vmem:[%s1061 + $0x8] sm:$0xff]
  %v1064 = vld [vmem:[%s1061 + $0x10] sm:$0xff]
  %v1065 = vld [vmem:[%s1061 + $0x18] sm:$0xff]
  %v1066 = vld [vmem:[%s1061 + $0x20] sm:$0xff]
  %v1067 = vld [vmem:[%s1061 + $0x28] sm:$0xff]
  %v1068 = vld [vmem:[%s1061 + $0x30] sm:$0xff]
  %v1069 = vld [vmem:[%s1061 + $0x38] sm:$0xff]
  %v1070 = vld [vmem:[%s1061 + $0x40] sm:$0xff]
  %v1071 = vld [vmem:[%s1061 + $0x48] sm:$0xff]
  %v1072 = vld [vmem:[%s1061 + $0x50] sm:$0xff]
  %v1073 = vld [vmem:[%s1061 + $0x58] sm:$0xff]
  %v1074 = vld [vmem:[%s1061 + $0x60] sm:$0xff]
  %v1075 = vld [vmem:[%s1061 + $0x68] sm:$0xff]
  %v1076 = vld [vmem:[%s1061 + $0x70] sm:$0xff]
  %v1077 = vld [vmem:[%s1061 + $0x78] sm:$0xff]
  %v1079 = vsel %vm669, %v1062, 0
  %v1082 = vsel %vm669, %v1063, 0
  %v1085 = vsel %vm669, %v1064, 0
  %v1088 = vsel %vm669, %v1065, 0
  %v1091 = vsel %vm669, %v1066, 0
  %v1094 = vsel %vm669, %v1067, 0
  %v1097 = vsel %vm669, %v1068, 0
  %v1100 = vsel %vm669, %v1069, 0
  %v1103 = vsel %vm669, %v1070, 0
  %v1106 = vsel %vm669, %v1071, 0
  %v1109 = vsel %vm669, %v1072, 0
  %v1112 = vsel %vm669, %v1073, 0
  %v1115 = vsel %vm669, %v1074, 0
  %v1118 = vsel %vm669, %v1075, 0
  %v1121 = vsel %vm669, %v1076, 0
  %v1124 = vsel %vm669, %v1077, 0
  %1126 = vmatpush.msra.mxu0 0.0
  %1127 = vmatpush.msra.mxu0 0.0
  %1128 = vmatpush.msra.mxu0 0.0
  %1129 = vmatpush.msra.mxu0 0.0
  %1130 = vmatpush.msra.mxu0 0.0
  %1131 = vmatpush.msra.mxu0 0.0
  %1132 = vmatpush.msra.mxu0 0.0
  %1133 = vmatpush.msra.mxu0 0.0
  %1134 = vmatpush.msra.mxu0 %v1059
  %1135 = vmatpush.msra.mxu0 %v1056
  %1136 = vmatpush.msra.mxu0 %v1053
  %1137 = vmatpush.msra.mxu0 %v1050
  %1138 = vmatpush.msra.mxu0 %v1047
  %1139 = vmatpush.msra.mxu0 %v1044
  %1140 = vmatpush.msra.mxu0 %v1041
  %1141 = vmatpush.msra.mxu0 %v1038
  %1142 = vmatmul.f32.gmra.mxu0 %v1079
  %v1143 = vpop.f32.mrf.mxu0
  %v1144 = vadd.f32 0.0, %v1143
  %1145 = vmatmul.f32.gmra.mxu0 %v1082
  %v1146 = vpop.f32.mrf.mxu0
  %v1147 = vadd.f32 0.0, %v1146
  %1148 = vmatmul.f32.gmra.mxu0 %v1085
  %v1149 = vpop.f32.mrf.mxu0
  %v1150 = vadd.f32 0.0, %v1149
  %1151 = vmatmul.f32.gmra.mxu0 %v1088
  %v1152 = vpop.f32.mrf.mxu0
  %v1153 = vadd.f32 0.0, %v1152
  %1154 = vmatmul.f32.gmra.mxu0 %v1091
  %v1155 = vpop.f32.mrf.mxu0
  %v1156 = vadd.f32 0.0, %v1155
  %1157 = vmatmul.f32.gmra.mxu0 %v1094
  %v1158 = vpop.f32.mrf.mxu0
  %v1159 = vadd.f32 0.0, %v1158
  %1160 = vmatmul.f32.gmra.mxu0 %v1097
  %v1161 = vpop.f32.mrf.mxu0
  %v1162 = vadd.f32 0.0, %v1161
  %1163 = vmatmul.f32.gmra.mxu0 %v1100
  %v1164 = vpop.f32.mrf.mxu0
  %v1165 = vadd.f32 0.0, %v1164
  %1166 = vmatmul.f32.gmra.mxu0 %v1103
  %v1167 = vpop.f32.mrf.mxu0
  %v1168 = vadd.f32 0.0, %v1167
  %1169 = vmatmul.f32.gmra.mxu0 %v1106
  %v1170 = vpop.f32.mrf.mxu0
  %v1171 = vadd.f32 0.0, %v1170
  %1172 = vmatmul.f32.gmra.mxu0 %v1109
  %v1173 = vpop.f32.mrf.mxu0
  %v1174 = vadd.f32 0.0, %v1173
  %1175 = vmatmul.f32.gmra.mxu0 %v1112
  %v1176 = vpop.f32.mrf.mxu0
  %v1177 = vadd.f32 0.0, %v1176
  %1178 = vmatmul.f32.gmra.mxu0 %v1115
  %v1179 = vpop.f32.mrf.mxu0
  %v1180 = vadd.f32 0.0, %v1179
  %1181 = vmatmul.f32.gmra.mxu0 %v1118
  %v1182 = vpop.f32.mrf.mxu0
  %v1183 = vadd.f32 0.0, %v1182
  %1184 = vmatmul.f32.gmra.mxu0 %v1121
  %v1185 = vpop.f32.mrf.mxu0
  %v1186 = vadd.f32 0.0, %v1185
  %1187 = vmatmul.f32.gmra.mxu0 %v1124
  %v1188 = vpop.f32.mrf.mxu0
  %v1189 = vadd.f32 0.0, %v1188
  %1190 = vdwg.mxu0
  %v1191 = vadd.f32 %v987, %v1144
  %v1192 = vadd.f32 %v988, %v1147
  %v1193 = vadd.f32 %v989, %v1150
  %v1194 = vadd.f32 %v990, %v1153
  %v1195 = vadd.f32 %v991, %v1156
  %v1196 = vadd.f32 %v992, %v1159
  %v1197 = vadd.f32 %v993, %v1162
  %v1198 = vadd.f32 %v994, %v1165
  %v1199 = vadd.f32 %v995, %v1168
  %v1200 = vadd.f32 %v996, %v1171
  %v1201 = vadd.f32 %v997, %v1174
  %v1202 = vadd.f32 %v998, %v1177
  %v1203 = vadd.f32 %v999, %v1180
  %v1204 = vadd.f32 %v1000, %v1183
  %v1205 = vadd.f32 %v1001, %v1186
  %v1206 = vadd.f32 %v1002, %v1189
  %s1207 = scalar_lea.vmem %s11, 384
  %v1208 = vld [vmem:[%s1207] sm:$0xff]
  %v1209 = vld [vmem:[%s1207 + $0x8] sm:$0xff]
  %v1210 = vld [vmem:[%s1207 + $0x10] sm:$0xff]
  %v1211 = vld [vmem:[%s1207 + $0x18] sm:$0xff]
  %v1212 = vld [vmem:[%s1207 + $0x20] sm:$0xff]
  %v1213 = vld [vmem:[%s1207 + $0x28] sm:$0xff]
  %v1214 = vld [vmem:[%s1207 + $0x30] sm:$0xff]
  %v1215 = vld [vmem:[%s1207 + $0x38] sm:$0xff]
  %v1216 = vld [vmem:[%s1207 + $0x40] sm:$0xff]
  %v1217 = vld [vmem:[%s1207 + $0x48] sm:$0xff]
  %v1218 = vld [vmem:[%s1207 + $0x50] sm:$0xff]
  %v1219 = vld [vmem:[%s1207 + $0x58] sm:$0xff]
  %v1220 = vld [vmem:[%s1207 + $0x60] sm:$0xff]
  %v1221 = vld [vmem:[%s1207 + $0x68] sm:$0xff]
  %v1222 = vld [vmem:[%s1207 + $0x70] sm:$0xff]
  %v1223 = vld [vmem:[%s1207 + $0x78] sm:$0xff]
  %1224 = vmatpush.msra.mxu0 %v1223
  %1225 = vmatpush.msra.mxu0 %v1222
  %1226 = vmatpush.msra.mxu0 %v1221
  %1227 = vmatpush.msra.mxu0 %v1220
  %1228 = vmatpush.msra.mxu0 %v1219
  %1229 = vmatpush.msra.mxu0 %v1218
  %1230 = vmatpush.msra.mxu0 %v1217
  %1231 = vmatpush.msra.mxu0 %v1216
  %1232 = vmatpush.msra.mxu0 %v1215
  %1233 = vmatpush.msra.mxu0 %v1214
  %1234 = vmatpush.msra.mxu0 %v1213
  %1235 = vmatpush.msra.mxu0 %v1212
  %1236 = vmatpush.msra.mxu0 %v1211
  %1237 = vmatpush.msra.mxu0 %v1210
  %1238 = vmatpush.msra.mxu0 %v1209
  %1239 = vmatpush.msra.mxu0 %v1208
  %1240 = vmatmul.f32.gmra.mxu0 %v572
  %v1241 = vpop.f32.mrf.mxu0
  %v1242 = vadd.f32 0.0, %v1241
  %1243 = vmatmul.f32.gmra.mxu0 %v573
  %v1244 = vpop.f32.mrf.mxu0
  %v1245 = vadd.f32 0.0, %v1244
  %1246 = vmatmul.f32.gmra.mxu0 %v574
  %v1247 = vpop.f32.mrf.mxu0
  %v1248 = vadd.f32 0.0, %v1247
  %1249 = vmatmul.f32.gmra.mxu0 %v575
  %v1250 = vpop.f32.mrf.mxu0
  %v1251 = vadd.f32 0.0, %v1250
  %1252 = vmatmul.f32.gmra.mxu0 %v576
  %v1253 = vpop.f32.mrf.mxu0
  %v1254 = vadd.f32 0.0, %v1253
  %1255 = vmatmul.f32.gmra.mxu0 %v577
  %v1256 = vpop.f32.mrf.mxu0
  %v1257 = vadd.f32 0.0, %v1256
  %1258 = vmatmul.f32.gmra.mxu0 %v578
  %v1259 = vpop.f32.mrf.mxu0
  %v1260 = vadd.f32 0.0, %v1259
  %1261 = vmatmul.f32.gmra.mxu0 %v579
  %v1262 = vpop.f32.mrf.mxu0
  %v1263 = vadd.f32 0.0, %v1262
  %1264 = vdwg.mxu0
  %s1265 = scalar_lea.vmem %s12, 384
  %v1266 = vld [vmem:[%s1265] sm:$0xff]
  %v1267 = vld [vmem:[%s1265 + $0x8] sm:$0xff]
  %v1268 = vld [vmem:[%s1265 + $0x10] sm:$0xff]
  %v1269 = vld [vmem:[%s1265 + $0x18] sm:$0xff]
  %v1270 = vld [vmem:[%s1265 + $0x20] sm:$0xff]
  %v1271 = vld [vmem:[%s1265 + $0x28] sm:$0xff]
  %v1272 = vld [vmem:[%s1265 + $0x30] sm:$0xff]
  %v1273 = vld [vmem:[%s1265 + $0x38] sm:$0xff]
  %v1274 = vld [vmem:[%s1265 + $0x40] sm:$0xff]
  %v1275 = vld [vmem:[%s1265 + $0x48] sm:$0xff]
  %v1276 = vld [vmem:[%s1265 + $0x50] sm:$0xff]
  %v1277 = vld [vmem:[%s1265 + $0x58] sm:$0xff]
  %v1278 = vld [vmem:[%s1265 + $0x60] sm:$0xff]
  %v1279 = vld [vmem:[%s1265 + $0x68] sm:$0xff]
  %v1280 = vld [vmem:[%s1265 + $0x70] sm:$0xff]
  %v1281 = vld [vmem:[%s1265 + $0x78] sm:$0xff]
  %v1283 = vsel %vm669, %v1266, 0
  %v1286 = vsel %vm669, %v1267, 0
  %v1289 = vsel %vm669, %v1268, 0
  %v1292 = vsel %vm669, %v1269, 0
  %v1295 = vsel %vm669, %v1270, 0
  %v1298 = vsel %vm669, %v1271, 0
  %v1301 = vsel %vm669, %v1272, 0
  %v1304 = vsel %vm669, %v1273, 0
  %v1307 = vsel %vm669, %v1274, 0
  %v1310 = vsel %vm669, %v1275, 0
  %v1313 = vsel %vm669, %v1276, 0
  %v1316 = vsel %vm669, %v1277, 0
  %v1319 = vsel %vm669, %v1278, 0
  %v1322 = vsel %vm669, %v1279, 0
  %v1325 = vsel %vm669, %v1280, 0
  %v1328 = vsel %vm669, %v1281, 0
  %1330 = vmatpush.msra.mxu0 0.0
  %1331 = vmatpush.msra.mxu0 0.0
  %1332 = vmatpush.msra.mxu0 0.0
  %1333 = vmatpush.msra.mxu0 0.0
  %1334 = vmatpush.msra.mxu0 0.0
  %1335 = vmatpush.msra.mxu0 0.0
  %1336 = vmatpush.msra.mxu0 0.0
  %1337 = vmatpush.msra.mxu0 0.0
  %1338 = vmatpush.msra.mxu0 %v1263
  %1339 = vmatpush.msra.mxu0 %v1260
  %1340 = vmatpush.msra.mxu0 %v1257
  %1341 = vmatpush.msra.mxu0 %v1254
  %1342 = vmatpush.msra.mxu0 %v1251
  %1343 = vmatpush.msra.mxu0 %v1248
  %1344 = vmatpush.msra.mxu0 %v1245
  %1345 = vmatpush.msra.mxu0 %v1242
  %1346 = vmatmul.f32.gmra.mxu0 %v1283
  %v1347 = vpop.f32.mrf.mxu0
  %v1348 = vadd.f32 0.0, %v1347
  %1349 = vmatmul.f32.gmra.mxu0 %v1286
  %v1350 = vpop.f32.mrf.mxu0
  %v1351 = vadd.f32 0.0, %v1350
  %1352 = vmatmul.f32.gmra.mxu0 %v1289
  %v1353 = vpop.f32.mrf.mxu0
  %v1354 = vadd.f32 0.0, %v1353
  %1355 = vmatmul.f32.gmra.mxu0 %v1292
  %v1356 = vpop.f32.mrf.mxu0
  %v1357 = vadd.f32 0.0, %v1356
  %1358 = vmatmul.f32.gmra.mxu0 %v1295
  %v1359 = vpop.f32.mrf.mxu0
  %v1360 = vadd.f32 0.0, %v1359
  %1361 = vmatmul.f32.gmra.mxu0 %v1298
  %v1362 = vpop.f32.mrf.mxu0
  %v1363 = vadd.f32 0.0, %v1362
  %1364 = vmatmul.f32.gmra.mxu0 %v1301
  %v1365 = vpop.f32.mrf.mxu0
  %v1366 = vadd.f32 0.0, %v1365
  %1367 = vmatmul.f32.gmra.mxu0 %v1304
  %v1368 = vpop.f32.mrf.mxu0
  %v1369 = vadd.f32 0.0, %v1368
  %1370 = vmatmul.f32.gmra.mxu0 %v1307
  %v1371 = vpop.f32.mrf.mxu0
  %v1372 = vadd.f32 0.0, %v1371
  %1373 = vmatmul.f32.gmra.mxu0 %v1310
  %v1374 = vpop.f32.mrf.mxu0
  %v1375 = vadd.f32 0.0, %v1374
  %1376 = vmatmul.f32.gmra.mxu0 %v1313
  %v1377 = vpop.f32.mrf.mxu0
  %v1378 = vadd.f32 0.0, %v1377
  %1379 = vmatmul.f32.gmra.mxu0 %v1316
  %v1380 = vpop.f32.mrf.mxu0
  %v1381 = vadd.f32 0.0, %v1380
  %1382 = vmatmul.f32.gmra.mxu0 %v1319
  %v1383 = vpop.f32.mrf.mxu0
  %v1384 = vadd.f32 0.0, %v1383
  %1385 = vmatmul.f32.gmra.mxu0 %v1322
  %v1386 = vpop.f32.mrf.mxu0
  %v1387 = vadd.f32 0.0, %v1386
  %1388 = vmatmul.f32.gmra.mxu0 %v1325
  %v1389 = vpop.f32.mrf.mxu0
  %v1390 = vadd.f32 0.0, %v1389
  %1391 = vmatmul.f32.gmra.mxu0 %v1328
  %v1392 = vpop.f32.mrf.mxu0
  %v1393 = vadd.f32 0.0, %v1392
  %1394 = vdwg.mxu0
  %v1395 = vadd.f32 %v1191, %v1348
  %v1396 = vadd.f32 %v1192, %v1351
  %v1397 = vadd.f32 %v1193, %v1354
  %v1398 = vadd.f32 %v1194, %v1357
  %v1399 = vadd.f32 %v1195, %v1360
  %v1400 = vadd.f32 %v1196, %v1363
  %v1401 = vadd.f32 %v1197, %v1366
  %v1402 = vadd.f32 %v1198, %v1369
  %v1403 = vadd.f32 %v1199, %v1372
  %v1404 = vadd.f32 %v1200, %v1375
  %v1405 = vadd.f32 %v1201, %v1378
  %v1406 = vadd.f32 %v1202, %v1381
  %v1407 = vadd.f32 %v1203, %v1384
  %v1408 = vadd.f32 %v1204, %v1387
  %v1409 = vadd.f32 %v1205, %v1390
  %v1410 = vadd.f32 %v1206, %v1393
  %s1411 = scalar_lea.vmem %s11, 512
  %v1412 = vld [vmem:[%s1411] sm:$0xff]
  %v1413 = vld [vmem:[%s1411 + $0x8] sm:$0xff]
  %v1414 = vld [vmem:[%s1411 + $0x10] sm:$0xff]
  %v1415 = vld [vmem:[%s1411 + $0x18] sm:$0xff]
  %v1416 = vld [vmem:[%s1411 + $0x20] sm:$0xff]
  %v1417 = vld [vmem:[%s1411 + $0x28] sm:$0xff]
  %v1418 = vld [vmem:[%s1411 + $0x30] sm:$0xff]
  %v1419 = vld [vmem:[%s1411 + $0x38] sm:$0xff]
  %v1420 = vld [vmem:[%s1411 + $0x40] sm:$0xff]
  %v1421 = vld [vmem:[%s1411 + $0x48] sm:$0xff]
  %v1422 = vld [vmem:[%s1411 + $0x50] sm:$0xff]
  %v1423 = vld [vmem:[%s1411 + $0x58] sm:$0xff]
  %v1424 = vld [vmem:[%s1411 + $0x60] sm:$0xff]
  %v1425 = vld [vmem:[%s1411 + $0x68] sm:$0xff]
  %v1426 = vld [vmem:[%s1411 + $0x70] sm:$0xff]
  %v1427 = vld [vmem:[%s1411 + $0x78] sm:$0xff]
  %1428 = vmatpush.msra.mxu0 %v1427
  %1429 = vmatpush.msra.mxu0 %v1426
  %1430 = vmatpush.msra.mxu0 %v1425
  %1431 = vmatpush.msra.mxu0 %v1424
  %1432 = vmatpush.msra.mxu0 %v1423
  %1433 = vmatpush.msra.mxu0 %v1422
  %1434 = vmatpush.msra.mxu0 %v1421
  %1435 = vmatpush.msra.mxu0 %v1420
  %1436 = vmatpush.msra.mxu0 %v1419
  %1437 = vmatpush.msra.mxu0 %v1418
  %1438 = vmatpush.msra.mxu0 %v1417
  %1439 = vmatpush.msra.mxu0 %v1416
  %1440 = vmatpush.msra.mxu0 %v1415
  %1441 = vmatpush.msra.mxu0 %v1414
  %1442 = vmatpush.msra.mxu0 %v1413
  %1443 = vmatpush.msra.mxu0 %v1412
  %1444 = vmatmul.f32.gmra.mxu0 %v572
  %v1445 = vpop.f32.mrf.mxu0
  %v1446 = vadd.f32 0.0, %v1445
  %1447 = vmatmul.f32.gmra.mxu0 %v573
  %v1448 = vpop.f32.mrf.mxu0
  %v1449 = vadd.f32 0.0, %v1448
  %1450 = vmatmul.f32.gmra.mxu0 %v574
  %v1451 = vpop.f32.mrf.mxu0
  %v1452 = vadd.f32 0.0, %v1451
  %1453 = vmatmul.f32.gmra.mxu0 %v575
  %v1454 = vpop.f32.mrf.mxu0
  %v1455 = vadd.f32 0.0, %v1454
  %1456 = vmatmul.f32.gmra.mxu0 %v576
  %v1457 = vpop.f32.mrf.mxu0
  %v1458 = vadd.f32 0.0, %v1457
  %1459 = vmatmul.f32.gmra.mxu0 %v577
  %v1460 = vpop.f32.mrf.mxu0
  %v1461 = vadd.f32 0.0, %v1460
  %1462 = vmatmul.f32.gmra.mxu0 %v578
  %v1463 = vpop.f32.mrf.mxu0
  %v1464 = vadd.f32 0.0, %v1463
  %1465 = vmatmul.f32.gmra.mxu0 %v579
  %v1466 = vpop.f32.mrf.mxu0
  %v1467 = vadd.f32 0.0, %v1466
  %1468 = vdwg.mxu0
  %s1469 = scalar_lea.vmem %s12, 512
  %v1470 = vld [vmem:[%s1469] sm:$0xff]
  %v1471 = vld [vmem:[%s1469 + $0x8] sm:$0xff]
  %v1472 = vld [vmem:[%s1469 + $0x10] sm:$0xff]
  %v1473 = vld [vmem:[%s1469 + $0x18] sm:$0xff]
  %v1474 = vld [vmem:[%s1469 + $0x20] sm:$0xff]
  %v1475 = vld [vmem:[%s1469 + $0x28] sm:$0xff]
  %v1476 = vld [vmem:[%s1469 + $0x30] sm:$0xff]
  %v1477 = vld [vmem:[%s1469 + $0x38] sm:$0xff]
  %v1478 = vld [vmem:[%s1469 + $0x40] sm:$0xff]
  %v1479 = vld [vmem:[%s1469 + $0x48] sm:$0xff]
  %v1480 = vld [vmem:[%s1469 + $0x50] sm:$0xff]
  %v1481 = vld [vmem:[%s1469 + $0x58] sm:$0xff]
  %v1482 = vld [vmem:[%s1469 + $0x60] sm:$0xff]
  %v1483 = vld [vmem:[%s1469 + $0x68] sm:$0xff]
  %v1484 = vld [vmem:[%s1469 + $0x70] sm:$0xff]
  %v1485 = vld [vmem:[%s1469 + $0x78] sm:$0xff]
  %v1487 = vsel %vm669, %v1470, 0
  %v1490 = vsel %vm669, %v1471, 0
  %v1493 = vsel %vm669, %v1472, 0
  %v1496 = vsel %vm669, %v1473, 0
  %v1499 = vsel %vm669, %v1474, 0
  %v1502 = vsel %vm669, %v1475, 0
  %v1505 = vsel %vm669, %v1476, 0
  %v1508 = vsel %vm669, %v1477, 0
  %v1511 = vsel %vm669, %v1478, 0
  %v1514 = vsel %vm669, %v1479, 0
  %v1517 = vsel %vm669, %v1480, 0
  %v1520 = vsel %vm669, %v1481, 0
  %v1523 = vsel %vm669, %v1482, 0
  %v1526 = vsel %vm669, %v1483, 0
  %v1529 = vsel %vm669, %v1484, 0
  %v1532 = vsel %vm669, %v1485, 0
  %1534 = vmatpush.msra.mxu0 0.0
  %1535 = vmatpush.msra.mxu0 0.0
  %1536 = vmatpush.msra.mxu0 0.0
  %1537 = vmatpush.msra.mxu0 0.0
  %1538 = vmatpush.msra.mxu0 0.0
  %1539 = vmatpush.msra.mxu0 0.0
  %1540 = vmatpush.msra.mxu0 0.0
  %1541 = vmatpush.msra.mxu0 0.0
  %1542 = vmatpush.msra.mxu0 %v1467
  %1543 = vmatpush.msra.mxu0 %v1464
  %1544 = vmatpush.msra.mxu0 %v1461
  %1545 = vmatpush.msra.mxu0 %v1458
  %1546 = vmatpush.msra.mxu0 %v1455
  %1547 = vmatpush.msra.mxu0 %v1452
  %1548 = vmatpush.msra.mxu0 %v1449
  %1549 = vmatpush.msra.mxu0 %v1446
  %1550 = vmatmul.f32.gmra.mxu0 %v1487
  %v1551 = vpop.f32.mrf.mxu0
  %v1552 = vadd.f32 0.0, %v1551
  %1553 = vmatmul.f32.gmra.mxu0 %v1490
  %v1554 = vpop.f32.mrf.mxu0
  %v1555 = vadd.f32 0.0, %v1554
  %1556 = vmatmul.f32.gmra.mxu0 %v1493
  %v1557 = vpop.f32.mrf.mxu0
  %v1558 = vadd.f32 0.0, %v1557
  %1559 = vmatmul.f32.gmra.mxu0 %v1496
  %v1560 = vpop.f32.mrf.mxu0
  %v1561 = vadd.f32 0.0, %v1560
  %1562 = vmatmul.f32.gmra.mxu0 %v1499
  %v1563 = vpop.f32.mrf.mxu0
  %v1564 = vadd.f32 0.0, %v1563
  %1565 = vmatmul.f32.gmra.mxu0 %v1502
  %v1566 = vpop.f32.mrf.mxu0
  %v1567 = vadd.f32 0.0, %v1566
  %1568 = vmatmul.f32.gmra.mxu0 %v1505
  %v1569 = vpop.f32.mrf.mxu0
  %v1570 = vadd.f32 0.0, %v1569
  %1571 = vmatmul.f32.gmra.mxu0 %v1508
  %v1572 = vpop.f32.mrf.mxu0
  %v1573 = vadd.f32 0.0, %v1572
  %1574 = vmatmul.f32.gmra.mxu0 %v1511
  %v1575 = vpop.f32.mrf.mxu0
  %v1576 = vadd.f32 0.0, %v1575
  %1577 = vmatmul.f32.gmra.mxu0 %v1514
  %v1578 = vpop.f32.mrf.mxu0
  %v1579 = vadd.f32 0.0, %v1578
  %1580 = vmatmul.f32.gmra.mxu0 %v1517
  %v1581 = vpop.f32.mrf.mxu0
  %v1582 = vadd.f32 0.0, %v1581
  %1583 = vmatmul.f32.gmra.mxu0 %v1520
  %v1584 = vpop.f32.mrf.mxu0
  %v1585 = vadd.f32 0.0, %v1584
  %1586 = vmatmul.f32.gmra.mxu0 %v1523
  %v1587 = vpop.f32.mrf.mxu0
  %v1588 = vadd.f32 0.0, %v1587
  %1589 = vmatmul.f32.gmra.mxu0 %v1526
  %v1590 = vpop.f32.mrf.mxu0
  %v1591 = vadd.f32 0.0, %v1590
  %1592 = vmatmul.f32.gmra.mxu0 %v1529
  %v1593 = vpop.f32.mrf.mxu0
  %v1594 = vadd.f32 0.0, %v1593
  %1595 = vmatmul.f32.gmra.mxu0 %v1532
  %v1596 = vpop.f32.mrf.mxu0
  %v1597 = vadd.f32 0.0, %v1596
  %1598 = vdwg.mxu0
  %v1599 = vadd.f32 %v1395, %v1552
  %v1600 = vadd.f32 %v1396, %v1555
  %v1601 = vadd.f32 %v1397, %v1558
  %v1602 = vadd.f32 %v1398, %v1561
  %v1603 = vadd.f32 %v1399, %v1564
  %v1604 = vadd.f32 %v1400, %v1567
  %v1605 = vadd.f32 %v1401, %v1570
  %v1606 = vadd.f32 %v1402, %v1573
  %v1607 = vadd.f32 %v1403, %v1576
  %v1608 = vadd.f32 %v1404, %v1579
  %v1609 = vadd.f32 %v1405, %v1582
  %v1610 = vadd.f32 %v1406, %v1585
  %v1611 = vadd.f32 %v1407, %v1588
  %v1612 = vadd.f32 %v1408, %v1591
  %v1613 = vadd.f32 %v1409, %v1594
  %v1614 = vadd.f32 %v1410, %v1597
  %s1615 = scalar_lea.vmem %s11, 640
  %v1616 = vld [vmem:[%s1615] sm:$0xff]
  %v1617 = vld [vmem:[%s1615 + $0x8] sm:$0xff]
  %v1618 = vld [vmem:[%s1615 + $0x10] sm:$0xff]
  %v1619 = vld [vmem:[%s1615 + $0x18] sm:$0xff]
  %v1620 = vld [vmem:[%s1615 + $0x20] sm:$0xff]
  %v1621 = vld [vmem:[%s1615 + $0x28] sm:$0xff]
  %v1622 = vld [vmem:[%s1615 + $0x30] sm:$0xff]
  %v1623 = vld [vmem:[%s1615 + $0x38] sm:$0xff]
  %v1624 = vld [vmem:[%s1615 + $0x40] sm:$0xff]
  %v1625 = vld [vmem:[%s1615 + $0x48] sm:$0xff]
  %v1626 = vld [vmem:[%s1615 + $0x50] sm:$0xff]
  %v1627 = vld [vmem:[%s1615 + $0x58] sm:$0xff]
  %v1628 = vld [vmem:[%s1615 + $0x60] sm:$0xff]
  %v1629 = vld [vmem:[%s1615 + $0x68] sm:$0xff]
  %v1630 = vld [vmem:[%s1615 + $0x70] sm:$0xff]
  %v1631 = vld [vmem:[%s1615 + $0x78] sm:$0xff]
  %1632 = vmatpush.msra.mxu0 %v1631
  %1633 = vmatpush.msra.mxu0 %v1630
  %1634 = vmatpush.msra.mxu0 %v1629
  %1635 = vmatpush.msra.mxu0 %v1628
  %1636 = vmatpush.msra.mxu0 %v1627
  %1637 = vmatpush.msra.mxu0 %v1626
  %1638 = vmatpush.msra.mxu0 %v1625
  %1639 = vmatpush.msra.mxu0 %v1624
  %1640 = vmatpush.msra.mxu0 %v1623
  %1641 = vmatpush.msra.mxu0 %v1622
  %1642 = vmatpush.msra.mxu0 %v1621
  %1643 = vmatpush.msra.mxu0 %v1620
  %1644 = vmatpush.msra.mxu0 %v1619
  %1645 = vmatpush.msra.mxu0 %v1618
  %1646 = vmatpush.msra.mxu0 %v1617
  %1647 = vmatpush.msra.mxu0 %v1616
  %1648 = vmatmul.f32.gmra.mxu0 %v572
  %v1649 = vpop.f32.mrf.mxu0
  %v1650 = vadd.f32 0.0, %v1649
  %1651 = vmatmul.f32.gmra.mxu0 %v573
  %v1652 = vpop.f32.mrf.mxu0
  %v1653 = vadd.f32 0.0, %v1652
  %1654 = vmatmul.f32.gmra.mxu0 %v574
  %v1655 = vpop.f32.mrf.mxu0
  %v1656 = vadd.f32 0.0, %v1655
  %1657 = vmatmul.f32.gmra.mxu0 %v575
  %v1658 = vpop.f32.mrf.mxu0
  %v1659 = vadd.f32 0.0, %v1658
  %1660 = vmatmul.f32.gmra.mxu0 %v576
  %v1661 = vpop.f32.mrf.mxu0
  %v1662 = vadd.f32 0.0, %v1661
  %1663 = vmatmul.f32.gmra.mxu0 %v577
  %v1664 = vpop.f32.mrf.mxu0
  %v1665 = vadd.f32 0.0, %v1664
  %1666 = vmatmul.f32.gmra.mxu0 %v578
  %v1667 = vpop.f32.mrf.mxu0
  %v1668 = vadd.f32 0.0, %v1667
  %1669 = vmatmul.f32.gmra.mxu0 %v579
  %v1670 = vpop.f32.mrf.mxu0
  %v1671 = vadd.f32 0.0, %v1670
  %1672 = vdwg.mxu0
  %s1673 = scalar_lea.vmem %s12, 640
  %v1674 = vld [vmem:[%s1673] sm:$0xff]
  %v1675 = vld [vmem:[%s1673 + $0x8] sm:$0xff]
  %v1676 = vld [vmem:[%s1673 + $0x10] sm:$0xff]
  %v1677 = vld [vmem:[%s1673 + $0x18] sm:$0xff]
  %v1678 = vld [vmem:[%s1673 + $0x20] sm:$0xff]
  %v1679 = vld [vmem:[%s1673 + $0x28] sm:$0xff]
  %v1680 = vld [vmem:[%s1673 + $0x30] sm:$0xff]
  %v1681 = vld [vmem:[%s1673 + $0x38] sm:$0xff]
  %v1682 = vld [vmem:[%s1673 + $0x40] sm:$0xff]
  %v1683 = vld [vmem:[%s1673 + $0x48] sm:$0xff]
  %v1684 = vld [vmem:[%s1673 + $0x50] sm:$0xff]
  %v1685 = vld [vmem:[%s1673 + $0x58] sm:$0xff]
  %v1686 = vld [vmem:[%s1673 + $0x60] sm:$0xff]
  %v1687 = vld [vmem:[%s1673 + $0x68] sm:$0xff]
  %v1688 = vld [vmem:[%s1673 + $0x70] sm:$0xff]
  %v1689 = vld [vmem:[%s1673 + $0x78] sm:$0xff]
  %v1691 = vsel %vm669, %v1674, 0
  %v1694 = vsel %vm669, %v1675, 0
  %v1697 = vsel %vm669, %v1676, 0
  %v1700 = vsel %vm669, %v1677, 0
  %v1703 = vsel %vm669, %v1678, 0
  %v1706 = vsel %vm669, %v1679, 0
  %v1709 = vsel %vm669, %v1680, 0
  %v1712 = vsel %vm669, %v1681, 0
  %v1715 = vsel %vm669, %v1682, 0
  %v1718 = vsel %vm669, %v1683, 0
  %v1721 = vsel %vm669, %v1684, 0
  %v1724 = vsel %vm669, %v1685, 0
  %v1727 = vsel %vm669, %v1686, 0
  %v1730 = vsel %vm669, %v1687, 0
  %v1733 = vsel %vm669, %v1688, 0
  %v1736 = vsel %vm669, %v1689, 0
  %1738 = vmatpush.msra.mxu0 0.0
  %1739 = vmatpush.msra.mxu0 0.0
  %1740 = vmatpush.msra.mxu0 0.0
  %1741 = vmatpush.msra.mxu0 0.0
  %1742 = vmatpush.msra.mxu0 0.0
  %1743 = vmatpush.msra.mxu0 0.0
  %1744 = vmatpush.msra.mxu0 0.0
  %1745 = vmatpush.msra.mxu0 0.0
  %1746 = vmatpush.msra.mxu0 %v1671
  %1747 = vmatpush.msra.mxu0 %v1668
  %1748 = vmatpush.msra.mxu0 %v1665
  %1749 = vmatpush.msra.mxu0 %v1662
  %1750 = vmatpush.msra.mxu0 %v1659
  %1751 = vmatpush.msra.mxu0 %v1656
  %1752 = vmatpush.msra.mxu0 %v1653
  %1753 = vmatpush.msra.mxu0 %v1650
  %1754 = vmatmul.f32.gmra.mxu0 %v1691
  %v1755 = vpop.f32.mrf.mxu0
  %v1756 = vadd.f32 0.0, %v1755
  %1757 = vmatmul.f32.gmra.mxu0 %v1694
  %v1758 = vpop.f32.mrf.mxu0
  %v1759 = vadd.f32 0.0, %v1758
  %1760 = vmatmul.f32.gmra.mxu0 %v1697
  %v1761 = vpop.f32.mrf.mxu0
  %v1762 = vadd.f32 0.0, %v1761
  %1763 = vmatmul.f32.gmra.mxu0 %v1700
  %v1764 = vpop.f32.mrf.mxu0
  %v1765 = vadd.f32 0.0, %v1764
  %1766 = vmatmul.f32.gmra.mxu0 %v1703
  %v1767 = vpop.f32.mrf.mxu0
  %v1768 = vadd.f32 0.0, %v1767
  %1769 = vmatmul.f32.gmra.mxu0 %v1706
  %v1770 = vpop.f32.mrf.mxu0
  %v1771 = vadd.f32 0.0, %v1770
  %1772 = vmatmul.f32.gmra.mxu0 %v1709
  %v1773 = vpop.f32.mrf.mxu0
  %v1774 = vadd.f32 0.0, %v1773
  %1775 = vmatmul.f32.gmra.mxu0 %v1712
  %v1776 = vpop.f32.mrf.mxu0
  %v1777 = vadd.f32 0.0, %v1776
  %1778 = vmatmul.f32.gmra.mxu0 %v1715
  %v1779 = vpop.f32.mrf.mxu0
  %v1780 = vadd.f32 0.0, %v1779
  %1781 = vmatmul.f32.gmra.mxu0 %v1718
  %v1782 = vpop.f32.mrf.mxu0
  %v1783 = vadd.f32 0.0, %v1782
  %1784 = vmatmul.f32.gmra.mxu0 %v1721
  %v1785 = vpop.f32.mrf.mxu0
  %v1786 = vadd.f32 0.0, %v1785
  %1787 = vmatmul.f32.gmra.mxu0 %v1724
  %v1788 = vpop.f32.mrf.mxu0
  %v1789 = vadd.f32 0.0, %v1788
  %1790 = vmatmul.f32.gmra.mxu0 %v1727
  %v1791 = vpop.f32.mrf.mxu0
  %v1792 = vadd.f32 0.0, %v1791
  %1793 = vmatmul.f32.gmra.mxu0 %v1730
  %v1794 = vpop.f32.mrf.mxu0
  %v1795 = vadd.f32 0.0, %v1794
  %1796 = vmatmul.f32.gmra.mxu0 %v1733
  %v1797 = vpop.f32.mrf.mxu0
  %v1798 = vadd.f32 0.0, %v1797
  %1799 = vmatmul.f32.gmra.mxu0 %v1736
  %v1800 = vpop.f32.mrf.mxu0
  %v1801 = vadd.f32 0.0, %v1800
  %1802 = vdwg.mxu0
  %v1803 = vadd.f32 %v1599, %v1756
  %v1804 = vadd.f32 %v1600, %v1759
  %v1805 = vadd.f32 %v1601, %v1762
  %v1806 = vadd.f32 %v1602, %v1765
  %v1807 = vadd.f32 %v1603, %v1768
  %v1808 = vadd.f32 %v1604, %v1771
  %v1809 = vadd.f32 %v1605, %v1774
  %v1810 = vadd.f32 %v1606, %v1777
  %v1811 = vadd.f32 %v1607, %v1780
  %v1812 = vadd.f32 %v1608, %v1783
  %v1813 = vadd.f32 %v1609, %v1786
  %v1814 = vadd.f32 %v1610, %v1789
  %v1815 = vadd.f32 %v1611, %v1792
  %v1816 = vadd.f32 %v1612, %v1795
  %v1817 = vadd.f32 %v1613, %v1798
  %v1818 = vadd.f32 %v1614, %v1801
  %s1819 = scalar_lea.vmem %s11, 768
  %v1820 = vld [vmem:[%s1819] sm:$0xff]
  %v1821 = vld [vmem:[%s1819 + $0x8] sm:$0xff]
  %v1822 = vld [vmem:[%s1819 + $0x10] sm:$0xff]
  %v1823 = vld [vmem:[%s1819 + $0x18] sm:$0xff]
  %v1824 = vld [vmem:[%s1819 + $0x20] sm:$0xff]
  %v1825 = vld [vmem:[%s1819 + $0x28] sm:$0xff]
  %v1826 = vld [vmem:[%s1819 + $0x30] sm:$0xff]
  %v1827 = vld [vmem:[%s1819 + $0x38] sm:$0xff]
  %v1828 = vld [vmem:[%s1819 + $0x40] sm:$0xff]
  %v1829 = vld [vmem:[%s1819 + $0x48] sm:$0xff]
  %v1830 = vld [vmem:[%s1819 + $0x50] sm:$0xff]
  %v1831 = vld [vmem:[%s1819 + $0x58] sm:$0xff]
  %v1832 = vld [vmem:[%s1819 + $0x60] sm:$0xff]
  %v1833 = vld [vmem:[%s1819 + $0x68] sm:$0xff]
  %v1834 = vld [vmem:[%s1819 + $0x70] sm:$0xff]
  %v1835 = vld [vmem:[%s1819 + $0x78] sm:$0xff]
  %1836 = vmatpush.msra.mxu0 %v1835
  %1837 = vmatpush.msra.mxu0 %v1834
  %1838 = vmatpush.msra.mxu0 %v1833
  %1839 = vmatpush.msra.mxu0 %v1832
  %1840 = vmatpush.msra.mxu0 %v1831
  %1841 = vmatpush.msra.mxu0 %v1830
  %1842 = vmatpush.msra.mxu0 %v1829
  %1843 = vmatpush.msra.mxu0 %v1828
  %1844 = vmatpush.msra.mxu0 %v1827
  %1845 = vmatpush.msra.mxu0 %v1826
  %1846 = vmatpush.msra.mxu0 %v1825
  %1847 = vmatpush.msra.mxu0 %v1824
  %1848 = vmatpush.msra.mxu0 %v1823
  %1849 = vmatpush.msra.mxu0 %v1822
  %1850 = vmatpush.msra.mxu0 %v1821
  %1851 = vmatpush.msra.mxu0 %v1820
  %1852 = vmatmul.f32.gmra.mxu0 %v572
  %v1853 = vpop.f32.mrf.mxu0
  %v1854 = vadd.f32 0.0, %v1853
  %1855 = vmatmul.f32.gmra.mxu0 %v573
  %v1856 = vpop.f32.mrf.mxu0
  %v1857 = vadd.f32 0.0, %v1856
  %1858 = vmatmul.f32.gmra.mxu0 %v574
  %v1859 = vpop.f32.mrf.mxu0
  %v1860 = vadd.f32 0.0, %v1859
  %1861 = vmatmul.f32.gmra.mxu0 %v575
  %v1862 = vpop.f32.mrf.mxu0
  %v1863 = vadd.f32 0.0, %v1862
  %1864 = vmatmul.f32.gmra.mxu0 %v576
  %v1865 = vpop.f32.mrf.mxu0
  %v1866 = vadd.f32 0.0, %v1865
  %1867 = vmatmul.f32.gmra.mxu0 %v577
  %v1868 = vpop.f32.mrf.mxu0
  %v1869 = vadd.f32 0.0, %v1868
  %1870 = vmatmul.f32.gmra.mxu0 %v578
  %v1871 = vpop.f32.mrf.mxu0
  %v1872 = vadd.f32 0.0, %v1871
  %1873 = vmatmul.f32.gmra.mxu0 %v579
  %v1874 = vpop.f32.mrf.mxu0
  %v1875 = vadd.f32 0.0, %v1874
  %1876 = vdwg.mxu0
  %s1877 = scalar_lea.vmem %s12, 768
  %v1878 = vld [vmem:[%s1877] sm:$0xff]
  %v1879 = vld [vmem:[%s1877 + $0x8] sm:$0xff]
  %v1880 = vld [vmem:[%s1877 + $0x10] sm:$0xff]
  %v1881 = vld [vmem:[%s1877 + $0x18] sm:$0xff]
  %v1882 = vld [vmem:[%s1877 + $0x20] sm:$0xff]
  %v1883 = vld [vmem:[%s1877 + $0x28] sm:$0xff]
  %v1884 = vld [vmem:[%s1877 + $0x30] sm:$0xff]
  %v1885 = vld [vmem:[%s1877 + $0x38] sm:$0xff]
  %v1886 = vld [vmem:[%s1877 + $0x40] sm:$0xff]
  %v1887 = vld [vmem:[%s1877 + $0x48] sm:$0xff]
  %v1888 = vld [vmem:[%s1877 + $0x50] sm:$0xff]
  %v1889 = vld [vmem:[%s1877 + $0x58] sm:$0xff]
  %v1890 = vld [vmem:[%s1877 + $0x60] sm:$0xff]
  %v1891 = vld [vmem:[%s1877 + $0x68] sm:$0xff]
  %v1892 = vld [vmem:[%s1877 + $0x70] sm:$0xff]
  %v1893 = vld [vmem:[%s1877 + $0x78] sm:$0xff]
  %v1895 = vsel %vm669, %v1878, 0
  %v1898 = vsel %vm669, %v1879, 0
  %v1901 = vsel %vm669, %v1880, 0
  %v1904 = vsel %vm669, %v1881, 0
  %v1907 = vsel %vm669, %v1882, 0
  %v1910 = vsel %vm669, %v1883, 0
  %v1913 = vsel %vm669, %v1884, 0
  %v1916 = vsel %vm669, %v1885, 0
  %v1919 = vsel %vm669, %v1886, 0
  %v1922 = vsel %vm669, %v1887, 0
  %v1925 = vsel %vm669, %v1888, 0
  %v1928 = vsel %vm669, %v1889, 0
  %v1931 = vsel %vm669, %v1890, 0
  %v1934 = vsel %vm669, %v1891, 0
  %v1937 = vsel %vm669, %v1892, 0
  %v1940 = vsel %vm669, %v1893, 0
  %1942 = vmatpush.msra.mxu0 0.0
  %1943 = vmatpush.msra.mxu0 0.0
  %1944 = vmatpush.msra.mxu0 0.0
  %1945 = vmatpush.msra.mxu0 0.0
  %1946 = vmatpush.msra.mxu0 0.0
  %1947 = vmatpush.msra.mxu0 0.0
  %1948 = vmatpush.msra.mxu0 0.0
  %1949 = vmatpush.msra.mxu0 0.0
  %1950 = vmatpush.msra.mxu0 %v1875
  %1951 = vmatpush.msra.mxu0 %v1872
  %1952 = vmatpush.msra.mxu0 %v1869
  %1953 = vmatpush.msra.mxu0 %v1866
  %1954 = vmatpush.msra.mxu0 %v1863
  %1955 = vmatpush.msra.mxu0 %v1860
  %1956 = vmatpush.msra.mxu0 %v1857
  %1957 = vmatpush.msra.mxu0 %v1854
  %1958 = vmatmul.f32.gmra.mxu0 %v1895
  %v1959 = vpop.f32.mrf.mxu0
  %v1960 = vadd.f32 0.0, %v1959
  %1961 = vmatmul.f32.gmra.mxu0 %v1898
  %v1962 = vpop.f32.mrf.mxu0
  %v1963 = vadd.f32 0.0, %v1962
  %1964 = vmatmul.f32.gmra.mxu0 %v1901
  %v1965 = vpop.f32.mrf.mxu0
  %v1966 = vadd.f32 0.0, %v1965
  %1967 = vmatmul.f32.gmra.mxu0 %v1904
  %v1968 = vpop.f32.mrf.mxu0
  %v1969 = vadd.f32 0.0, %v1968
  %1970 = vmatmul.f32.gmra.mxu0 %v1907
  %v1971 = vpop.f32.mrf.mxu0
  %v1972 = vadd.f32 0.0, %v1971
  %1973 = vmatmul.f32.gmra.mxu0 %v1910
  %v1974 = vpop.f32.mrf.mxu0
  %v1975 = vadd.f32 0.0, %v1974
  %1976 = vmatmul.f32.gmra.mxu0 %v1913
  %v1977 = vpop.f32.mrf.mxu0
  %v1978 = vadd.f32 0.0, %v1977
  %1979 = vmatmul.f32.gmra.mxu0 %v1916
  %v1980 = vpop.f32.mrf.mxu0
  %v1981 = vadd.f32 0.0, %v1980
  %1982 = vmatmul.f32.gmra.mxu0 %v1919
  %v1983 = vpop.f32.mrf.mxu0
  %v1984 = vadd.f32 0.0, %v1983
  %1985 = vmatmul.f32.gmra.mxu0 %v1922
  %v1986 = vpop.f32.mrf.mxu0
  %v1987 = vadd.f32 0.0, %v1986
  %1988 = vmatmul.f32.gmra.mxu0 %v1925
  %v1989 = vpop.f32.mrf.mxu0
  %v1990 = vadd.f32 0.0, %v1989
  %1991 = vmatmul.f32.gmra.mxu0 %v1928
  %v1992 = vpop.f32.mrf.mxu0
  %v1993 = vadd.f32 0.0, %v1992
  %1994 = vmatmul.f32.gmra.mxu0 %v1931
  %v1995 = vpop.f32.mrf.mxu0
  %v1996 = vadd.f32 0.0, %v1995
  %1997 = vmatmul.f32.gmra.mxu0 %v1934
  %v1998 = vpop.f32.mrf.mxu0
  %v1999 = vadd.f32 0.0, %v1998
  %2000 = vmatmul.f32.gmra.mxu0 %v1937
  %v2001 = vpop.f32.mrf.mxu0
  %v2002 = vadd.f32 0.0, %v2001
  %2003 = vmatmul.f32.gmra.mxu0 %v1940
  %v2004 = vpop.f32.mrf.mxu0
  %v2005 = vadd.f32 0.0, %v2004
  %2006 = vdwg.mxu0
  %v2007 = vadd.f32 %v1803, %v1960
  %v2008 = vadd.f32 %v1804, %v1963
  %v2009 = vadd.f32 %v1805, %v1966
  %v2010 = vadd.f32 %v1806, %v1969
  %v2011 = vadd.f32 %v1807, %v1972
  %v2012 = vadd.f32 %v1808, %v1975
  %v2013 = vadd.f32 %v1809, %v1978
  %v2014 = vadd.f32 %v1810, %v1981
  %v2015 = vadd.f32 %v1811, %v1984
  %v2016 = vadd.f32 %v1812, %v1987
  %v2017 = vadd.f32 %v1813, %v1990
  %v2018 = vadd.f32 %v1814, %v1993
  %v2019 = vadd.f32 %v1815, %v1996
  %v2020 = vadd.f32 %v1816, %v1999
  %v2021 = vadd.f32 %v1817, %v2002
  %v2022 = vadd.f32 %v1818, %v2005
  %s2023 = scalar_lea.vmem %s11, 896
  %v2024 = vld [vmem:[%s2023] sm:$0xff]
  %v2025 = vld [vmem:[%s2023 + $0x8] sm:$0xff]
  %v2026 = vld [vmem:[%s2023 + $0x10] sm:$0xff]
  %v2027 = vld [vmem:[%s2023 + $0x18] sm:$0xff]
  %v2028 = vld [vmem:[%s2023 + $0x20] sm:$0xff]
  %v2029 = vld [vmem:[%s2023 + $0x28] sm:$0xff]
  %v2030 = vld [vmem:[%s2023 + $0x30] sm:$0xff]
  %v2031 = vld [vmem:[%s2023 + $0x38] sm:$0xff]
  %v2032 = vld [vmem:[%s2023 + $0x40] sm:$0xff]
  %v2033 = vld [vmem:[%s2023 + $0x48] sm:$0xff]
  %v2034 = vld [vmem:[%s2023 + $0x50] sm:$0xff]
  %v2035 = vld [vmem:[%s2023 + $0x58] sm:$0xff]
  %v2036 = vld [vmem:[%s2023 + $0x60] sm:$0xff]
  %v2037 = vld [vmem:[%s2023 + $0x68] sm:$0xff]
  %v2038 = vld [vmem:[%s2023 + $0x70] sm:$0xff]
  %v2039 = vld [vmem:[%s2023 + $0x78] sm:$0xff]
  %2040 = vmatpush.msra.mxu0 %v2039
  %2041 = vmatpush.msra.mxu0 %v2038
  %2042 = vmatpush.msra.mxu0 %v2037
  %2043 = vmatpush.msra.mxu0 %v2036
  %2044 = vmatpush.msra.mxu0 %v2035
  %2045 = vmatpush.msra.mxu0 %v2034
  %2046 = vmatpush.msra.mxu0 %v2033
  %2047 = vmatpush.msra.mxu0 %v2032
  %2048 = vmatpush.msra.mxu0 %v2031
  %2049 = vmatpush.msra.mxu0 %v2030
  %2050 = vmatpush.msra.mxu0 %v2029
  %2051 = vmatpush.msra.mxu0 %v2028
  %2052 = vmatpush.msra.mxu0 %v2027
  %2053 = vmatpush.msra.mxu0 %v2026
  %2054 = vmatpush.msra.mxu0 %v2025
  %2055 = vmatpush.msra.mxu0 %v2024
  %2056 = vmatmul.f32.gmra.mxu0 %v572
  %v2057 = vpop.f32.mrf.mxu0
  %v2058 = vadd.f32 0.0, %v2057
  %2059 = vmatmul.f32.gmra.mxu0 %v573
  %v2060 = vpop.f32.mrf.mxu0
  %v2061 = vadd.f32 0.0, %v2060
  %2062 = vmatmul.f32.gmra.mxu0 %v574
  %v2063 = vpop.f32.mrf.mxu0
  %v2064 = vadd.f32 0.0, %v2063
  %2065 = vmatmul.f32.gmra.mxu0 %v575
  %v2066 = vpop.f32.mrf.mxu0
  %v2067 = vadd.f32 0.0, %v2066
  %2068 = vmatmul.f32.gmra.mxu0 %v576
  %v2069 = vpop.f32.mrf.mxu0
  %v2070 = vadd.f32 0.0, %v2069
  %2071 = vmatmul.f32.gmra.mxu0 %v577
  %v2072 = vpop.f32.mrf.mxu0
  %v2073 = vadd.f32 0.0, %v2072
  %2074 = vmatmul.f32.gmra.mxu0 %v578
  %v2075 = vpop.f32.mrf.mxu0
  %v2076 = vadd.f32 0.0, %v2075
  %2077 = vmatmul.f32.gmra.mxu0 %v579
  %v2078 = vpop.f32.mrf.mxu0
  %v2079 = vadd.f32 0.0, %v2078
  %2080 = vdwg.mxu0
  %s2081 = scalar_lea.vmem %s12, 896
  %v2082 = vld [vmem:[%s2081] sm:$0xff]
  %v2083 = vld [vmem:[%s2081 + $0x8] sm:$0xff]
  %v2084 = vld [vmem:[%s2081 + $0x10] sm:$0xff]
  %v2085 = vld [vmem:[%s2081 + $0x18] sm:$0xff]
  %v2086 = vld [vmem:[%s2081 + $0x20] sm:$0xff]
  %v2087 = vld [vmem:[%s2081 + $0x28] sm:$0xff]
  %v2088 = vld [vmem:[%s2081 + $0x30] sm:$0xff]
  %v2089 = vld [vmem:[%s2081 + $0x38] sm:$0xff]
  %v2090 = vld [vmem:[%s2081 + $0x40] sm:$0xff]
  %v2091 = vld [vmem:[%s2081 + $0x48] sm:$0xff]
  %v2092 = vld [vmem:[%s2081 + $0x50] sm:$0xff]
  %v2093 = vld [vmem:[%s2081 + $0x58] sm:$0xff]
  %v2094 = vld [vmem:[%s2081 + $0x60] sm:$0xff]
  %v2095 = vld [vmem:[%s2081 + $0x68] sm:$0xff]
  %v2096 = vld [vmem:[%s2081 + $0x70] sm:$0xff]
  %v2097 = vld [vmem:[%s2081 + $0x78] sm:$0xff]
  %v2099 = vsel %vm669, %v2082, 0
  %v2102 = vsel %vm669, %v2083, 0
  %v2105 = vsel %vm669, %v2084, 0
  %v2108 = vsel %vm669, %v2085, 0
  %v2111 = vsel %vm669, %v2086, 0
  %v2114 = vsel %vm669, %v2087, 0
  %v2117 = vsel %vm669, %v2088, 0
  %v2120 = vsel %vm669, %v2089, 0
  %v2123 = vsel %vm669, %v2090, 0
  %v2126 = vsel %vm669, %v2091, 0
  %v2129 = vsel %vm669, %v2092, 0
  %v2132 = vsel %vm669, %v2093, 0
  %v2135 = vsel %vm669, %v2094, 0
  %v2138 = vsel %vm669, %v2095, 0
  %v2141 = vsel %vm669, %v2096, 0
  %v2144 = vsel %vm669, %v2097, 0
  %2146 = vmatpush.msra.mxu0 0.0
  %2147 = vmatpush.msra.mxu0 0.0
  %2148 = vmatpush.msra.mxu0 0.0
  %2149 = vmatpush.msra.mxu0 0.0
  %2150 = vmatpush.msra.mxu0 0.0
  %2151 = vmatpush.msra.mxu0 0.0
  %2152 = vmatpush.msra.mxu0 0.0
  %2153 = vmatpush.msra.mxu0 0.0
  %2154 = vmatpush.msra.mxu0 %v2079
  %2155 = vmatpush.msra.mxu0 %v2076
  %2156 = vmatpush.msra.mxu0 %v2073
  %2157 = vmatpush.msra.mxu0 %v2070
  %2158 = vmatpush.msra.mxu0 %v2067
  %2159 = vmatpush.msra.mxu0 %v2064
  %2160 = vmatpush.msra.mxu0 %v2061
  %2161 = vmatpush.msra.mxu0 %v2058
  %2162 = vmatmul.f32.gmra.mxu0 %v2099
  %v2163 = vpop.f32.mrf.mxu0
  %v2164 = vadd.f32 0.0, %v2163
  %2165 = vmatmul.f32.gmra.mxu0 %v2102
  %v2166 = vpop.f32.mrf.mxu0
  %v2167 = vadd.f32 0.0, %v2166
  %2168 = vmatmul.f32.gmra.mxu0 %v2105
  %v2169 = vpop.f32.mrf.mxu0
  %v2170 = vadd.f32 0.0, %v2169
  %2171 = vmatmul.f32.gmra.mxu0 %v2108
  %v2172 = vpop.f32.mrf.mxu0
  %v2173 = vadd.f32 0.0, %v2172
  %2174 = vmatmul.f32.gmra.mxu0 %v2111
  %v2175 = vpop.f32.mrf.mxu0
  %v2176 = vadd.f32 0.0, %v2175
  %2177 = vmatmul.f32.gmra.mxu0 %v2114
  %v2178 = vpop.f32.mrf.mxu0
  %v2179 = vadd.f32 0.0, %v2178
  %2180 = vmatmul.f32.gmra.mxu0 %v2117
  %v2181 = vpop.f32.mrf.mxu0
  %v2182 = vadd.f32 0.0, %v2181
  %2183 = vmatmul.f32.gmra.mxu0 %v2120
  %v2184 = vpop.f32.mrf.mxu0
  %v2185 = vadd.f32 0.0, %v2184
  %2186 = vmatmul.f32.gmra.mxu0 %v2123
  %v2187 = vpop.f32.mrf.mxu0
  %v2188 = vadd.f32 0.0, %v2187
  %2189 = vmatmul.f32.gmra.mxu0 %v2126
  %v2190 = vpop.f32.mrf.mxu0
  %v2191 = vadd.f32 0.0, %v2190
  %2192 = vmatmul.f32.gmra.mxu0 %v2129
  %v2193 = vpop.f32.mrf.mxu0
  %v2194 = vadd.f32 0.0, %v2193
  %2195 = vmatmul.f32.gmra.mxu0 %v2132
  %v2196 = vpop.f32.mrf.mxu0
  %v2197 = vadd.f32 0.0, %v2196
  %2198 = vmatmul.f32.gmra.mxu0 %v2135
  %v2199 = vpop.f32.mrf.mxu0
  %v2200 = vadd.f32 0.0, %v2199
  %2201 = vmatmul.f32.gmra.mxu0 %v2138
  %v2202 = vpop.f32.mrf.mxu0
  %v2203 = vadd.f32 0.0, %v2202
  %2204 = vmatmul.f32.gmra.mxu0 %v2141
  %v2205 = vpop.f32.mrf.mxu0
  %v2206 = vadd.f32 0.0, %v2205
  %2207 = vmatmul.f32.gmra.mxu0 %v2144
  %v2208 = vpop.f32.mrf.mxu0
  %v2209 = vadd.f32 0.0, %v2208
  %2210 = vdwg.mxu0
  %v2211 = vadd.f32 %v2007, %v2164
  %v2212 = vadd.f32 %v2008, %v2167
  %v2213 = vadd.f32 %v2009, %v2170
  %v2214 = vadd.f32 %v2010, %v2173
  %v2215 = vadd.f32 %v2011, %v2176
  %v2216 = vadd.f32 %v2012, %v2179
  %v2217 = vadd.f32 %v2013, %v2182
  %v2218 = vadd.f32 %v2014, %v2185
  %v2219 = vadd.f32 %v2015, %v2188
  %v2220 = vadd.f32 %v2016, %v2191
  %v2221 = vadd.f32 %v2017, %v2194
  %v2222 = vadd.f32 %v2018, %v2197
  %v2223 = vadd.f32 %v2019, %v2200
  %v2224 = vadd.f32 %v2020, %v2203
  %v2225 = vadd.f32 %v2021, %v2206
  %v2226 = vadd.f32 %v2022, %v2209
  %s2227 = scalar_lea.vmem %s11, 1024
  %v2228 = vld [vmem:[%s2227] sm:$0xff]
  %v2229 = vld [vmem:[%s2227 + $0x8] sm:$0xff]
  %v2230 = vld [vmem:[%s2227 + $0x10] sm:$0xff]
  %v2231 = vld [vmem:[%s2227 + $0x18] sm:$0xff]
  %v2232 = vld [vmem:[%s2227 + $0x20] sm:$0xff]
  %v2233 = vld [vmem:[%s2227 + $0x28] sm:$0xff]
  %v2234 = vld [vmem:[%s2227 + $0x30] sm:$0xff]
  %v2235 = vld [vmem:[%s2227 + $0x38] sm:$0xff]
  %v2236 = vld [vmem:[%s2227 + $0x40] sm:$0xff]
  %v2237 = vld [vmem:[%s2227 + $0x48] sm:$0xff]
  %v2238 = vld [vmem:[%s2227 + $0x50] sm:$0xff]
  %v2239 = vld [vmem:[%s2227 + $0x58] sm:$0xff]
  %v2240 = vld [vmem:[%s2227 + $0x60] sm:$0xff]
  %v2241 = vld [vmem:[%s2227 + $0x68] sm:$0xff]
  %v2242 = vld [vmem:[%s2227 + $0x70] sm:$0xff]
  %v2243 = vld [vmem:[%s2227 + $0x78] sm:$0xff]
  %2244 = vmatpush.msra.mxu0 %v2243
  %2245 = vmatpush.msra.mxu0 %v2242
  %2246 = vmatpush.msra.mxu0 %v2241
  %2247 = vmatpush.msra.mxu0 %v2240
  %2248 = vmatpush.msra.mxu0 %v2239
  %2249 = vmatpush.msra.mxu0 %v2238
  %2250 = vmatpush.msra.mxu0 %v2237
  %2251 = vmatpush.msra.mxu0 %v2236
  %2252 = vmatpush.msra.mxu0 %v2235
  %2253 = vmatpush.msra.mxu0 %v2234
  %2254 = vmatpush.msra.mxu0 %v2233
  %2255 = vmatpush.msra.mxu0 %v2232
  %2256 = vmatpush.msra.mxu0 %v2231
  %2257 = vmatpush.msra.mxu0 %v2230
  %2258 = vmatpush.msra.mxu0 %v2229
  %2259 = vmatpush.msra.mxu0 %v2228
  %2260 = vmatmul.f32.gmra.mxu0 %v572
  %v2261 = vpop.f32.mrf.mxu0
  %v2262 = vadd.f32 0.0, %v2261
  %2263 = vmatmul.f32.gmra.mxu0 %v573
  %v2264 = vpop.f32.mrf.mxu0
  %v2265 = vadd.f32 0.0, %v2264
  %2266 = vmatmul.f32.gmra.mxu0 %v574
  %v2267 = vpop.f32.mrf.mxu0
  %v2268 = vadd.f32 0.0, %v2267
  %2269 = vmatmul.f32.gmra.mxu0 %v575
  %v2270 = vpop.f32.mrf.mxu0
  %v2271 = vadd.f32 0.0, %v2270
  %2272 = vmatmul.f32.gmra.mxu0 %v576
  %v2273 = vpop.f32.mrf.mxu0
  %v2274 = vadd.f32 0.0, %v2273
  %2275 = vmatmul.f32.gmra.mxu0 %v577
  %v2276 = vpop.f32.mrf.mxu0
  %v2277 = vadd.f32 0.0, %v2276
  %2278 = vmatmul.f32.gmra.mxu0 %v578
  %v2279 = vpop.f32.mrf.mxu0
  %v2280 = vadd.f32 0.0, %v2279
  %2281 = vmatmul.f32.gmra.mxu0 %v579
  %v2282 = vpop.f32.mrf.mxu0
  %v2283 = vadd.f32 0.0, %v2282
  %2284 = vdwg.mxu0
  %s2285 = scalar_lea.vmem %s12, 1024
  %v2286 = vld [vmem:[%s2285] sm:$0xff]
  %v2287 = vld [vmem:[%s2285 + $0x8] sm:$0xff]
  %v2288 = vld [vmem:[%s2285 + $0x10] sm:$0xff]
  %v2289 = vld [vmem:[%s2285 + $0x18] sm:$0xff]
  %v2290 = vld [vmem:[%s2285 + $0x20] sm:$0xff]
  %v2291 = vld [vmem:[%s2285 + $0x28] sm:$0xff]
  %v2292 = vld [vmem:[%s2285 + $0x30] sm:$0xff]
  %v2293 = vld [vmem:[%s2285 + $0x38] sm:$0xff]
  %v2294 = vld [vmem:[%s2285 + $0x40] sm:$0xff]
  %v2295 = vld [vmem:[%s2285 + $0x48] sm:$0xff]
  %v2296 = vld [vmem:[%s2285 + $0x50] sm:$0xff]
  %v2297 = vld [vmem:[%s2285 + $0x58] sm:$0xff]
  %v2298 = vld [vmem:[%s2285 + $0x60] sm:$0xff]
  %v2299 = vld [vmem:[%s2285 + $0x68] sm:$0xff]
  %v2300 = vld [vmem:[%s2285 + $0x70] sm:$0xff]
  %v2301 = vld [vmem:[%s2285 + $0x78] sm:$0xff]
  %v2303 = vsel %vm669, %v2286, 0
  %v2306 = vsel %vm669, %v2287, 0
  %v2309 = vsel %vm669, %v2288, 0
  %v2312 = vsel %vm669, %v2289, 0
  %v2315 = vsel %vm669, %v2290, 0
  %v2318 = vsel %vm669, %v2291, 0
  %v2321 = vsel %vm669, %v2292, 0
  %v2324 = vsel %vm669, %v2293, 0
  %v2327 = vsel %vm669, %v2294, 0
  %v2330 = vsel %vm669, %v2295, 0
  %v2333 = vsel %vm669, %v2296, 0
  %v2336 = vsel %vm669, %v2297, 0
  %v2339 = vsel %vm669, %v2298, 0
  %v2342 = vsel %vm669, %v2299, 0
  %v2345 = vsel %vm669, %v2300, 0
  %v2348 = vsel %vm669, %v2301, 0
  %2350 = vmatpush.msra.mxu0 0.0
  %2351 = vmatpush.msra.mxu0 0.0
  %2352 = vmatpush.msra.mxu0 0.0
  %2353 = vmatpush.msra.mxu0 0.0
  %2354 = vmatpush.msra.mxu0 0.0
  %2355 = vmatpush.msra.mxu0 0.0
  %2356 = vmatpush.msra.mxu0 0.0
  %2357 = vmatpush.msra.mxu0 0.0
  %2358 = vmatpush.msra.mxu0 %v2283
  %2359 = vmatpush.msra.mxu0 %v2280
  %2360 = vmatpush.msra.mxu0 %v2277
  %2361 = vmatpush.msra.mxu0 %v2274
  %2362 = vmatpush.msra.mxu0 %v2271
  %2363 = vmatpush.msra.mxu0 %v2268
  %2364 = vmatpush.msra.mxu0 %v2265
  %2365 = vmatpush.msra.mxu0 %v2262
  %2366 = vmatmul.f32.gmra.mxu0 %v2303
  %v2367 = vpop.f32.mrf.mxu0
  %v2368 = vadd.f32 0.0, %v2367
  %2369 = vmatmul.f32.gmra.mxu0 %v2306
  %v2370 = vpop.f32.mrf.mxu0
  %v2371 = vadd.f32 0.0, %v2370
  %2372 = vmatmul.f32.gmra.mxu0 %v2309
  %v2373 = vpop.f32.mrf.mxu0
  %v2374 = vadd.f32 0.0, %v2373
  %2375 = vmatmul.f32.gmra.mxu0 %v2312
  %v2376 = vpop.f32.mrf.mxu0
  %v2377 = vadd.f32 0.0, %v2376
  %2378 = vmatmul.f32.gmra.mxu0 %v2315
  %v2379 = vpop.f32.mrf.mxu0
  %v2380 = vadd.f32 0.0, %v2379
  %2381 = vmatmul.f32.gmra.mxu0 %v2318
  %v2382 = vpop.f32.mrf.mxu0
  %v2383 = vadd.f32 0.0, %v2382
  %2384 = vmatmul.f32.gmra.mxu0 %v2321
  %v2385 = vpop.f32.mrf.mxu0
  %v2386 = vadd.f32 0.0, %v2385
  %2387 = vmatmul.f32.gmra.mxu0 %v2324
  %v2388 = vpop.f32.mrf.mxu0
  %v2389 = vadd.f32 0.0, %v2388
  %2390 = vmatmul.f32.gmra.mxu0 %v2327
  %v2391 = vpop.f32.mrf.mxu0
  %v2392 = vadd.f32 0.0, %v2391
  %2393 = vmatmul.f32.gmra.mxu0 %v2330
  %v2394 = vpop.f32.mrf.mxu0
  %v2395 = vadd.f32 0.0, %v2394
  %2396 = vmatmul.f32.gmra.mxu0 %v2333
  %v2397 = vpop.f32.mrf.mxu0
  %v2398 = vadd.f32 0.0, %v2397
  %2399 = vmatmul.f32.gmra.mxu0 %v2336
  %v2400 = vpop.f32.mrf.mxu0
  %v2401 = vadd.f32 0.0, %v2400
  %2402 = vmatmul.f32.gmra.mxu0 %v2339
  %v2403 = vpop.f32.mrf.mxu0
  %v2404 = vadd.f32 0.0, %v2403
  %2405 = vmatmul.f32.gmra.mxu0 %v2342
  %v2406 = vpop.f32.mrf.mxu0
  %v2407 = vadd.f32 0.0, %v2406
  %2408 = vmatmul.f32.gmra.mxu0 %v2345
  %v2409 = vpop.f32.mrf.mxu0
  %v2410 = vadd.f32 0.0, %v2409
  %2411 = vmatmul.f32.gmra.mxu0 %v2348
  %v2412 = vpop.f32.mrf.mxu0
  %v2413 = vadd.f32 0.0, %v2412
  %2414 = vdwg.mxu0
  %v2415 = vadd.f32 %v2211, %v2368
  %v2416 = vadd.f32 %v2212, %v2371
  %v2417 = vadd.f32 %v2213, %v2374
  %v2418 = vadd.f32 %v2214, %v2377
  %v2419 = vadd.f32 %v2215, %v2380
  %v2420 = vadd.f32 %v2216, %v2383
  %v2421 = vadd.f32 %v2217, %v2386
  %v2422 = vadd.f32 %v2218, %v2389
  %v2423 = vadd.f32 %v2219, %v2392
  %v2424 = vadd.f32 %v2220, %v2395
  %v2425 = vadd.f32 %v2221, %v2398
  %v2426 = vadd.f32 %v2222, %v2401
  %v2427 = vadd.f32 %v2223, %v2404
  %v2428 = vadd.f32 %v2224, %v2407
  %v2429 = vadd.f32 %v2225, %v2410
  %v2430 = vadd.f32 %v2226, %v2413
  %s2431 = scalar_lea.vmem %s11, 1152
  %v2432 = vld [vmem:[%s2431] sm:$0xff]
  %v2433 = vld [vmem:[%s2431 + $0x8] sm:$0xff]
  %v2434 = vld [vmem:[%s2431 + $0x10] sm:$0xff]
  %v2435 = vld [vmem:[%s2431 + $0x18] sm:$0xff]
  %v2436 = vld [vmem:[%s2431 + $0x20] sm:$0xff]
  %v2437 = vld [vmem:[%s2431 + $0x28] sm:$0xff]
  %v2438 = vld [vmem:[%s2431 + $0x30] sm:$0xff]
  %v2439 = vld [vmem:[%s2431 + $0x38] sm:$0xff]
  %v2440 = vld [vmem:[%s2431 + $0x40] sm:$0xff]
  %v2441 = vld [vmem:[%s2431 + $0x48] sm:$0xff]
  %v2442 = vld [vmem:[%s2431 + $0x50] sm:$0xff]
  %v2443 = vld [vmem:[%s2431 + $0x58] sm:$0xff]
  %v2444 = vld [vmem:[%s2431 + $0x60] sm:$0xff]
  %v2445 = vld [vmem:[%s2431 + $0x68] sm:$0xff]
  %v2446 = vld [vmem:[%s2431 + $0x70] sm:$0xff]
  %v2447 = vld [vmem:[%s2431 + $0x78] sm:$0xff]
  %2448 = vmatpush.msra.mxu0 %v2447
  %2449 = vmatpush.msra.mxu0 %v2446
  %2450 = vmatpush.msra.mxu0 %v2445
  %2451 = vmatpush.msra.mxu0 %v2444
  %2452 = vmatpush.msra.mxu0 %v2443
  %2453 = vmatpush.msra.mxu0 %v2442
  %2454 = vmatpush.msra.mxu0 %v2441
  %2455 = vmatpush.msra.mxu0 %v2440
  %2456 = vmatpush.msra.mxu0 %v2439
  %2457 = vmatpush.msra.mxu0 %v2438
  %2458 = vmatpush.msra.mxu0 %v2437
  %2459 = vmatpush.msra.mxu0 %v2436
  %2460 = vmatpush.msra.mxu0 %v2435
  %2461 = vmatpush.msra.mxu0 %v2434
  %2462 = vmatpush.msra.mxu0 %v2433
  %2463 = vmatpush.msra.mxu0 %v2432
  %2464 = vmatmul.f32.gmra.mxu0 %v572
  %v2465 = vpop.f32.mrf.mxu0
  %v2466 = vadd.f32 0.0, %v2465
  %2467 = vmatmul.f32.gmra.mxu0 %v573
  %v2468 = vpop.f32.mrf.mxu0
  %v2469 = vadd.f32 0.0, %v2468
  %2470 = vmatmul.f32.gmra.mxu0 %v574
  %v2471 = vpop.f32.mrf.mxu0
  %v2472 = vadd.f32 0.0, %v2471
  %2473 = vmatmul.f32.gmra.mxu0 %v575
  %v2474 = vpop.f32.mrf.mxu0
  %v2475 = vadd.f32 0.0, %v2474
  %2476 = vmatmul.f32.gmra.mxu0 %v576
  %v2477 = vpop.f32.mrf.mxu0
  %v2478 = vadd.f32 0.0, %v2477
  %2479 = vmatmul.f32.gmra.mxu0 %v577
  %v2480 = vpop.f32.mrf.mxu0
  %v2481 = vadd.f32 0.0, %v2480
  %2482 = vmatmul.f32.gmra.mxu0 %v578
  %v2483 = vpop.f32.mrf.mxu0
  %v2484 = vadd.f32 0.0, %v2483
  %2485 = vmatmul.f32.gmra.mxu0 %v579
  %v2486 = vpop.f32.mrf.mxu0
  %v2487 = vadd.f32 0.0, %v2486
  %2488 = vdwg.mxu0
  %s2489 = scalar_lea.vmem %s12, 1152
  %v2490 = vld [vmem:[%s2489] sm:$0xff]
  %v2491 = vld [vmem:[%s2489 + $0x8] sm:$0xff]
  %v2492 = vld [vmem:[%s2489 + $0x10] sm:$0xff]
  %v2493 = vld [vmem:[%s2489 + $0x18] sm:$0xff]
  %v2494 = vld [vmem:[%s2489 + $0x20] sm:$0xff]
  %v2495 = vld [vmem:[%s2489 + $0x28] sm:$0xff]
  %v2496 = vld [vmem:[%s2489 + $0x30] sm:$0xff]
  %v2497 = vld [vmem:[%s2489 + $0x38] sm:$0xff]
  %v2498 = vld [vmem:[%s2489 + $0x40] sm:$0xff]
  %v2499 = vld [vmem:[%s2489 + $0x48] sm:$0xff]
  %v2500 = vld [vmem:[%s2489 + $0x50] sm:$0xff]
  %v2501 = vld [vmem:[%s2489 + $0x58] sm:$0xff]
  %v2502 = vld [vmem:[%s2489 + $0x60] sm:$0xff]
  %v2503 = vld [vmem:[%s2489 + $0x68] sm:$0xff]
  %v2504 = vld [vmem:[%s2489 + $0x70] sm:$0xff]
  %v2505 = vld [vmem:[%s2489 + $0x78] sm:$0xff]
  %v2507 = vsel %vm669, %v2490, 0
  %v2510 = vsel %vm669, %v2491, 0
  %v2513 = vsel %vm669, %v2492, 0
  %v2516 = vsel %vm669, %v2493, 0
  %v2519 = vsel %vm669, %v2494, 0
  %v2522 = vsel %vm669, %v2495, 0
  %v2525 = vsel %vm669, %v2496, 0
  %v2528 = vsel %vm669, %v2497, 0
  %v2531 = vsel %vm669, %v2498, 0
  %v2534 = vsel %vm669, %v2499, 0
  %v2537 = vsel %vm669, %v2500, 0
  %v2540 = vsel %vm669, %v2501, 0
  %v2543 = vsel %vm669, %v2502, 0
  %v2546 = vsel %vm669, %v2503, 0
  %v2549 = vsel %vm669, %v2504, 0
  %v2552 = vsel %vm669, %v2505, 0
  %2554 = vmatpush.msra.mxu0 0.0
  %2555 = vmatpush.msra.mxu0 0.0
  %2556 = vmatpush.msra.mxu0 0.0
  %2557 = vmatpush.msra.mxu0 0.0
  %2558 = vmatpush.msra.mxu0 0.0
  %2559 = vmatpush.msra.mxu0 0.0
  %2560 = vmatpush.msra.mxu0 0.0
  %2561 = vmatpush.msra.mxu0 0.0
  %2562 = vmatpush.msra.mxu0 %v2487
  %2563 = vmatpush.msra.mxu0 %v2484
  %2564 = vmatpush.msra.mxu0 %v2481
  %2565 = vmatpush.msra.mxu0 %v2478
  %2566 = vmatpush.msra.mxu0 %v2475
  %2567 = vmatpush.msra.mxu0 %v2472
  %2568 = vmatpush.msra.mxu0 %v2469
  %2569 = vmatpush.msra.mxu0 %v2466
  %2570 = vmatmul.f32.gmra.mxu0 %v2507
  %v2571 = vpop.f32.mrf.mxu0
  %v2572 = vadd.f32 0.0, %v2571
  %2573 = vmatmul.f32.gmra.mxu0 %v2510
  %v2574 = vpop.f32.mrf.mxu0
  %v2575 = vadd.f32 0.0, %v2574
  %2576 = vmatmul.f32.gmra.mxu0 %v2513
  %v2577 = vpop.f32.mrf.mxu0
  %v2578 = vadd.f32 0.0, %v2577
  %2579 = vmatmul.f32.gmra.mxu0 %v2516
  %v2580 = vpop.f32.mrf.mxu0
  %v2581 = vadd.f32 0.0, %v2580
  %2582 = vmatmul.f32.gmra.mxu0 %v2519
  %v2583 = vpop.f32.mrf.mxu0
  %v2584 = vadd.f32 0.0, %v2583
  %2585 = vmatmul.f32.gmra.mxu0 %v2522
  %v2586 = vpop.f32.mrf.mxu0
  %v2587 = vadd.f32 0.0, %v2586
  %2588 = vmatmul.f32.gmra.mxu0 %v2525
  %v2589 = vpop.f32.mrf.mxu0
  %v2590 = vadd.f32 0.0, %v2589
  %2591 = vmatmul.f32.gmra.mxu0 %v2528
  %v2592 = vpop.f32.mrf.mxu0
  %v2593 = vadd.f32 0.0, %v2592
  %2594 = vmatmul.f32.gmra.mxu0 %v2531
  %v2595 = vpop.f32.mrf.mxu0
  %v2596 = vadd.f32 0.0, %v2595
  %2597 = vmatmul.f32.gmra.mxu0 %v2534
  %v2598 = vpop.f32.mrf.mxu0
  %v2599 = vadd.f32 0.0, %v2598
  %2600 = vmatmul.f32.gmra.mxu0 %v2537
  %v2601 = vpop.f32.mrf.mxu0
  %v2602 = vadd.f32 0.0, %v2601
  %2603 = vmatmul.f32.gmra.mxu0 %v2540
  %v2604 = vpop.f32.mrf.mxu0
  %v2605 = vadd.f32 0.0, %v2604
  %2606 = vmatmul.f32.gmra.mxu0 %v2543
  %v2607 = vpop.f32.mrf.mxu0
  %v2608 = vadd.f32 0.0, %v2607
  %2609 = vmatmul.f32.gmra.mxu0 %v2546
  %v2610 = vpop.f32.mrf.mxu0
  %v2611 = vadd.f32 0.0, %v2610
  %2612 = vmatmul.f32.gmra.mxu0 %v2549
  %v2613 = vpop.f32.mrf.mxu0
  %v2614 = vadd.f32 0.0, %v2613
  %2615 = vmatmul.f32.gmra.mxu0 %v2552
  %v2616 = vpop.f32.mrf.mxu0
  %v2617 = vadd.f32 0.0, %v2616
  %2618 = vdwg.mxu0
  %v2619 = vadd.f32 %v2415, %v2572
  %v2620 = vadd.f32 %v2416, %v2575
  %v2621 = vadd.f32 %v2417, %v2578
  %v2622 = vadd.f32 %v2418, %v2581
  %v2623 = vadd.f32 %v2419, %v2584
  %v2624 = vadd.f32 %v2420, %v2587
  %v2625 = vadd.f32 %v2421, %v2590
  %v2626 = vadd.f32 %v2422, %v2593
  %v2627 = vadd.f32 %v2423, %v2596
  %v2628 = vadd.f32 %v2424, %v2599
  %v2629 = vadd.f32 %v2425, %v2602
  %v2630 = vadd.f32 %v2426, %v2605
  %v2631 = vadd.f32 %v2427, %v2608
  %v2632 = vadd.f32 %v2428, %v2611
  %v2633 = vadd.f32 %v2429, %v2614
  %v2634 = vadd.f32 %v2430, %v2617
  %s2635 = scalar_lea.vmem %s11, 1280
  %v2636 = vld [vmem:[%s2635] sm:$0xff]
  %v2637 = vld [vmem:[%s2635 + $0x8] sm:$0xff]
  %v2638 = vld [vmem:[%s2635 + $0x10] sm:$0xff]
  %v2639 = vld [vmem:[%s2635 + $0x18] sm:$0xff]
  %v2640 = vld [vmem:[%s2635 + $0x20] sm:$0xff]
  %v2641 = vld [vmem:[%s2635 + $0x28] sm:$0xff]
  %v2642 = vld [vmem:[%s2635 + $0x30] sm:$0xff]
  %v2643 = vld [vmem:[%s2635 + $0x38] sm:$0xff]
  %v2644 = vld [vmem:[%s2635 + $0x40] sm:$0xff]
  %v2645 = vld [vmem:[%s2635 + $0x48] sm:$0xff]
  %v2646 = vld [vmem:[%s2635 + $0x50] sm:$0xff]
  %v2647 = vld [vmem:[%s2635 + $0x58] sm:$0xff]
  %v2648 = vld [vmem:[%s2635 + $0x60] sm:$0xff]
  %v2649 = vld [vmem:[%s2635 + $0x68] sm:$0xff]
  %v2650 = vld [vmem:[%s2635 + $0x70] sm:$0xff]
  %v2651 = vld [vmem:[%s2635 + $0x78] sm:$0xff]
  %2652 = vmatpush.msra.mxu0 %v2651
  %2653 = vmatpush.msra.mxu0 %v2650
  %2654 = vmatpush.msra.mxu0 %v2649
  %2655 = vmatpush.msra.mxu0 %v2648
  %2656 = vmatpush.msra.mxu0 %v2647
  %2657 = vmatpush.msra.mxu0 %v2646
  %2658 = vmatpush.msra.mxu0 %v2645
  %2659 = vmatpush.msra.mxu0 %v2644
  %2660 = vmatpush.msra.mxu0 %v2643
  %2661 = vmatpush.msra.mxu0 %v2642
  %2662 = vmatpush.msra.mxu0 %v2641
  %2663 = vmatpush.msra.mxu0 %v2640
  %2664 = vmatpush.msra.mxu0 %v2639
  %2665 = vmatpush.msra.mxu0 %v2638
  %2666 = vmatpush.msra.mxu0 %v2637
  %2667 = vmatpush.msra.mxu0 %v2636
  %2668 = vmatmul.f32.gmra.mxu0 %v572
  %v2669 = vpop.f32.mrf.mxu0
  %v2670 = vadd.f32 0.0, %v2669
  %2671 = vmatmul.f32.gmra.mxu0 %v573
  %v2672 = vpop.f32.mrf.mxu0
  %v2673 = vadd.f32 0.0, %v2672
  %2674 = vmatmul.f32.gmra.mxu0 %v574
  %v2675 = vpop.f32.mrf.mxu0
  %v2676 = vadd.f32 0.0, %v2675
  %2677 = vmatmul.f32.gmra.mxu0 %v575
  %v2678 = vpop.f32.mrf.mxu0
  %v2679 = vadd.f32 0.0, %v2678
  %2680 = vmatmul.f32.gmra.mxu0 %v576
  %v2681 = vpop.f32.mrf.mxu0
  %v2682 = vadd.f32 0.0, %v2681
  %2683 = vmatmul.f32.gmra.mxu0 %v577
  %v2684 = vpop.f32.mrf.mxu0
  %v2685 = vadd.f32 0.0, %v2684
  %2686 = vmatmul.f32.gmra.mxu0 %v578
  %v2687 = vpop.f32.mrf.mxu0
  %v2688 = vadd.f32 0.0, %v2687
  %2689 = vmatmul.f32.gmra.mxu0 %v579
  %v2690 = vpop.f32.mrf.mxu0
  %v2691 = vadd.f32 0.0, %v2690
  %2692 = vdwg.mxu0
  %s2693 = scalar_lea.vmem %s12, 1280
  %v2694 = vld [vmem:[%s2693] sm:$0xff]
  %v2695 = vld [vmem:[%s2693 + $0x8] sm:$0xff]
  %v2696 = vld [vmem:[%s2693 + $0x10] sm:$0xff]
  %v2697 = vld [vmem:[%s2693 + $0x18] sm:$0xff]
  %v2698 = vld [vmem:[%s2693 + $0x20] sm:$0xff]
  %v2699 = vld [vmem:[%s2693 + $0x28] sm:$0xff]
  %v2700 = vld [vmem:[%s2693 + $0x30] sm:$0xff]
  %v2701 = vld [vmem:[%s2693 + $0x38] sm:$0xff]
  %v2702 = vld [vmem:[%s2693 + $0x40] sm:$0xff]
  %v2703 = vld [vmem:[%s2693 + $0x48] sm:$0xff]
  %v2704 = vld [vmem:[%s2693 + $0x50] sm:$0xff]
  %v2705 = vld [vmem:[%s2693 + $0x58] sm:$0xff]
  %v2706 = vld [vmem:[%s2693 + $0x60] sm:$0xff]
  %v2707 = vld [vmem:[%s2693 + $0x68] sm:$0xff]
  %v2708 = vld [vmem:[%s2693 + $0x70] sm:$0xff]
  %v2709 = vld [vmem:[%s2693 + $0x78] sm:$0xff]
  %v2711 = vsel %vm669, %v2694, 0
  %v2714 = vsel %vm669, %v2695, 0
  %v2717 = vsel %vm669, %v2696, 0
  %v2720 = vsel %vm669, %v2697, 0
  %v2723 = vsel %vm669, %v2698, 0
  %v2726 = vsel %vm669, %v2699, 0
  %v2729 = vsel %vm669, %v2700, 0
  %v2732 = vsel %vm669, %v2701, 0
  %v2735 = vsel %vm669, %v2702, 0
  %v2738 = vsel %vm669, %v2703, 0
  %v2741 = vsel %vm669, %v2704, 0
  %v2744 = vsel %vm669, %v2705, 0
  %v2747 = vsel %vm669, %v2706, 0
  %v2750 = vsel %vm669, %v2707, 0
  %v2753 = vsel %vm669, %v2708, 0
  %v2756 = vsel %vm669, %v2709, 0
  %2758 = vmatpush.msra.mxu0 0.0
  %2759 = vmatpush.msra.mxu0 0.0
  %2760 = vmatpush.msra.mxu0 0.0
  %2761 = vmatpush.msra.mxu0 0.0
  %2762 = vmatpush.msra.mxu0 0.0
  %2763 = vmatpush.msra.mxu0 0.0
  %2764 = vmatpush.msra.mxu0 0.0
  %2765 = vmatpush.msra.mxu0 0.0
  %2766 = vmatpush.msra.mxu0 %v2691
  %2767 = vmatpush.msra.mxu0 %v2688
  %2768 = vmatpush.msra.mxu0 %v2685
  %2769 = vmatpush.msra.mxu0 %v2682
  %2770 = vmatpush.msra.mxu0 %v2679
  %2771 = vmatpush.msra.mxu0 %v2676
  %2772 = vmatpush.msra.mxu0 %v2673
  %2773 = vmatpush.msra.mxu0 %v2670
  %2774 = vmatmul.f32.gmra.mxu0 %v2711
  %v2775 = vpop.f32.mrf.mxu0
  %v2776 = vadd.f32 0.0, %v2775
  %2777 = vmatmul.f32.gmra.mxu0 %v2714
  %v2778 = vpop.f32.mrf.mxu0
  %v2779 = vadd.f32 0.0, %v2778
  %2780 = vmatmul.f32.gmra.mxu0 %v2717
  %v2781 = vpop.f32.mrf.mxu0
  %v2782 = vadd.f32 0.0, %v2781
  %2783 = vmatmul.f32.gmra.mxu0 %v2720
  %v2784 = vpop.f32.mrf.mxu0
  %v2785 = vadd.f32 0.0, %v2784
  %2786 = vmatmul.f32.gmra.mxu0 %v2723
  %v2787 = vpop.f32.mrf.mxu0
  %v2788 = vadd.f32 0.0, %v2787
  %2789 = vmatmul.f32.gmra.mxu0 %v2726
  %v2790 = vpop.f32.mrf.mxu0
  %v2791 = vadd.f32 0.0, %v2790
  %2792 = vmatmul.f32.gmra.mxu0 %v2729
  %v2793 = vpop.f32.mrf.mxu0
  %v2794 = vadd.f32 0.0, %v2793
  %2795 = vmatmul.f32.gmra.mxu0 %v2732
  %v2796 = vpop.f32.mrf.mxu0
  %v2797 = vadd.f32 0.0, %v2796
  %2798 = vmatmul.f32.gmra.mxu0 %v2735
  %v2799 = vpop.f32.mrf.mxu0
  %v2800 = vadd.f32 0.0, %v2799
  %2801 = vmatmul.f32.gmra.mxu0 %v2738
  %v2802 = vpop.f32.mrf.mxu0
  %v2803 = vadd.f32 0.0, %v2802
  %2804 = vmatmul.f32.gmra.mxu0 %v2741
  %v2805 = vpop.f32.mrf.mxu0
  %v2806 = vadd.f32 0.0, %v2805
  %2807 = vmatmul.f32.gmra.mxu0 %v2744
  %v2808 = vpop.f32.mrf.mxu0
  %v2809 = vadd.f32 0.0, %v2808
  %2810 = vmatmul.f32.gmra.mxu0 %v2747
  %v2811 = vpop.f32.mrf.mxu0
  %v2812 = vadd.f32 0.0, %v2811
  %2813 = vmatmul.f32.gmra.mxu0 %v2750
  %v2814 = vpop.f32.mrf.mxu0
  %v2815 = vadd.f32 0.0, %v2814
  %2816 = vmatmul.f32.gmra.mxu0 %v2753
  %v2817 = vpop.f32.mrf.mxu0
  %v2818 = vadd.f32 0.0, %v2817
  %2819 = vmatmul.f32.gmra.mxu0 %v2756
  %v2820 = vpop.f32.mrf.mxu0
  %v2821 = vadd.f32 0.0, %v2820
  %2822 = vdwg.mxu0
  %v2823 = vadd.f32 %v2619, %v2776
  %v2824 = vadd.f32 %v2620, %v2779
  %v2825 = vadd.f32 %v2621, %v2782
  %v2826 = vadd.f32 %v2622, %v2785
  %v2827 = vadd.f32 %v2623, %v2788
  %v2828 = vadd.f32 %v2624, %v2791
  %v2829 = vadd.f32 %v2625, %v2794
  %v2830 = vadd.f32 %v2626, %v2797
  %v2831 = vadd.f32 %v2627, %v2800
  %v2832 = vadd.f32 %v2628, %v2803
  %v2833 = vadd.f32 %v2629, %v2806
  %v2834 = vadd.f32 %v2630, %v2809
  %v2835 = vadd.f32 %v2631, %v2812
  %v2836 = vadd.f32 %v2632, %v2815
  %v2837 = vadd.f32 %v2633, %v2818
  %v2838 = vadd.f32 %v2634, %v2821
  %s2839 = scalar_lea.vmem %s11, 1408
  %v2840 = vld [vmem:[%s2839] sm:$0xff]
  %v2841 = vld [vmem:[%s2839 + $0x8] sm:$0xff]
  %v2842 = vld [vmem:[%s2839 + $0x10] sm:$0xff]
  %v2843 = vld [vmem:[%s2839 + $0x18] sm:$0xff]
  %v2844 = vld [vmem:[%s2839 + $0x20] sm:$0xff]
  %v2845 = vld [vmem:[%s2839 + $0x28] sm:$0xff]
  %v2846 = vld [vmem:[%s2839 + $0x30] sm:$0xff]
  %v2847 = vld [vmem:[%s2839 + $0x38] sm:$0xff]
  %v2848 = vld [vmem:[%s2839 + $0x40] sm:$0xff]
  %v2849 = vld [vmem:[%s2839 + $0x48] sm:$0xff]
  %v2850 = vld [vmem:[%s2839 + $0x50] sm:$0xff]
  %v2851 = vld [vmem:[%s2839 + $0x58] sm:$0xff]
  %v2852 = vld [vmem:[%s2839 + $0x60] sm:$0xff]
  %v2853 = vld [vmem:[%s2839 + $0x68] sm:$0xff]
  %v2854 = vld [vmem:[%s2839 + $0x70] sm:$0xff]
  %v2855 = vld [vmem:[%s2839 + $0x78] sm:$0xff]
  %2856 = vmatpush.msra.mxu0 %v2855
  %2857 = vmatpush.msra.mxu0 %v2854
  %2858 = vmatpush.msra.mxu0 %v2853
  %2859 = vmatpush.msra.mxu0 %v2852
  %2860 = vmatpush.msra.mxu0 %v2851
  %2861 = vmatpush.msra.mxu0 %v2850
  %2862 = vmatpush.msra.mxu0 %v2849
  %2863 = vmatpush.msra.mxu0 %v2848
  %2864 = vmatpush.msra.mxu0 %v2847
  %2865 = vmatpush.msra.mxu0 %v2846
  %2866 = vmatpush.msra.mxu0 %v2845
  %2867 = vmatpush.msra.mxu0 %v2844
  %2868 = vmatpush.msra.mxu0 %v2843
  %2869 = vmatpush.msra.mxu0 %v2842
  %2870 = vmatpush.msra.mxu0 %v2841
  %2871 = vmatpush.msra.mxu0 %v2840
  %2872 = vmatmul.f32.gmra.mxu0 %v572
  %v2873 = vpop.f32.mrf.mxu0
  %v2874 = vadd.f32 0.0, %v2873
  %2875 = vmatmul.f32.gmra.mxu0 %v573
  %v2876 = vpop.f32.mrf.mxu0
  %v2877 = vadd.f32 0.0, %v2876
  %2878 = vmatmul.f32.gmra.mxu0 %v574
  %v2879 = vpop.f32.mrf.mxu0
  %v2880 = vadd.f32 0.0, %v2879
  %2881 = vmatmul.f32.gmra.mxu0 %v575
  %v2882 = vpop.f32.mrf.mxu0
  %v2883 = vadd.f32 0.0, %v2882
  %2884 = vmatmul.f32.gmra.mxu0 %v576
  %v2885 = vpop.f32.mrf.mxu0
  %v2886 = vadd.f32 0.0, %v2885
  %2887 = vmatmul.f32.gmra.mxu0 %v577
  %v2888 = vpop.f32.mrf.mxu0
  %v2889 = vadd.f32 0.0, %v2888
  %2890 = vmatmul.f32.gmra.mxu0 %v578
  %v2891 = vpop.f32.mrf.mxu0
  %v2892 = vadd.f32 0.0, %v2891
  %2893 = vmatmul.f32.gmra.mxu0 %v579
  %v2894 = vpop.f32.mrf.mxu0
  %v2895 = vadd.f32 0.0, %v2894
  %2896 = vdwg.mxu0
  %s2897 = scalar_lea.vmem %s12, 1408
  %v2898 = vld [vmem:[%s2897] sm:$0xff]
  %v2899 = vld [vmem:[%s2897 + $0x8] sm:$0xff]
  %v2900 = vld [vmem:[%s2897 + $0x10] sm:$0xff]
  %v2901 = vld [vmem:[%s2897 + $0x18] sm:$0xff]
  %v2902 = vld [vmem:[%s2897 + $0x20] sm:$0xff]
  %v2903 = vld [vmem:[%s2897 + $0x28] sm:$0xff]
  %v2904 = vld [vmem:[%s2897 + $0x30] sm:$0xff]
  %v2905 = vld [vmem:[%s2897 + $0x38] sm:$0xff]
  %v2906 = vld [vmem:[%s2897 + $0x40] sm:$0xff]
  %v2907 = vld [vmem:[%s2897 + $0x48] sm:$0xff]
  %v2908 = vld [vmem:[%s2897 + $0x50] sm:$0xff]
  %v2909 = vld [vmem:[%s2897 + $0x58] sm:$0xff]
  %v2910 = vld [vmem:[%s2897 + $0x60] sm:$0xff]
  %v2911 = vld [vmem:[%s2897 + $0x68] sm:$0xff]
  %v2912 = vld [vmem:[%s2897 + $0x70] sm:$0xff]
  %v2913 = vld [vmem:[%s2897 + $0x78] sm:$0xff]
  %v2915 = vsel %vm669, %v2898, 0
  %v2918 = vsel %vm669, %v2899, 0
  %v2921 = vsel %vm669, %v2900, 0
  %v2924 = vsel %vm669, %v2901, 0
  %v2927 = vsel %vm669, %v2902, 0
  %v2930 = vsel %vm669, %v2903, 0
  %v2933 = vsel %vm669, %v2904, 0
  %v2936 = vsel %vm669, %v2905, 0
  %v2939 = vsel %vm669, %v2906, 0
  %v2942 = vsel %vm669, %v2907, 0
  %v2945 = vsel %vm669, %v2908, 0
  %v2948 = vsel %vm669, %v2909, 0
  %v2951 = vsel %vm669, %v2910, 0
  %v2954 = vsel %vm669, %v2911, 0
  %v2957 = vsel %vm669, %v2912, 0
  %v2960 = vsel %vm669, %v2913, 0
  %2962 = vmatpush.msra.mxu0 0.0
  %2963 = vmatpush.msra.mxu0 0.0
  %2964 = vmatpush.msra.mxu0 0.0
  %2965 = vmatpush.msra.mxu0 0.0
  %2966 = vmatpush.msra.mxu0 0.0
  %2967 = vmatpush.msra.mxu0 0.0
  %2968 = vmatpush.msra.mxu0 0.0
  %2969 = vmatpush.msra.mxu0 0.0
  %2970 = vmatpush.msra.mxu0 %v2895
  %2971 = vmatpush.msra.mxu0 %v2892
  %2972 = vmatpush.msra.mxu0 %v2889
  %2973 = vmatpush.msra.mxu0 %v2886
  %2974 = vmatpush.msra.mxu0 %v2883
  %2975 = vmatpush.msra.mxu0 %v2880
  %2976 = vmatpush.msra.mxu0 %v2877
  %2977 = vmatpush.msra.mxu0 %v2874
  %2978 = vmatmul.f32.gmra.mxu0 %v2915
  %v2979 = vpop.f32.mrf.mxu0
  %v2980 = vadd.f32 0.0, %v2979
  %2981 = vmatmul.f32.gmra.mxu0 %v2918
  %v2982 = vpop.f32.mrf.mxu0
  %v2983 = vadd.f32 0.0, %v2982
  %2984 = vmatmul.f32.gmra.mxu0 %v2921
  %v2985 = vpop.f32.mrf.mxu0
  %v2986 = vadd.f32 0.0, %v2985
  %2987 = vmatmul.f32.gmra.mxu0 %v2924
  %v2988 = vpop.f32.mrf.mxu0
  %v2989 = vadd.f32 0.0, %v2988
  %2990 = vmatmul.f32.gmra.mxu0 %v2927
  %v2991 = vpop.f32.mrf.mxu0
  %v2992 = vadd.f32 0.0, %v2991
  %2993 = vmatmul.f32.gmra.mxu0 %v2930
  %v2994 = vpop.f32.mrf.mxu0
  %v2995 = vadd.f32 0.0, %v2994
  %2996 = vmatmul.f32.gmra.mxu0 %v2933
  %v2997 = vpop.f32.mrf.mxu0
  %v2998 = vadd.f32 0.0, %v2997
  %2999 = vmatmul.f32.gmra.mxu0 %v2936
  %v3000 = vpop.f32.mrf.mxu0
  %v3001 = vadd.f32 0.0, %v3000
  %3002 = vmatmul.f32.gmra.mxu0 %v2939
  %v3003 = vpop.f32.mrf.mxu0
  %v3004 = vadd.f32 0.0, %v3003
  %3005 = vmatmul.f32.gmra.mxu0 %v2942
  %v3006 = vpop.f32.mrf.mxu0
  %v3007 = vadd.f32 0.0, %v3006
  %3008 = vmatmul.f32.gmra.mxu0 %v2945
  %v3009 = vpop.f32.mrf.mxu0
  %v3010 = vadd.f32 0.0, %v3009
  %3011 = vmatmul.f32.gmra.mxu0 %v2948
  %v3012 = vpop.f32.mrf.mxu0
  %v3013 = vadd.f32 0.0, %v3012
  %3014 = vmatmul.f32.gmra.mxu0 %v2951
  %v3015 = vpop.f32.mrf.mxu0
  %v3016 = vadd.f32 0.0, %v3015
  %3017 = vmatmul.f32.gmra.mxu0 %v2954
  %v3018 = vpop.f32.mrf.mxu0
  %v3019 = vadd.f32 0.0, %v3018
  %3020 = vmatmul.f32.gmra.mxu0 %v2957
  %v3021 = vpop.f32.mrf.mxu0
  %v3022 = vadd.f32 0.0, %v3021
  %3023 = vmatmul.f32.gmra.mxu0 %v2960
  %v3024 = vpop.f32.mrf.mxu0
  %v3025 = vadd.f32 0.0, %v3024
  %3026 = vdwg.mxu0
  %v3027 = vadd.f32 %v2823, %v2980
  %v3028 = vadd.f32 %v2824, %v2983
  %v3029 = vadd.f32 %v2825, %v2986
  %v3030 = vadd.f32 %v2826, %v2989
  %v3031 = vadd.f32 %v2827, %v2992
  %v3032 = vadd.f32 %v2828, %v2995
  %v3033 = vadd.f32 %v2829, %v2998
  %v3034 = vadd.f32 %v2830, %v3001
  %v3035 = vadd.f32 %v2831, %v3004
  %v3036 = vadd.f32 %v2832, %v3007
  %v3037 = vadd.f32 %v2833, %v3010
  %v3038 = vadd.f32 %v2834, %v3013
  %v3039 = vadd.f32 %v2835, %v3016
  %v3040 = vadd.f32 %v2836, %v3019
  %v3041 = vadd.f32 %v2837, %v3022
  %v3042 = vadd.f32 %v2838, %v3025
  %s3043 = scalar_lea.vmem %s11, 1536
  %v3044 = vld [vmem:[%s3043] sm:$0xff]
  %v3045 = vld [vmem:[%s3043 + $0x8] sm:$0xff]
  %v3046 = vld [vmem:[%s3043 + $0x10] sm:$0xff]
  %v3047 = vld [vmem:[%s3043 + $0x18] sm:$0xff]
  %v3048 = vld [vmem:[%s3043 + $0x20] sm:$0xff]
  %v3049 = vld [vmem:[%s3043 + $0x28] sm:$0xff]
  %v3050 = vld [vmem:[%s3043 + $0x30] sm:$0xff]
  %v3051 = vld [vmem:[%s3043 + $0x38] sm:$0xff]
  %v3052 = vld [vmem:[%s3043 + $0x40] sm:$0xff]
  %v3053 = vld [vmem:[%s3043 + $0x48] sm:$0xff]
  %v3054 = vld [vmem:[%s3043 + $0x50] sm:$0xff]
  %v3055 = vld [vmem:[%s3043 + $0x58] sm:$0xff]
  %v3056 = vld [vmem:[%s3043 + $0x60] sm:$0xff]
  %v3057 = vld [vmem:[%s3043 + $0x68] sm:$0xff]
  %v3058 = vld [vmem:[%s3043 + $0x70] sm:$0xff]
  %v3059 = vld [vmem:[%s3043 + $0x78] sm:$0xff]
  %3060 = vmatpush.msra.mxu0 %v3059
  %3061 = vmatpush.msra.mxu0 %v3058
  %3062 = vmatpush.msra.mxu0 %v3057
  %3063 = vmatpush.msra.mxu0 %v3056
  %3064 = vmatpush.msra.mxu0 %v3055
  %3065 = vmatpush.msra.mxu0 %v3054
  %3066 = vmatpush.msra.mxu0 %v3053
  %3067 = vmatpush.msra.mxu0 %v3052
  %3068 = vmatpush.msra.mxu0 %v3051
  %3069 = vmatpush.msra.mxu0 %v3050
  %3070 = vmatpush.msra.mxu0 %v3049
  %3071 = vmatpush.msra.mxu0 %v3048
  %3072 = vmatpush.msra.mxu0 %v3047
  %3073 = vmatpush.msra.mxu0 %v3046
  %3074 = vmatpush.msra.mxu0 %v3045
  %3075 = vmatpush.msra.mxu0 %v3044
  %3076 = vmatmul.f32.gmra.mxu0 %v572
  %v3077 = vpop.f32.mrf.mxu0
  %v3078 = vadd.f32 0.0, %v3077
  %3079 = vmatmul.f32.gmra.mxu0 %v573
  %v3080 = vpop.f32.mrf.mxu0
  %v3081 = vadd.f32 0.0, %v3080
  %3082 = vmatmul.f32.gmra.mxu0 %v574
  %v3083 = vpop.f32.mrf.mxu0
  %v3084 = vadd.f32 0.0, %v3083
  %3085 = vmatmul.f32.gmra.mxu0 %v575
  %v3086 = vpop.f32.mrf.mxu0
  %v3087 = vadd.f32 0.0, %v3086
  %3088 = vmatmul.f32.gmra.mxu0 %v576
  %v3089 = vpop.f32.mrf.mxu0
  %v3090 = vadd.f32 0.0, %v3089
  %3091 = vmatmul.f32.gmra.mxu0 %v577
  %v3092 = vpop.f32.mrf.mxu0
  %v3093 = vadd.f32 0.0, %v3092
  %3094 = vmatmul.f32.gmra.mxu0 %v578
  %v3095 = vpop.f32.mrf.mxu0
  %v3096 = vadd.f32 0.0, %v3095
  %3097 = vmatmul.f32.gmra.mxu0 %v579
  %v3098 = vpop.f32.mrf.mxu0
  %v3099 = vadd.f32 0.0, %v3098
  %3100 = vdwg.mxu0
  %s3101 = scalar_lea.vmem %s12, 1536
  %v3102 = vld [vmem:[%s3101] sm:$0xff]
  %v3103 = vld [vmem:[%s3101 + $0x8] sm:$0xff]
  %v3104 = vld [vmem:[%s3101 + $0x10] sm:$0xff]
  %v3105 = vld [vmem:[%s3101 + $0x18] sm:$0xff]
  %v3106 = vld [vmem:[%s3101 + $0x20] sm:$0xff]
  %v3107 = vld [vmem:[%s3101 + $0x28] sm:$0xff]
  %v3108 = vld [vmem:[%s3101 + $0x30] sm:$0xff]
  %v3109 = vld [vmem:[%s3101 + $0x38] sm:$0xff]
  %v3110 = vld [vmem:[%s3101 + $0x40] sm:$0xff]
  %v3111 = vld [vmem:[%s3101 + $0x48] sm:$0xff]
  %v3112 = vld [vmem:[%s3101 + $0x50] sm:$0xff]
  %v3113 = vld [vmem:[%s3101 + $0x58] sm:$0xff]
  %v3114 = vld [vmem:[%s3101 + $0x60] sm:$0xff]
  %v3115 = vld [vmem:[%s3101 + $0x68] sm:$0xff]
  %v3116 = vld [vmem:[%s3101 + $0x70] sm:$0xff]
  %v3117 = vld [vmem:[%s3101 + $0x78] sm:$0xff]
  %v3119 = vsel %vm669, %v3102, 0
  %v3122 = vsel %vm669, %v3103, 0
  %v3125 = vsel %vm669, %v3104, 0
  %v3128 = vsel %vm669, %v3105, 0
  %v3131 = vsel %vm669, %v3106, 0
  %v3134 = vsel %vm669, %v3107, 0
  %v3137 = vsel %vm669, %v3108, 0
  %v3140 = vsel %vm669, %v3109, 0
  %v3143 = vsel %vm669, %v3110, 0
  %v3146 = vsel %vm669, %v3111, 0
  %v3149 = vsel %vm669, %v3112, 0
  %v3152 = vsel %vm669, %v3113, 0
  %v3155 = vsel %vm669, %v3114, 0
  %v3158 = vsel %vm669, %v3115, 0
  %v3161 = vsel %vm669, %v3116, 0
  %v3164 = vsel %vm669, %v3117, 0
  %3166 = vmatpush.msra.mxu0 0.0
  %3167 = vmatpush.msra.mxu0 0.0
  %3168 = vmatpush.msra.mxu0 0.0
  %3169 = vmatpush.msra.mxu0 0.0
  %3170 = vmatpush.msra.mxu0 0.0
  %3171 = vmatpush.msra.mxu0 0.0
  %3172 = vmatpush.msra.mxu0 0.0
  %3173 = vmatpush.msra.mxu0 0.0
  %3174 = vmatpush.msra.mxu0 %v3099
  %3175 = vmatpush.msra.mxu0 %v3096
  %3176 = vmatpush.msra.mxu0 %v3093
  %3177 = vmatpush.msra.mxu0 %v3090
  %3178 = vmatpush.msra.mxu0 %v3087
  %3179 = vmatpush.msra.mxu0 %v3084
  %3180 = vmatpush.msra.mxu0 %v3081
  %3181 = vmatpush.msra.mxu0 %v3078
  %3182 = vmatmul.f32.gmra.mxu0 %v3119
  %v3183 = vpop.f32.mrf.mxu0
  %v3184 = vadd.f32 0.0, %v3183
  %3185 = vmatmul.f32.gmra.mxu0 %v3122
  %v3186 = vpop.f32.mrf.mxu0
  %v3187 = vadd.f32 0.0, %v3186
  %3188 = vmatmul.f32.gmra.mxu0 %v3125
  %v3189 = vpop.f32.mrf.mxu0
  %v3190 = vadd.f32 0.0, %v3189
  %3191 = vmatmul.f32.gmra.mxu0 %v3128
  %v3192 = vpop.f32.mrf.mxu0
  %v3193 = vadd.f32 0.0, %v3192
  %3194 = vmatmul.f32.gmra.mxu0 %v3131
  %v3195 = vpop.f32.mrf.mxu0
  %v3196 = vadd.f32 0.0, %v3195
  %3197 = vmatmul.f32.gmra.mxu0 %v3134
  %v3198 = vpop.f32.mrf.mxu0
  %v3199 = vadd.f32 0.0, %v3198
  %3200 = vmatmul.f32.gmra.mxu0 %v3137
  %v3201 = vpop.f32.mrf.mxu0
  %v3202 = vadd.f32 0.0, %v3201
  %3203 = vmatmul.f32.gmra.mxu0 %v3140
  %v3204 = vpop.f32.mrf.mxu0
  %v3205 = vadd.f32 0.0, %v3204
  %3206 = vmatmul.f32.gmra.mxu0 %v3143
  %v3207 = vpop.f32.mrf.mxu0
  %v3208 = vadd.f32 0.0, %v3207
  %3209 = vmatmul.f32.gmra.mxu0 %v3146
  %v3210 = vpop.f32.mrf.mxu0
  %v3211 = vadd.f32 0.0, %v3210
  %3212 = vmatmul.f32.gmra.mxu0 %v3149
  %v3213 = vpop.f32.mrf.mxu0
  %v3214 = vadd.f32 0.0, %v3213
  %3215 = vmatmul.f32.gmra.mxu0 %v3152
  %v3216 = vpop.f32.mrf.mxu0
  %v3217 = vadd.f32 0.0, %v3216
  %3218 = vmatmul.f32.gmra.mxu0 %v3155
  %v3219 = vpop.f32.mrf.mxu0
  %v3220 = vadd.f32 0.0, %v3219
  %3221 = vmatmul.f32.gmra.mxu0 %v3158
  %v3222 = vpop.f32.mrf.mxu0
  %v3223 = vadd.f32 0.0, %v3222
  %3224 = vmatmul.f32.gmra.mxu0 %v3161
  %v3225 = vpop.f32.mrf.mxu0
  %v3226 = vadd.f32 0.0, %v3225
  %3227 = vmatmul.f32.gmra.mxu0 %v3164
  %v3228 = vpop.f32.mrf.mxu0
  %v3229 = vadd.f32 0.0, %v3228
  %3230 = vdwg.mxu0
  %v3231 = vadd.f32 %v3027, %v3184
  %v3232 = vadd.f32 %v3028, %v3187
  %v3233 = vadd.f32 %v3029, %v3190
  %v3234 = vadd.f32 %v3030, %v3193
  %v3235 = vadd.f32 %v3031, %v3196
  %v3236 = vadd.f32 %v3032, %v3199
  %v3237 = vadd.f32 %v3033, %v3202
  %v3238 = vadd.f32 %v3034, %v3205
  %v3239 = vadd.f32 %v3035, %v3208
  %v3240 = vadd.f32 %v3036, %v3211
  %v3241 = vadd.f32 %v3037, %v3214
  %v3242 = vadd.f32 %v3038, %v3217
  %v3243 = vadd.f32 %v3039, %v3220
  %v3244 = vadd.f32 %v3040, %v3223
  %v3245 = vadd.f32 %v3041, %v3226
  %v3246 = vadd.f32 %v3042, %v3229
  %s3247 = scalar_lea.vmem %s11, 1664
  %v3248 = vld [vmem:[%s3247] sm:$0xff]
  %v3249 = vld [vmem:[%s3247 + $0x8] sm:$0xff]
  %v3250 = vld [vmem:[%s3247 + $0x10] sm:$0xff]
  %v3251 = vld [vmem:[%s3247 + $0x18] sm:$0xff]
  %v3252 = vld [vmem:[%s3247 + $0x20] sm:$0xff]
  %v3253 = vld [vmem:[%s3247 + $0x28] sm:$0xff]
  %v3254 = vld [vmem:[%s3247 + $0x30] sm:$0xff]
  %v3255 = vld [vmem:[%s3247 + $0x38] sm:$0xff]
  %v3256 = vld [vmem:[%s3247 + $0x40] sm:$0xff]
  %v3257 = vld [vmem:[%s3247 + $0x48] sm:$0xff]
  %v3258 = vld [vmem:[%s3247 + $0x50] sm:$0xff]
  %v3259 = vld [vmem:[%s3247 + $0x58] sm:$0xff]
  %v3260 = vld [vmem:[%s3247 + $0x60] sm:$0xff]
  %v3261 = vld [vmem:[%s3247 + $0x68] sm:$0xff]
  %v3262 = vld [vmem:[%s3247 + $0x70] sm:$0xff]
  %v3263 = vld [vmem:[%s3247 + $0x78] sm:$0xff]
  %3264 = vmatpush.msra.mxu0 %v3263
  %3265 = vmatpush.msra.mxu0 %v3262
  %3266 = vmatpush.msra.mxu0 %v3261
  %3267 = vmatpush.msra.mxu0 %v3260
  %3268 = vmatpush.msra.mxu0 %v3259
  %3269 = vmatpush.msra.mxu0 %v3258
  %3270 = vmatpush.msra.mxu0 %v3257
  %3271 = vmatpush.msra.mxu0 %v3256
  %3272 = vmatpush.msra.mxu0 %v3255
  %3273 = vmatpush.msra.mxu0 %v3254
  %3274 = vmatpush.msra.mxu0 %v3253
  %3275 = vmatpush.msra.mxu0 %v3252
  %3276 = vmatpush.msra.mxu0 %v3251
  %3277 = vmatpush.msra.mxu0 %v3250
  %3278 = vmatpush.msra.mxu0 %v3249
  %3279 = vmatpush.msra.mxu0 %v3248
  %3280 = vmatmul.f32.gmra.mxu0 %v572
  %v3281 = vpop.f32.mrf.mxu0
  %v3282 = vadd.f32 0.0, %v3281
  %3283 = vmatmul.f32.gmra.mxu0 %v573
  %v3284 = vpop.f32.mrf.mxu0
  %v3285 = vadd.f32 0.0, %v3284
  %3286 = vmatmul.f32.gmra.mxu0 %v574
  %v3287 = vpop.f32.mrf.mxu0
  %v3288 = vadd.f32 0.0, %v3287
  %3289 = vmatmul.f32.gmra.mxu0 %v575
  %v3290 = vpop.f32.mrf.mxu0
  %v3291 = vadd.f32 0.0, %v3290
  %3292 = vmatmul.f32.gmra.mxu0 %v576
  %v3293 = vpop.f32.mrf.mxu0
  %v3294 = vadd.f32 0.0, %v3293
  %3295 = vmatmul.f32.gmra.mxu0 %v577
  %v3296 = vpop.f32.mrf.mxu0
  %v3297 = vadd.f32 0.0, %v3296
  %3298 = vmatmul.f32.gmra.mxu0 %v578
  %v3299 = vpop.f32.mrf.mxu0
  %v3300 = vadd.f32 0.0, %v3299
  %3301 = vmatmul.f32.gmra.mxu0 %v579
  %v3302 = vpop.f32.mrf.mxu0
  %v3303 = vadd.f32 0.0, %v3302
  %3304 = vdwg.mxu0
  %s3305 = scalar_lea.vmem %s12, 1664
  %v3306 = vld [vmem:[%s3305] sm:$0xff]
  %v3307 = vld [vmem:[%s3305 + $0x8] sm:$0xff]
  %v3308 = vld [vmem:[%s3305 + $0x10] sm:$0xff]
  %v3309 = vld [vmem:[%s3305 + $0x18] sm:$0xff]
  %v3310 = vld [vmem:[%s3305 + $0x20] sm:$0xff]
  %v3311 = vld [vmem:[%s3305 + $0x28] sm:$0xff]
  %v3312 = vld [vmem:[%s3305 + $0x30] sm:$0xff]
  %v3313 = vld [vmem:[%s3305 + $0x38] sm:$0xff]
  %v3314 = vld [vmem:[%s3305 + $0x40] sm:$0xff]
  %v3315 = vld [vmem:[%s3305 + $0x48] sm:$0xff]
  %v3316 = vld [vmem:[%s3305 + $0x50] sm:$0xff]
  %v3317 = vld [vmem:[%s3305 + $0x58] sm:$0xff]
  %v3318 = vld [vmem:[%s3305 + $0x60] sm:$0xff]
  %v3319 = vld [vmem:[%s3305 + $0x68] sm:$0xff]
  %v3320 = vld [vmem:[%s3305 + $0x70] sm:$0xff]
  %v3321 = vld [vmem:[%s3305 + $0x78] sm:$0xff]
  %v3323 = vsel %vm669, %v3306, 0
  %v3326 = vsel %vm669, %v3307, 0
  %v3329 = vsel %vm669, %v3308, 0
  %v3332 = vsel %vm669, %v3309, 0
  %v3335 = vsel %vm669, %v3310, 0
  %v3338 = vsel %vm669, %v3311, 0
  %v3341 = vsel %vm669, %v3312, 0
  %v3344 = vsel %vm669, %v3313, 0
  %v3347 = vsel %vm669, %v3314, 0
  %v3350 = vsel %vm669, %v3315, 0
  %v3353 = vsel %vm669, %v3316, 0
  %v3356 = vsel %vm669, %v3317, 0
  %v3359 = vsel %vm669, %v3318, 0
  %v3362 = vsel %vm669, %v3319, 0
  %v3365 = vsel %vm669, %v3320, 0
  %v3368 = vsel %vm669, %v3321, 0
  %3370 = vmatpush.msra.mxu0 0.0
  %3371 = vmatpush.msra.mxu0 0.0
  %3372 = vmatpush.msra.mxu0 0.0
  %3373 = vmatpush.msra.mxu0 0.0
  %3374 = vmatpush.msra.mxu0 0.0
  %3375 = vmatpush.msra.mxu0 0.0
  %3376 = vmatpush.msra.mxu0 0.0
  %3377 = vmatpush.msra.mxu0 0.0
  %3378 = vmatpush.msra.mxu0 %v3303
  %3379 = vmatpush.msra.mxu0 %v3300
  %3380 = vmatpush.msra.mxu0 %v3297
  %3381 = vmatpush.msra.mxu0 %v3294
  %3382 = vmatpush.msra.mxu0 %v3291
  %3383 = vmatpush.msra.mxu0 %v3288
  %3384 = vmatpush.msra.mxu0 %v3285
  %3385 = vmatpush.msra.mxu0 %v3282
  %3386 = vmatmul.f32.gmra.mxu0 %v3323
  %v3387 = vpop.f32.mrf.mxu0
  %v3388 = vadd.f32 0.0, %v3387
  %3389 = vmatmul.f32.gmra.mxu0 %v3326
  %v3390 = vpop.f32.mrf.mxu0
  %v3391 = vadd.f32 0.0, %v3390
  %3392 = vmatmul.f32.gmra.mxu0 %v3329
  %v3393 = vpop.f32.mrf.mxu0
  %v3394 = vadd.f32 0.0, %v3393
  %3395 = vmatmul.f32.gmra.mxu0 %v3332
  %v3396 = vpop.f32.mrf.mxu0
  %v3397 = vadd.f32 0.0, %v3396
  %3398 = vmatmul.f32.gmra.mxu0 %v3335
  %v3399 = vpop.f32.mrf.mxu0
  %v3400 = vadd.f32 0.0, %v3399
  %3401 = vmatmul.f32.gmra.mxu0 %v3338
  %v3402 = vpop.f32.mrf.mxu0
  %v3403 = vadd.f32 0.0, %v3402
  %3404 = vmatmul.f32.gmra.mxu0 %v3341
  %v3405 = vpop.f32.mrf.mxu0
  %v3406 = vadd.f32 0.0, %v3405
  %3407 = vmatmul.f32.gmra.mxu0 %v3344
  %v3408 = vpop.f32.mrf.mxu0
  %v3409 = vadd.f32 0.0, %v3408
  %3410 = vmatmul.f32.gmra.mxu0 %v3347
  %v3411 = vpop.f32.mrf.mxu0
  %v3412 = vadd.f32 0.0, %v3411
  %3413 = vmatmul.f32.gmra.mxu0 %v3350
  %v3414 = vpop.f32.mrf.mxu0
  %v3415 = vadd.f32 0.0, %v3414
  %3416 = vmatmul.f32.gmra.mxu0 %v3353
  %v3417 = vpop.f32.mrf.mxu0
  %v3418 = vadd.f32 0.0, %v3417
  %3419 = vmatmul.f32.gmra.mxu0 %v3356
  %v3420 = vpop.f32.mrf.mxu0
  %v3421 = vadd.f32 0.0, %v3420
  %3422 = vmatmul.f32.gmra.mxu0 %v3359
  %v3423 = vpop.f32.mrf.mxu0
  %v3424 = vadd.f32 0.0, %v3423
  %3425 = vmatmul.f32.gmra.mxu0 %v3362
  %v3426 = vpop.f32.mrf.mxu0
  %v3427 = vadd.f32 0.0, %v3426
  %3428 = vmatmul.f32.gmra.mxu0 %v3365
  %v3429 = vpop.f32.mrf.mxu0
  %v3430 = vadd.f32 0.0, %v3429
  %3431 = vmatmul.f32.gmra.mxu0 %v3368
  %v3432 = vpop.f32.mrf.mxu0
  %v3433 = vadd.f32 0.0, %v3432
  %3434 = vdwg.mxu0
  %v3435 = vadd.f32 %v3231, %v3388
  %v3436 = vadd.f32 %v3232, %v3391
  %v3437 = vadd.f32 %v3233, %v3394
  %v3438 = vadd.f32 %v3234, %v3397
  %v3439 = vadd.f32 %v3235, %v3400
  %v3440 = vadd.f32 %v3236, %v3403
  %v3441 = vadd.f32 %v3237, %v3406
  %v3442 = vadd.f32 %v3238, %v3409
  %v3443 = vadd.f32 %v3239, %v3412
  %v3444 = vadd.f32 %v3240, %v3415
  %v3445 = vadd.f32 %v3241, %v3418
  %v3446 = vadd.f32 %v3242, %v3421
  %v3447 = vadd.f32 %v3243, %v3424
  %v3448 = vadd.f32 %v3244, %v3427
  %v3449 = vadd.f32 %v3245, %v3430
  %v3450 = vadd.f32 %v3246, %v3433
  %s3451 = scalar_lea.vmem %s11, 1792
  %v3452 = vld [vmem:[%s3451] sm:$0xff]
  %v3453 = vld [vmem:[%s3451 + $0x8] sm:$0xff]
  %v3454 = vld [vmem:[%s3451 + $0x10] sm:$0xff]
  %v3455 = vld [vmem:[%s3451 + $0x18] sm:$0xff]
  %v3456 = vld [vmem:[%s3451 + $0x20] sm:$0xff]
  %v3457 = vld [vmem:[%s3451 + $0x28] sm:$0xff]
  %v3458 = vld [vmem:[%s3451 + $0x30] sm:$0xff]
  %v3459 = vld [vmem:[%s3451 + $0x38] sm:$0xff]
  %v3460 = vld [vmem:[%s3451 + $0x40] sm:$0xff]
  %v3461 = vld [vmem:[%s3451 + $0x48] sm:$0xff]
  %v3462 = vld [vmem:[%s3451 + $0x50] sm:$0xff]
  %v3463 = vld [vmem:[%s3451 + $0x58] sm:$0xff]
  %v3464 = vld [vmem:[%s3451 + $0x60] sm:$0xff]
  %v3465 = vld [vmem:[%s3451 + $0x68] sm:$0xff]
  %v3466 = vld [vmem:[%s3451 + $0x70] sm:$0xff]
  %v3467 = vld [vmem:[%s3451 + $0x78] sm:$0xff]
  %3468 = vmatpush.msra.mxu0 %v3467
  %3469 = vmatpush.msra.mxu0 %v3466
  %3470 = vmatpush.msra.mxu0 %v3465
  %3471 = vmatpush.msra.mxu0 %v3464
  %3472 = vmatpush.msra.mxu0 %v3463
  %3473 = vmatpush.msra.mxu0 %v3462
  %3474 = vmatpush.msra.mxu0 %v3461
  %3475 = vmatpush.msra.mxu0 %v3460
  %3476 = vmatpush.msra.mxu0 %v3459
  %3477 = vmatpush.msra.mxu0 %v3458
  %3478 = vmatpush.msra.mxu0 %v3457
  %3479 = vmatpush.msra.mxu0 %v3456
  %3480 = vmatpush.msra.mxu0 %v3455
  %3481 = vmatpush.msra.mxu0 %v3454
  %3482 = vmatpush.msra.mxu0 %v3453
  %3483 = vmatpush.msra.mxu0 %v3452
  %3484 = vmatmul.f32.gmra.mxu0 %v572
  %v3485 = vpop.f32.mrf.mxu0
  %v3486 = vadd.f32 0.0, %v3485
  %3487 = vmatmul.f32.gmra.mxu0 %v573
  %v3488 = vpop.f32.mrf.mxu0
  %v3489 = vadd.f32 0.0, %v3488
  %3490 = vmatmul.f32.gmra.mxu0 %v574
  %v3491 = vpop.f32.mrf.mxu0
  %v3492 = vadd.f32 0.0, %v3491
  %3493 = vmatmul.f32.gmra.mxu0 %v575
  %v3494 = vpop.f32.mrf.mxu0
  %v3495 = vadd.f32 0.0, %v3494
  %3496 = vmatmul.f32.gmra.mxu0 %v576
  %v3497 = vpop.f32.mrf.mxu0
  %v3498 = vadd.f32 0.0, %v3497
  %3499 = vmatmul.f32.gmra.mxu0 %v577
  %v3500 = vpop.f32.mrf.mxu0
  %v3501 = vadd.f32 0.0, %v3500
  %3502 = vmatmul.f32.gmra.mxu0 %v578
  %v3503 = vpop.f32.mrf.mxu0
  %v3504 = vadd.f32 0.0, %v3503
  %3505 = vmatmul.f32.gmra.mxu0 %v579
  %v3506 = vpop.f32.mrf.mxu0
  %v3507 = vadd.f32 0.0, %v3506
  %3508 = vdwg.mxu0
  %s3509 = scalar_lea.vmem %s12, 1792
  %v3510 = vld [vmem:[%s3509] sm:$0xff]
  %v3511 = vld [vmem:[%s3509 + $0x8] sm:$0xff]
  %v3512 = vld [vmem:[%s3509 + $0x10] sm:$0xff]
  %v3513 = vld [vmem:[%s3509 + $0x18] sm:$0xff]
  %v3514 = vld [vmem:[%s3509 + $0x20] sm:$0xff]
  %v3515 = vld [vmem:[%s3509 + $0x28] sm:$0xff]
  %v3516 = vld [vmem:[%s3509 + $0x30] sm:$0xff]
  %v3517 = vld [vmem:[%s3509 + $0x38] sm:$0xff]
  %v3518 = vld [vmem:[%s3509 + $0x40] sm:$0xff]
  %v3519 = vld [vmem:[%s3509 + $0x48] sm:$0xff]
  %v3520 = vld [vmem:[%s3509 + $0x50] sm:$0xff]
  %v3521 = vld [vmem:[%s3509 + $0x58] sm:$0xff]
  %v3522 = vld [vmem:[%s3509 + $0x60] sm:$0xff]
  %v3523 = vld [vmem:[%s3509 + $0x68] sm:$0xff]
  %v3524 = vld [vmem:[%s3509 + $0x70] sm:$0xff]
  %v3525 = vld [vmem:[%s3509 + $0x78] sm:$0xff]
  %v3527 = vsel %vm669, %v3510, 0
  %v3530 = vsel %vm669, %v3511, 0
  %v3533 = vsel %vm669, %v3512, 0
  %v3536 = vsel %vm669, %v3513, 0
  %v3539 = vsel %vm669, %v3514, 0
  %v3542 = vsel %vm669, %v3515, 0
  %v3545 = vsel %vm669, %v3516, 0
  %v3548 = vsel %vm669, %v3517, 0
  %v3551 = vsel %vm669, %v3518, 0
  %v3554 = vsel %vm669, %v3519, 0
  %v3557 = vsel %vm669, %v3520, 0
  %v3560 = vsel %vm669, %v3521, 0
  %v3563 = vsel %vm669, %v3522, 0
  %v3566 = vsel %vm669, %v3523, 0
  %v3569 = vsel %vm669, %v3524, 0
  %v3572 = vsel %vm669, %v3525, 0
  %3574 = vmatpush.msra.mxu0 0.0
  %3575 = vmatpush.msra.mxu0 0.0
  %3576 = vmatpush.msra.mxu0 0.0
  %3577 = vmatpush.msra.mxu0 0.0
  %3578 = vmatpush.msra.mxu0 0.0
  %3579 = vmatpush.msra.mxu0 0.0
  %3580 = vmatpush.msra.mxu0 0.0
  %3581 = vmatpush.msra.mxu0 0.0
  %3582 = vmatpush.msra.mxu0 %v3507
  %3583 = vmatpush.msra.mxu0 %v3504
  %3584 = vmatpush.msra.mxu0 %v3501
  %3585 = vmatpush.msra.mxu0 %v3498
  %3586 = vmatpush.msra.mxu0 %v3495
  %3587 = vmatpush.msra.mxu0 %v3492
  %3588 = vmatpush.msra.mxu0 %v3489
  %3589 = vmatpush.msra.mxu0 %v3486
  %3590 = vmatmul.f32.gmra.mxu0 %v3527
  %v3591 = vpop.f32.mrf.mxu0
  %v3592 = vadd.f32 0.0, %v3591
  %3593 = vmatmul.f32.gmra.mxu0 %v3530
  %v3594 = vpop.f32.mrf.mxu0
  %v3595 = vadd.f32 0.0, %v3594
  %3596 = vmatmul.f32.gmra.mxu0 %v3533
  %v3597 = vpop.f32.mrf.mxu0
  %v3598 = vadd.f32 0.0, %v3597
  %3599 = vmatmul.f32.gmra.mxu0 %v3536
  %v3600 = vpop.f32.mrf.mxu0
  %v3601 = vadd.f32 0.0, %v3600
  %3602 = vmatmul.f32.gmra.mxu0 %v3539
  %v3603 = vpop.f32.mrf.mxu0
  %v3604 = vadd.f32 0.0, %v3603
  %3605 = vmatmul.f32.gmra.mxu0 %v3542
  %v3606 = vpop.f32.mrf.mxu0
  %v3607 = vadd.f32 0.0, %v3606
  %3608 = vmatmul.f32.gmra.mxu0 %v3545
  %v3609 = vpop.f32.mrf.mxu0
  %v3610 = vadd.f32 0.0, %v3609
  %3611 = vmatmul.f32.gmra.mxu0 %v3548
  %v3612 = vpop.f32.mrf.mxu0
  %v3613 = vadd.f32 0.0, %v3612
  %3614 = vmatmul.f32.gmra.mxu0 %v3551
  %v3615 = vpop.f32.mrf.mxu0
  %v3616 = vadd.f32 0.0, %v3615
  %3617 = vmatmul.f32.gmra.mxu0 %v3554
  %v3618 = vpop.f32.mrf.mxu0
  %v3619 = vadd.f32 0.0, %v3618
  %3620 = vmatmul.f32.gmra.mxu0 %v3557
  %v3621 = vpop.f32.mrf.mxu0
  %v3622 = vadd.f32 0.0, %v3621
  %3623 = vmatmul.f32.gmra.mxu0 %v3560
  %v3624 = vpop.f32.mrf.mxu0
  %v3625 = vadd.f32 0.0, %v3624
  %3626 = vmatmul.f32.gmra.mxu0 %v3563
  %v3627 = vpop.f32.mrf.mxu0
  %v3628 = vadd.f32 0.0, %v3627
  %3629 = vmatmul.f32.gmra.mxu0 %v3566
  %v3630 = vpop.f32.mrf.mxu0
  %v3631 = vadd.f32 0.0, %v3630
  %3632 = vmatmul.f32.gmra.mxu0 %v3569
  %v3633 = vpop.f32.mrf.mxu0
  %v3634 = vadd.f32 0.0, %v3633
  %3635 = vmatmul.f32.gmra.mxu0 %v3572
  %v3636 = vpop.f32.mrf.mxu0
  %v3637 = vadd.f32 0.0, %v3636
  %3638 = vdwg.mxu0
  %v3639 = vadd.f32 %v3435, %v3592
  %v3640 = vadd.f32 %v3436, %v3595
  %v3641 = vadd.f32 %v3437, %v3598
  %v3642 = vadd.f32 %v3438, %v3601
  %v3643 = vadd.f32 %v3439, %v3604
  %v3644 = vadd.f32 %v3440, %v3607
  %v3645 = vadd.f32 %v3441, %v3610
  %v3646 = vadd.f32 %v3442, %v3613
  %v3647 = vadd.f32 %v3443, %v3616
  %v3648 = vadd.f32 %v3444, %v3619
  %v3649 = vadd.f32 %v3445, %v3622
  %v3650 = vadd.f32 %v3446, %v3625
  %v3651 = vadd.f32 %v3447, %v3628
  %v3652 = vadd.f32 %v3448, %v3631
  %v3653 = vadd.f32 %v3449, %v3634
  %v3654 = vadd.f32 %v3450, %v3637
  %s3655 = scalar_lea.vmem %s11, 1920
  %v3656 = vld [vmem:[%s3655] sm:$0xff]
  %v3657 = vld [vmem:[%s3655 + $0x8] sm:$0xff]
  %v3658 = vld [vmem:[%s3655 + $0x10] sm:$0xff]
  %v3659 = vld [vmem:[%s3655 + $0x18] sm:$0xff]
  %v3660 = vld [vmem:[%s3655 + $0x20] sm:$0xff]
  %v3661 = vld [vmem:[%s3655 + $0x28] sm:$0xff]
  %v3662 = vld [vmem:[%s3655 + $0x30] sm:$0xff]
  %v3663 = vld [vmem:[%s3655 + $0x38] sm:$0xff]
  %v3664 = vld [vmem:[%s3655 + $0x40] sm:$0xff]
  %v3665 = vld [vmem:[%s3655 + $0x48] sm:$0xff]
  %v3666 = vld [vmem:[%s3655 + $0x50] sm:$0xff]
  %v3667 = vld [vmem:[%s3655 + $0x58] sm:$0xff]
  %v3668 = vld [vmem:[%s3655 + $0x60] sm:$0xff]
  %v3669 = vld [vmem:[%s3655 + $0x68] sm:$0xff]
  %v3670 = vld [vmem:[%s3655 + $0x70] sm:$0xff]
  %v3671 = vld [vmem:[%s3655 + $0x78] sm:$0xff]
  %3672 = vmatpush.msra.mxu0 %v3671
  %3673 = vmatpush.msra.mxu0 %v3670
  %3674 = vmatpush.msra.mxu0 %v3669
  %3675 = vmatpush.msra.mxu0 %v3668
  %3676 = vmatpush.msra.mxu0 %v3667
  %3677 = vmatpush.msra.mxu0 %v3666
  %3678 = vmatpush.msra.mxu0 %v3665
  %3679 = vmatpush.msra.mxu0 %v3664
  %3680 = vmatpush.msra.mxu0 %v3663
  %3681 = vmatpush.msra.mxu0 %v3662
  %3682 = vmatpush.msra.mxu0 %v3661
  %3683 = vmatpush.msra.mxu0 %v3660
  %3684 = vmatpush.msra.mxu0 %v3659
  %3685 = vmatpush.msra.mxu0 %v3658
  %3686 = vmatpush.msra.mxu0 %v3657
  %3687 = vmatpush.msra.mxu0 %v3656
  %3688 = vmatmul.f32.gmra.mxu0 %v572
  %v3689 = vpop.f32.mrf.mxu0
  %v3690 = vadd.f32 0.0, %v3689
  %3691 = vmatmul.f32.gmra.mxu0 %v573
  %v3692 = vpop.f32.mrf.mxu0
  %v3693 = vadd.f32 0.0, %v3692
  %3694 = vmatmul.f32.gmra.mxu0 %v574
  %v3695 = vpop.f32.mrf.mxu0
  %v3696 = vadd.f32 0.0, %v3695
  %3697 = vmatmul.f32.gmra.mxu0 %v575
  %v3698 = vpop.f32.mrf.mxu0
  %v3699 = vadd.f32 0.0, %v3698
  %3700 = vmatmul.f32.gmra.mxu0 %v576
  %v3701 = vpop.f32.mrf.mxu0
  %v3702 = vadd.f32 0.0, %v3701
  %3703 = vmatmul.f32.gmra.mxu0 %v577
  %v3704 = vpop.f32.mrf.mxu0
  %v3705 = vadd.f32 0.0, %v3704
  %3706 = vmatmul.f32.gmra.mxu0 %v578
  %v3707 = vpop.f32.mrf.mxu0
  %v3708 = vadd.f32 0.0, %v3707
  %3709 = vmatmul.f32.gmra.mxu0 %v579
  %v3710 = vpop.f32.mrf.mxu0
  %v3711 = vadd.f32 0.0, %v3710
  %3712 = vdwg.mxu0
  %s3713 = scalar_lea.vmem %s12, 1920
  %v3714 = vld [vmem:[%s3713] sm:$0xff]
  %v3715 = vld [vmem:[%s3713 + $0x8] sm:$0xff]
  %v3716 = vld [vmem:[%s3713 + $0x10] sm:$0xff]
  %v3717 = vld [vmem:[%s3713 + $0x18] sm:$0xff]
  %v3718 = vld [vmem:[%s3713 + $0x20] sm:$0xff]
  %v3719 = vld [vmem:[%s3713 + $0x28] sm:$0xff]
  %v3720 = vld [vmem:[%s3713 + $0x30] sm:$0xff]
  %v3721 = vld [vmem:[%s3713 + $0x38] sm:$0xff]
  %v3722 = vld [vmem:[%s3713 + $0x40] sm:$0xff]
  %v3723 = vld [vmem:[%s3713 + $0x48] sm:$0xff]
  %v3724 = vld [vmem:[%s3713 + $0x50] sm:$0xff]
  %v3725 = vld [vmem:[%s3713 + $0x58] sm:$0xff]
  %v3726 = vld [vmem:[%s3713 + $0x60] sm:$0xff]
  %v3727 = vld [vmem:[%s3713 + $0x68] sm:$0xff]
  %v3728 = vld [vmem:[%s3713 + $0x70] sm:$0xff]
  %v3729 = vld [vmem:[%s3713 + $0x78] sm:$0xff]
  %v3731 = vsel %vm669, %v3714, 0
  %v3734 = vsel %vm669, %v3715, 0
  %v3737 = vsel %vm669, %v3716, 0
  %v3740 = vsel %vm669, %v3717, 0
  %v3743 = vsel %vm669, %v3718, 0
  %v3746 = vsel %vm669, %v3719, 0
  %v3749 = vsel %vm669, %v3720, 0
  %v3752 = vsel %vm669, %v3721, 0
  %v3755 = vsel %vm669, %v3722, 0
  %v3758 = vsel %vm669, %v3723, 0
  %v3761 = vsel %vm669, %v3724, 0
  %v3764 = vsel %vm669, %v3725, 0
  %v3767 = vsel %vm669, %v3726, 0
  %v3770 = vsel %vm669, %v3727, 0
  %v3773 = vsel %vm669, %v3728, 0
  %v3776 = vsel %vm669, %v3729, 0
  %3778 = vmatpush.msra.mxu0 0.0
  %3779 = vmatpush.msra.mxu0 0.0
  %3780 = vmatpush.msra.mxu0 0.0
  %3781 = vmatpush.msra.mxu0 0.0
  %3782 = vmatpush.msra.mxu0 0.0
  %3783 = vmatpush.msra.mxu0 0.0
  %3784 = vmatpush.msra.mxu0 0.0
  %3785 = vmatpush.msra.mxu0 0.0
  %3786 = vmatpush.msra.mxu0 %v3711
  %3787 = vmatpush.msra.mxu0 %v3708
  %3788 = vmatpush.msra.mxu0 %v3705
  %3789 = vmatpush.msra.mxu0 %v3702
  %3790 = vmatpush.msra.mxu0 %v3699
  %3791 = vmatpush.msra.mxu0 %v3696
  %3792 = vmatpush.msra.mxu0 %v3693
  %3793 = vmatpush.msra.mxu0 %v3690
  %3794 = vmatmul.f32.gmra.mxu0 %v3731
  %v3795 = vpop.f32.mrf.mxu0
  %v3796 = vadd.f32 0.0, %v3795
  %3797 = vmatmul.f32.gmra.mxu0 %v3734
  %v3798 = vpop.f32.mrf.mxu0
  %v3799 = vadd.f32 0.0, %v3798
  %3800 = vmatmul.f32.gmra.mxu0 %v3737
  %v3801 = vpop.f32.mrf.mxu0
  %v3802 = vadd.f32 0.0, %v3801
  %3803 = vmatmul.f32.gmra.mxu0 %v3740
  %v3804 = vpop.f32.mrf.mxu0
  %v3805 = vadd.f32 0.0, %v3804
  %3806 = vmatmul.f32.gmra.mxu0 %v3743
  %v3807 = vpop.f32.mrf.mxu0
  %v3808 = vadd.f32 0.0, %v3807
  %3809 = vmatmul.f32.gmra.mxu0 %v3746
  %v3810 = vpop.f32.mrf.mxu0
  %v3811 = vadd.f32 0.0, %v3810
  %3812 = vmatmul.f32.gmra.mxu0 %v3749
  %v3813 = vpop.f32.mrf.mxu0
  %v3814 = vadd.f32 0.0, %v3813
  %3815 = vmatmul.f32.gmra.mxu0 %v3752
  %v3816 = vpop.f32.mrf.mxu0
  %v3817 = vadd.f32 0.0, %v3816
  %3818 = vmatmul.f32.gmra.mxu0 %v3755
  %v3819 = vpop.f32.mrf.mxu0
  %v3820 = vadd.f32 0.0, %v3819
  %3821 = vmatmul.f32.gmra.mxu0 %v3758
  %v3822 = vpop.f32.mrf.mxu0
  %v3823 = vadd.f32 0.0, %v3822
  %3824 = vmatmul.f32.gmra.mxu0 %v3761
  %v3825 = vpop.f32.mrf.mxu0
  %v3826 = vadd.f32 0.0, %v3825
  %3827 = vmatmul.f32.gmra.mxu0 %v3764
  %v3828 = vpop.f32.mrf.mxu0
  %v3829 = vadd.f32 0.0, %v3828
  %3830 = vmatmul.f32.gmra.mxu0 %v3767
  %v3831 = vpop.f32.mrf.mxu0
  %v3832 = vadd.f32 0.0, %v3831
  %3833 = vmatmul.f32.gmra.mxu0 %v3770
  %v3834 = vpop.f32.mrf.mxu0
  %v3835 = vadd.f32 0.0, %v3834
  %3836 = vmatmul.f32.gmra.mxu0 %v3773
  %v3837 = vpop.f32.mrf.mxu0
  %v3838 = vadd.f32 0.0, %v3837
  %3839 = vmatmul.f32.gmra.mxu0 %v3776
  %v3840 = vpop.f32.mrf.mxu0
  %v3841 = vadd.f32 0.0, %v3840
  %3842 = vdwg.mxu0
  %v3843 = vadd.f32 %v3639, %v3796
  %v3844 = vadd.f32 %v3640, %v3799
  %v3845 = vadd.f32 %v3641, %v3802
  %v3846 = vadd.f32 %v3642, %v3805
  %v3847 = vadd.f32 %v3643, %v3808
  %v3848 = vadd.f32 %v3644, %v3811
  %v3849 = vadd.f32 %v3645, %v3814
  %v3850 = vadd.f32 %v3646, %v3817
  %v3851 = vadd.f32 %v3647, %v3820
  %v3852 = vadd.f32 %v3648, %v3823
  %v3853 = vadd.f32 %v3649, %v3826
  %v3854 = vadd.f32 %v3650, %v3829
  %v3855 = vadd.f32 %v3651, %v3832
  %v3856 = vadd.f32 %v3652, %v3835
  %v3857 = vadd.f32 %v3653, %v3838
  %v3858 = vadd.f32 %v3654, %v3841
  %v3859 = vmax.f32 %v3843, 0.0
  %v3860 = vmax.f32 %v3844, 0.0
  %v3861 = vmax.f32 %v3845, 0.0
  %v3862 = vmax.f32 %v3846, 0.0
  %v3863 = vmax.f32 %v3847, 0.0
  %v3864 = vmax.f32 %v3848, 0.0
  %v3865 = vmax.f32 %v3849, 0.0
  %v3866 = vmax.f32 %v3850, 0.0
  %v3867 = vmax.f32 %v3851, 0.0
  %v3868 = vmax.f32 %v3852, 0.0
  %v3869 = vmax.f32 %v3853, 0.0
  %v3870 = vmax.f32 %v3854, 0.0
  %v3871 = vmax.f32 %v3855, 0.0
  %v3872 = vmax.f32 %v3856, 0.0
  %v3873 = vmax.f32 %v3857, 0.0
  %v3874 = vmax.f32 %v3858, 0.0
  %v3875 = vld [vmem:[%s15] sm:$0xff]
  %v3876 = vld [vmem:[%s15 + $0x8] sm:$0xff]
  %v3877 = vld [vmem:[%s15 + $0x10] sm:$0xff]
  %v3878 = vld [vmem:[%s15 + $0x18] sm:$0xff]
  %v3879 = vld [vmem:[%s14] sm:$0xff]
  %v3880 = vld [vmem:[%s14 + $0x8] sm:$0xff]
  %v3881 = vld [vmem:[%s14 + $0x10] sm:$0xff]
  %v3882 = vld [vmem:[%s14 + $0x18] sm:$0xff]
  %3883 = vmatpush.msra.mxu0 %v3874
  %3884 = vmatpush.msra.mxu0 %v3873
  %3885 = vmatpush.msra.mxu0 %v3872
  %3886 = vmatpush.msra.mxu0 %v3871
  %3887 = vmatpush.msra.mxu0 %v3870
  %3888 = vmatpush.msra.mxu0 %v3869
  %3889 = vmatpush.msra.mxu0 %v3868
  %3890 = vmatpush.msra.mxu0 %v3867
  %3891 = vmatpush.msra.mxu0 %v3866
  %3892 = vmatpush.msra.mxu0 %v3865
  %3893 = vmatpush.msra.mxu0 %v3864
  %3894 = vmatpush.msra.mxu0 %v3863
  %3895 = vmatpush.msra.mxu0 %v3862
  %3896 = vmatpush.msra.mxu0 %v3861
  %3897 = vmatpush.msra.mxu0 %v3860
  %3898 = vmatpush.msra.mxu0 %v3859
  %3899 = vmatmul.f32.gmra.mxu0 %v3879
  %v3900 = vpop.f32.mrf.mxu0
  %v3901 = vadd.f32 0.0, %v3900
  %3902 = vmatmul.f32.gmra.mxu0 %v3880
  %v3903 = vpop.f32.mrf.mxu0
  %v3904 = vadd.f32 0.0, %v3903
  %3905 = vmatmul.f32.gmra.mxu0 %v3881
  %v3906 = vpop.f32.mrf.mxu0
  %v3907 = vadd.f32 0.0, %v3906
  %3908 = vmatmul.f32.gmra.mxu0 %v3882
  %v3909 = vpop.f32.mrf.mxu0
  %v3910 = vadd.f32 0.0, %v3909
  %3911 = vdwg.mxu0
  %v3912 = vld [vmem:[%s16] sm:$0x1]
  %v3914 = vperm.slane %v3912, 0
  %v3916 = vmul.f32 %v3901, %v3914
  %v3917 = vmul.f32 %v3904, %v3914
  %v3918 = vmul.f32 %v3907, %v3914
  %v3919 = vmul.f32 %v3910, %v3914
  %v3920 = vadd.f32 %v3875, %v3916
  %v3921 = vadd.f32 %v3876, %v3917
  %v3922 = vadd.f32 %v3877, %v3918
  %v3923 = vadd.f32 %v3878, %v3919
  %s3924 = scalar_lea.vmem %s14, 32
  %v3925 = vld [vmem:[%s3924] sm:$0xff]
  %v3926 = vld [vmem:[%s3924 + $0x8] sm:$0xff]
  %v3927 = vld [vmem:[%s3924 + $0x10] sm:$0xff]
  %v3928 = vld [vmem:[%s3924 + $0x18] sm:$0xff]
  %3929 = vmatpush.msra.mxu0 %v3874
  %3930 = vmatpush.msra.mxu0 %v3873
  %3931 = vmatpush.msra.mxu0 %v3872
  %3932 = vmatpush.msra.mxu0 %v3871
  %3933 = vmatpush.msra.mxu0 %v3870
  %3934 = vmatpush.msra.mxu0 %v3869
  %3935 = vmatpush.msra.mxu0 %v3868
  %3936 = vmatpush.msra.mxu0 %v3867
  %3937 = vmatpush.msra.mxu0 %v3866
  %3938 = vmatpush.msra.mxu0 %v3865
  %3939 = vmatpush.msra.mxu0 %v3864
  %3940 = vmatpush.msra.mxu0 %v3863
  %3941 = vmatpush.msra.mxu0 %v3862
  %3942 = vmatpush.msra.mxu0 %v3861
  %3943 = vmatpush.msra.mxu0 %v3860
  %3944 = vmatpush.msra.mxu0 %v3859
  %3945 = vmatmul.f32.gmra.mxu0 %v3925
  %v3946 = vpop.f32.mrf.mxu0
  %v3947 = vadd.f32 0.0, %v3946
  %3948 = vmatmul.f32.gmra.mxu0 %v3926
  %v3949 = vpop.f32.mrf.mxu0
  %v3950 = vadd.f32 0.0, %v3949
  %3951 = vmatmul.f32.gmra.mxu0 %v3927
  %v3952 = vpop.f32.mrf.mxu0
  %v3953 = vadd.f32 0.0, %v3952
  %3954 = vmatmul.f32.gmra.mxu0 %v3928
  %v3955 = vpop.f32.mrf.mxu0
  %v3956 = vadd.f32 0.0, %v3955
  %3957 = vdwg.mxu0
  %s3958 = scalar_lea.vmem %s16, 1
  %v3959 = vld [vmem:[%s3958] sm:$0x1]
  %v3961 = vperm.slane %v3959, 0
  %v3963 = vmul.f32 %v3947, %v3961
  %v3964 = vmul.f32 %v3950, %v3961
  %v3965 = vmul.f32 %v3953, %v3961
  %v3966 = vmul.f32 %v3956, %v3961
  %v3967 = vadd.f32 %v3920, %v3963
  %v3968 = vadd.f32 %v3921, %v3964
  %v3969 = vadd.f32 %v3922, %v3965
  %v3970 = vadd.f32 %v3923, %v3966
  %v3971 = vmax.f32 %v3967, 0.0
  %v3972 = vmax.f32 %v3968, 0.0
  %v3973 = vmax.f32 %v3969, 0.0
  %v3974 = vmax.f32 %v3970, 0.0
  %v3975 = vld [vmem:[%s17] sm:$0xf]
  %vm3976 = vcmask 31744
  %v3978 = vsel %vm3976, %v3971, 0
  %v3981 = vsel %vm3976, %v3972, 0
  %v3984 = vsel %vm3976, %v3973, 0
  %v3987 = vsel %vm3976, %v3974, 0
  %vm3989 = vcmask 1043456
  %v3991 = vsel %vm3989, %v3975, 0
  %3993 = vmatpush.msra.mxu0 0.0
  %3994 = vmatpush.msra.mxu0 0.0
  %3995 = vmatpush.msra.mxu0 0.0
  %3996 = vmatpush.msra.mxu0 0.0
  %3997 = vmatpush.msra.mxu0 0.0
  %3998 = vmatpush.msra.mxu0 0.0
  %3999 = vmatpush.msra.mxu0 0.0
  %4000 = vmatpush.msra.mxu0 0.0
  %4001 = vmatpush.msra.mxu0 0.0
  %4002 = vmatpush.msra.mxu0 0.0
  %4003 = vmatpush.msra.mxu0 0.0
  %4004 = vmatpush.msra.mxu0 0.0
  %4005 = vmatpush.msra.mxu0 0.0
  %4006 = vmatpush.msra.mxu0 0.0
  %4007 = vmatpush.msra.mxu0 0.0
  %4008 = vmatpush.msra.mxu0 %v3991
  %4009 = vmatmul.f32.gmra.mxu0 %v3978
  %v4010 = vpop.f32.mrf.mxu0
  %v4011 = vadd.f32 0.0, %v4010
  %4012 = vmatmul.f32.gmra.mxu0 %v3981
  %v4013 = vpop.f32.mrf.mxu0
  %v4014 = vadd.f32 0.0, %v4013
  %4015 = vmatmul.f32.gmra.mxu0 %v3984
  %v4016 = vpop.f32.mrf.mxu0
  %v4017 = vadd.f32 0.0, %v4016
  %4018 = vmatmul.f32.gmra.mxu0 %v3987
  %v4019 = vpop.f32.mrf.mxu0
  %v4020 = vadd.f32 0.0, %v4019
  %4021 = vdwg.mxu0
  %s4022 = scalar_lea.vmem %s17, 4
  %v4023 = vld [vmem:[%s4022] sm:$0xf]
  %v4025 = vsel %vm3989, %v4023, 0
  %4027 = vmatpush.msra.mxu0 0.0
  %4028 = vmatpush.msra.mxu0 0.0
  %4029 = vmatpush.msra.mxu0 0.0
  %4030 = vmatpush.msra.mxu0 0.0
  %4031 = vmatpush.msra.mxu0 0.0
  %4032 = vmatpush.msra.mxu0 0.0
  %4033 = vmatpush.msra.mxu0 0.0
  %4034 = vmatpush.msra.mxu0 0.0
  %4035 = vmatpush.msra.mxu0 0.0
  %4036 = vmatpush.msra.mxu0 0.0
  %4037 = vmatpush.msra.mxu0 0.0
  %4038 = vmatpush.msra.mxu0 0.0
  %4039 = vmatpush.msra.mxu0 0.0
  %4040 = vmatpush.msra.mxu0 0.0
  %4041 = vmatpush.msra.mxu0 0.0
  %4042 = vmatpush.msra.mxu0 %v4025
  %4043 = vmatmul.f32.gmra.mxu0 %v3978
  %v4044 = vpop.f32.mrf.mxu0
  %v4045 = vadd.f32 0.0, %v4044
  %4046 = vmatmul.f32.gmra.mxu0 %v3981
  %v4047 = vpop.f32.mrf.mxu0
  %v4048 = vadd.f32 0.0, %v4047
  %4049 = vmatmul.f32.gmra.mxu0 %v3984
  %v4050 = vpop.f32.mrf.mxu0
  %v4051 = vadd.f32 0.0, %v4050
  %4052 = vmatmul.f32.gmra.mxu0 %v3987
  %v4053 = vpop.f32.mrf.mxu0
  %v4054 = vadd.f32 0.0, %v4053
  %4055 = vdwg.mxu0
  %v4056 = vld [vmem:[%s18] sm:$0xff]
  %v4057 = vld [vmem:[%s18 + $0x8] sm:$0xff]
  %v4058 = vld [vmem:[%s18 + $0x10] sm:$0xff]
  %v4059 = vld [vmem:[%s18 + $0x18] sm:$0xff]
  %v4060 = vld [vmem:[%s18 + $0x20] sm:$0xff]
  %v4061 = vld [vmem:[%s18 + $0x28] sm:$0xff]
  %v4062 = vld [vmem:[%s18 + $0x30] sm:$0xff]
  %v4063 = vld [vmem:[%s18 + $0x38] sm:$0xff]
  %v4064 = vld [vmem:[%s18 + $0x40] sm:$0xff]
  %v4065 = vld [vmem:[%s18 + $0x48] sm:$0xff]
  %v4066 = vld [vmem:[%s18 + $0x50] sm:$0xff]
  %v4067 = vld [vmem:[%s18 + $0x58] sm:$0xff]
  %v4068 = vld [vmem:[%s18 + $0x60] sm:$0xff]
  %v4069 = vld [vmem:[%s18 + $0x68] sm:$0xff]
  %v4070 = vld [vmem:[%s18 + $0x70] sm:$0xff]
  %v4071 = vld [vmem:[%s18 + $0x78] sm:$0xff]
  %v4072 = vld [vmem:[%s19] sm:$0xff]
  %v4073 = vld [vmem:[%s19 + $0x8] sm:$0xff]
  %v4074 = vld [vmem:[%s19 + $0x10] sm:$0xff]
  %v4075 = vld [vmem:[%s19 + $0x18] sm:$0xff]
  %v4076 = vld [vmem:[%s19 + $0x20] sm:$0xff]
  %v4077 = vld [vmem:[%s19 + $0x28] sm:$0xff]
  %v4078 = vld [vmem:[%s19 + $0x30] sm:$0xff]
  %v4079 = vld [vmem:[%s19 + $0x38] sm:$0xff]
  %v4080 = vld [vmem:[%s19 + $0x40] sm:$0xff]
  %v4081 = vld [vmem:[%s19 + $0x48] sm:$0xff]
  %v4082 = vld [vmem:[%s19 + $0x50] sm:$0xff]
  %v4083 = vld [vmem:[%s19 + $0x58] sm:$0xff]
  %v4084 = vld [vmem:[%s19 + $0x60] sm:$0xff]
  %v4085 = vld [vmem:[%s19 + $0x68] sm:$0xff]
  %v4086 = vld [vmem:[%s19 + $0x70] sm:$0xff]
  %v4087 = vld [vmem:[%s19 + $0x78] sm:$0xff]
  %4089 = vset.pattern.permute.xlu0 0
  %4090 = vperm.xlu0 %4089, %v4072
  %v4091 = vpop.permute.xlu0 %4090
  %4094 = vset.pattern.permute.xlu0 0
  %4095 = vperm.xlu0 %4094, %v4073
  %v4096 = vpop.permute.xlu0 %4095
  %4099 = vset.pattern.permute.xlu0 0
  %4100 = vperm.xlu0 %4099, %v4074
  %v4101 = vpop.permute.xlu0 %4100
  %4104 = vset.pattern.permute.xlu0 0
  %4105 = vperm.xlu0 %4104, %v4075
  %v4106 = vpop.permute.xlu0 %4105
  %4109 = vset.pattern.permute.xlu0 0
  %4110 = vperm.xlu0 %4109, %v4076
  %v4111 = vpop.permute.xlu0 %4110
  %4114 = vset.pattern.permute.xlu0 0
  %4115 = vperm.xlu0 %4114, %v4077
  %v4116 = vpop.permute.xlu0 %4115
  %4119 = vset.pattern.permute.xlu0 0
  %4120 = vperm.xlu0 %4119, %v4078
  %v4121 = vpop.permute.xlu0 %4120
  %4124 = vset.pattern.permute.xlu0 0
  %4125 = vperm.xlu0 %4124, %v4079
  %v4126 = vpop.permute.xlu0 %4125
  %4129 = vset.pattern.permute.xlu0 0
  %4130 = vperm.xlu0 %4129, %v4080
  %v4131 = vpop.permute.xlu0 %4130
  %4134 = vset.pattern.permute.xlu0 0
  %4135 = vperm.xlu0 %4134, %v4081
  %v4136 = vpop.permute.xlu0 %4135
  %4139 = vset.pattern.permute.xlu0 0
  %4140 = vperm.xlu0 %4139, %v4082
  %v4141 = vpop.permute.xlu0 %4140
  %4144 = vset.pattern.permute.xlu0 0
  %4145 = vperm.xlu0 %4144, %v4083
  %v4146 = vpop.permute.xlu0 %4145
  %4149 = vset.pattern.permute.xlu0 0
  %4150 = vperm.xlu0 %4149, %v4084
  %v4151 = vpop.permute.xlu0 %4150
  %4154 = vset.pattern.permute.xlu0 0
  %4155 = vperm.xlu0 %4154, %v4085
  %v4156 = vpop.permute.xlu0 %4155
  %4159 = vset.pattern.permute.xlu0 0
  %4160 = vperm.xlu0 %4159, %v4086
  %v4161 = vpop.permute.xlu0 %4160
  %4164 = vset.pattern.permute.xlu0 0
  %4165 = vperm.xlu0 %4164, %v4087
  %v4166 = vpop.permute.xlu0 %4165
  %v4169 = vsel %vm669, %v4056, 0
  %v4172 = vsel %vm669, %v4057, 0
  %v4175 = vsel %vm669, %v4058, 0
  %v4178 = vsel %vm669, %v4059, 0
  %v4181 = vsel %vm669, %v4060, 0
  %v4184 = vsel %vm669, %v4061, 0
  %v4187 = vsel %vm669, %v4062, 0
  %v4190 = vsel %vm669, %v4063, 0
  %v4193 = vsel %vm669, %v4064, 0
  %v4196 = vsel %vm669, %v4065, 0
  %v4199 = vsel %vm669, %v4066, 0
  %v4202 = vsel %vm669, %v4067, 0
  %v4205 = vsel %vm669, %v4068, 0
  %v4208 = vsel %vm669, %v4069, 0
  %v4211 = vsel %vm669, %v4070, 0
  %v4214 = vsel %vm669, %v4071, 0
  %4216 = vmatpush.msra.mxu0 0.0
  %4217 = vmatpush.msra.mxu0 0.0
  %4218 = vmatpush.msra.mxu0 0.0
  %4219 = vmatpush.msra.mxu0 0.0
  %4220 = vmatpush.msra.mxu0 0.0
  %4221 = vmatpush.msra.mxu0 0.0
  %4222 = vmatpush.msra.mxu0 0.0
  %4223 = vmatpush.msra.mxu0 0.0
  %4224 = vmatpush.msra.mxu0 %v4054
  %4225 = vmatpush.msra.mxu0 %v4051
  %4226 = vmatpush.msra.mxu0 %v4048
  %4227 = vmatpush.msra.mxu0 %v4045
  %4228 = vmatpush.msra.mxu0 %v4020
  %4229 = vmatpush.msra.mxu0 %v4017
  %4230 = vmatpush.msra.mxu0 %v4014
  %4231 = vmatpush.msra.mxu0 %v4011
  %4232 = vmatmul.f32.gmra.mxu0 %v4169
  %v4233 = vpop.f32.mrf.mxu0
  %v4234 = vadd.f32 %v4091, %v4233
  %4235 = vmatmul.f32.gmra.mxu0 %v4172
  %v4236 = vpop.f32.mrf.mxu0
  %v4237 = vadd.f32 %v4096, %v4236
  %4238 = vmatmul.f32.gmra.mxu0 %v4175
  %v4239 = vpop.f32.mrf.mxu0
  %v4240 = vadd.f32 %v4101, %v4239
  %4241 = vmatmul.f32.gmra.mxu0 %v4178
  %v4242 = vpop.f32.mrf.mxu0
  %v4243 = vadd.f32 %v4106, %v4242
  %4244 = vmatmul.f32.gmra.mxu0 %v4181
  %v4245 = vpop.f32.mrf.mxu0
  %v4246 = vadd.f32 %v4111, %v4245
  %4247 = vmatmul.f32.gmra.mxu0 %v4184
  %v4248 = vpop.f32.mrf.mxu0
  %v4249 = vadd.f32 %v4116, %v4248
  %4250 = vmatmul.f32.gmra.mxu0 %v4187
  %v4251 = vpop.f32.mrf.mxu0
  %v4252 = vadd.f32 %v4121, %v4251
  %4253 = vmatmul.f32.gmra.mxu0 %v4190
  %v4254 = vpop.f32.mrf.mxu0
  %v4255 = vadd.f32 %v4126, %v4254
  %4256 = vmatmul.f32.gmra.mxu0 %v4193
  %v4257 = vpop.f32.mrf.mxu0
  %v4258 = vadd.f32 %v4131, %v4257
  %4259 = vmatmul.f32.gmra.mxu0 %v4196
  %v4260 = vpop.f32.mrf.mxu0
  %v4261 = vadd.f32 %v4136, %v4260
  %4262 = vmatmul.f32.gmra.mxu0 %v4199
  %v4263 = vpop.f32.mrf.mxu0
  %v4264 = vadd.f32 %v4141, %v4263
  %4265 = vmatmul.f32.gmra.mxu0 %v4202
  %v4266 = vpop.f32.mrf.mxu0
  %v4267 = vadd.f32 %v4146, %v4266
  %4268 = vmatmul.f32.gmra.mxu0 %v4205
  %v4269 = vpop.f32.mrf.mxu0
  %v4270 = vadd.f32 %v4151, %v4269
  %4271 = vmatmul.f32.gmra.mxu0 %v4208
  %v4272 = vpop.f32.mrf.mxu0
  %v4273 = vadd.f32 %v4156, %v4272
  %4274 = vmatmul.f32.gmra.mxu0 %v4211
  %v4275 = vpop.f32.mrf.mxu0
  %v4276 = vadd.f32 %v4161, %v4275
  %4277 = vmatmul.f32.gmra.mxu0 %v4214
  %v4278 = vpop.f32.mrf.mxu0
  %v4279 = vadd.f32 %v4166, %v4278
  %4280 = vdwg.mxu0
  %v4281 = vmax.f32 %v4234, 0.0
  %v4282 = vmax.f32 %v4237, 0.0
  %v4283 = vmax.f32 %v4240, 0.0
  %v4284 = vmax.f32 %v4243, 0.0
  %v4285 = vmax.f32 %v4246, 0.0
  %v4286 = vmax.f32 %v4249, 0.0
  %v4287 = vmax.f32 %v4252, 0.0
  %v4288 = vmax.f32 %v4255, 0.0
  %v4289 = vmax.f32 %v4258, 0.0
  %v4290 = vmax.f32 %v4261, 0.0
  %v4291 = vmax.f32 %v4264, 0.0
  %v4292 = vmax.f32 %v4267, 0.0
  %v4293 = vmax.f32 %v4270, 0.0
  %v4294 = vmax.f32 %v4273, 0.0
  %v4295 = vmax.f32 %v4276, 0.0
  %v4296 = vmax.f32 %v4279, 0.0
  %v4297 = vld [vmem:[%s20] sm:$0xff]
  %v4298 = vld [vmem:[%s20 + $0x8] sm:$0xf]
  %v4299 = vld [vmem:[%s21] sm:$0xff]
  %v4300 = vld [vmem:[%s21 + $0x8] sm:$0xf]
  %4302 = vset.pattern.permute.xlu0 0
  %4303 = vperm.xlu0 %4302, %v4299
  %v4304 = vpop.permute.xlu0 %4303
  %4307 = vset.pattern.permute.xlu0 0
  %4308 = vperm.xlu0 %4307, %v4300
  %v4309 = vpop.permute.xlu0 %4308
  %4311 = vmatpush.msra.mxu0 %v4296
  %4312 = vmatpush.msra.mxu0 %v4295
  %4313 = vmatpush.msra.mxu0 %v4294
  %4314 = vmatpush.msra.mxu0 %v4293
  %4315 = vmatpush.msra.mxu0 %v4292
  %4316 = vmatpush.msra.mxu0 %v4291
  %4317 = vmatpush.msra.mxu0 %v4290
  %4318 = vmatpush.msra.mxu0 %v4289
  %4319 = vmatpush.msra.mxu0 %v4288
  %4320 = vmatpush.msra.mxu0 %v4287
  %4321 = vmatpush.msra.mxu0 %v4286
  %4322 = vmatpush.msra.mxu0 %v4285
  %4323 = vmatpush.msra.mxu0 %v4284
  %4324 = vmatpush.msra.mxu0 %v4283
  %4325 = vmatpush.msra.mxu0 %v4282
  %4326 = vmatpush.msra.mxu0 %v4281
  %4327 = vmatmul.f32.gmra.mxu0 %v4297
  %v4328 = vpop.f32.mrf.mxu0
  %v4329 = vadd.f32 %v4304, %v4328
  %4330 = vmatmul.f32.gmra.mxu0 %v4298
  %v4331 = vpop.f32.mrf.mxu0
  %v4332 = vadd.f32 %v4309, %v4331
  %4333 = vdwg.mxu0
  %v4334 = vmax.f32 %v4329, 0.0
  %v4335 = vmax.f32 %v4332, 0.0
  %vm4336 = vcmask 15360
  %4337 = vst.msk [vmem:[%s27] sm:$0xff] %vm4336, %v4334
  %vm4338 = vcmask 11264
  %4339 = vst.msk [vmem:[%s27 + $0x8] sm:$0xf] %vm4338, %v4335
  %v4340 = vld [vmem:[%s22] sm:$0xff]
  %v4341 = vld [vmem:[%s22 + $0x8] sm:$0xff]
  %v4342 = vld [vmem:[%s22 + $0x10] sm:$0xff]
  %v4343 = vld [vmem:[%s22 + $0x18] sm:$0xff]
  %v4344 = vld [vmem:[%s22 + $0x20] sm:$0xff]
  %v4345 = vld [vmem:[%s22 + $0x28] sm:$0xff]
  %v4346 = vld [vmem:[%s22 + $0x30] sm:$0xff]
  %v4347 = vld [vmem:[%s22 + $0x38] sm:$0xff]
  %v4348 = vld [vmem:[%s22 + $0x40] sm:$0xff]
  %v4349 = vld [vmem:[%s22 + $0x48] sm:$0xff]
  %v4350 = vld [vmem:[%s22 + $0x50] sm:$0xff]
  %v4351 = vld [vmem:[%s22 + $0x58] sm:$0xff]
  %v4352 = vld [vmem:[%s22 + $0x60] sm:$0xff]
  %v4353 = vld [vmem:[%s22 + $0x68] sm:$0xff]
  %v4354 = vld [vmem:[%s22 + $0x70] sm:$0xff]
  %v4355 = vld [vmem:[%s22 + $0x78] sm:$0xff]
  %v4356 = vld [vmem:[%s23] sm:$0xff]
  %v4357 = vld [vmem:[%s23 + $0x8] sm:$0xff]
  %v4358 = vld [vmem:[%s23 + $0x10] sm:$0xff]
  %v4359 = vld [vmem:[%s23 + $0x18] sm:$0xff]
  %v4360 = vld [vmem:[%s23 + $0x20] sm:$0xff]
  %v4361 = vld [vmem:[%s23 + $0x28] sm:$0xff]
  %v4362 = vld [vmem:[%s23 + $0x30] sm:$0xff]
  %v4363 = vld [vmem:[%s23 + $0x38] sm:$0xff]
  %v4364 = vld [vmem:[%s23 + $0x40] sm:$0xff]
  %v4365 = vld [vmem:[%s23 + $0x48] sm:$0xff]
  %v4366 = vld [vmem:[%s23 + $0x50] sm:$0xff]
  %v4367 = vld [vmem:[%s23 + $0x58] sm:$0xff]
  %v4368 = vld [vmem:[%s23 + $0x60] sm:$0xff]
  %v4369 = vld [vmem:[%s23 + $0x68] sm:$0xff]
  %v4370 = vld [vmem:[%s23 + $0x70] sm:$0xff]
  %v4371 = vld [vmem:[%s23 + $0x78] sm:$0xff]
  %vm4372 = vcmask 97280
  %v4374 = vsel %vm4372, %v4356, 0
  %v4377 = vsel %vm4372, %v4357, 0
  %v4380 = vsel %vm4372, %v4358, 0
  %v4383 = vsel %vm4372, %v4359, 0
  %v4386 = vsel %vm4372, %v4360, 0
  %v4389 = vsel %vm4372, %v4361, 0
  %v4392 = vsel %vm4372, %v4362, 0
  %v4395 = vsel %vm4372, %v4363, 0
  %v4398 = vsel %vm4372, %v4364, 0
  %v4401 = vsel %vm4372, %v4365, 0
  %v4404 = vsel %vm4372, %v4366, 0
  %v4407 = vsel %vm4372, %v4367, 0
  %v4410 = vsel %vm4372, %v4368, 0
  %v4413 = vsel %vm4372, %v4369, 0
  %v4416 = vsel %vm4372, %v4370, 0
  %v4419 = vsel %vm4372, %v4371, 0
  %v4422 = vsel %vm3989, %v4335, 0
  %4424 = vmatpush.msra.mxu0 0.0
  %4425 = vmatpush.msra.mxu0 0.0
  %4426 = vmatpush.msra.mxu0 0.0
  %4427 = vmatpush.msra.mxu0 0.0
  %4428 = vmatpush.msra.mxu0 0.0
  %4429 = vmatpush.msra.mxu0 0.0
  %4430 = vmatpush.msra.mxu0 0.0
  %4431 = vmatpush.msra.mxu0 0.0
  %4432 = vmatpush.msra.mxu0 0.0
  %4433 = vmatpush.msra.mxu0 0.0
  %4434 = vmatpush.msra.mxu0 0.0
  %4435 = vmatpush.msra.mxu0 0.0
  %4436 = vmatpush.msra.mxu0 0.0
  %4437 = vmatpush.msra.mxu0 0.0
  %4438 = vmatpush.msra.mxu0 %v4422
  %4439 = vmatpush.msra.mxu0 %v4334
  %4440 = vmatmul.f32.gmra.mxu0 %v4374
  %v4441 = vpop.f32.mrf.mxu0
  %v4442 = vadd.f32 0.0, %v4441
  %4443 = vmatmul.f32.gmra.mxu0 %v4377
  %v4444 = vpop.f32.mrf.mxu0
  %v4445 = vadd.f32 0.0, %v4444
  %4446 = vmatmul.f32.gmra.mxu0 %v4380
  %v4447 = vpop.f32.mrf.mxu0
  %v4448 = vadd.f32 0.0, %v4447
  %4449 = vmatmul.f32.gmra.mxu0 %v4383
  %v4450 = vpop.f32.mrf.mxu0
  %v4451 = vadd.f32 0.0, %v4450
  %4452 = vmatmul.f32.gmra.mxu0 %v4386
  %v4453 = vpop.f32.mrf.mxu0
  %v4454 = vadd.f32 0.0, %v4453
  %4455 = vmatmul.f32.gmra.mxu0 %v4389
  %v4456 = vpop.f32.mrf.mxu0
  %v4457 = vadd.f32 0.0, %v4456
  %4458 = vmatmul.f32.gmra.mxu0 %v4392
  %v4459 = vpop.f32.mrf.mxu0
  %v4460 = vadd.f32 0.0, %v4459
  %4461 = vmatmul.f32.gmra.mxu0 %v4395
  %v4462 = vpop.f32.mrf.mxu0
  %v4463 = vadd.f32 0.0, %v4462
  %4464 = vmatmul.f32.gmra.mxu0 %v4398
  %v4465 = vpop.f32.mrf.mxu0
  %v4466 = vadd.f32 0.0, %v4465
  %4467 = vmatmul.f32.gmra.mxu0 %v4401
  %v4468 = vpop.f32.mrf.mxu0
  %v4469 = vadd.f32 0.0, %v4468
  %4470 = vmatmul.f32.gmra.mxu0 %v4404
  %v4471 = vpop.f32.mrf.mxu0
  %v4472 = vadd.f32 0.0, %v4471
  %4473 = vmatmul.f32.gmra.mxu0 %v4407
  %v4474 = vpop.f32.mrf.mxu0
  %v4475 = vadd.f32 0.0, %v4474
  %4476 = vmatmul.f32.gmra.mxu0 %v4410
  %v4477 = vpop.f32.mrf.mxu0
  %v4478 = vadd.f32 0.0, %v4477
  %4479 = vmatmul.f32.gmra.mxu0 %v4413
  %v4480 = vpop.f32.mrf.mxu0
  %v4481 = vadd.f32 0.0, %v4480
  %4482 = vmatmul.f32.gmra.mxu0 %v4416
  %v4483 = vpop.f32.mrf.mxu0
  %v4484 = vadd.f32 0.0, %v4483
  %4485 = vmatmul.f32.gmra.mxu0 %v4419
  %v4486 = vpop.f32.mrf.mxu0
  %v4487 = vadd.f32 0.0, %v4486
  %4488 = vdwg.mxu0
  %v4490 = vsel %vm669, %v4340, 0
  %v4493 = vsel %vm669, %v4341, 0
  %v4496 = vsel %vm669, %v4342, 0
  %v4499 = vsel %vm669, %v4343, 0
  %v4502 = vsel %vm669, %v4344, 0
  %v4505 = vsel %vm669, %v4345, 0
  %v4508 = vsel %vm669, %v4346, 0
  %v4511 = vsel %vm669, %v4347, 0
  %v4514 = vsel %vm669, %v4348, 0
  %v4517 = vsel %vm669, %v4349, 0
  %v4520 = vsel %vm669, %v4350, 0
  %v4523 = vsel %vm669, %v4351, 0
  %v4526 = vsel %vm669, %v4352, 0
  %v4529 = vsel %vm669, %v4353, 0
  %v4532 = vsel %vm669, %v4354, 0
  %v4535 = vsel %vm669, %v4355, 0
  %4537 = vmatpush.msra.mxu0 0.0
  %4538 = vmatpush.msra.mxu0 0.0
  %4539 = vmatpush.msra.mxu0 0.0
  %4540 = vmatpush.msra.mxu0 0.0
  %4541 = vmatpush.msra.mxu0 0.0
  %4542 = vmatpush.msra.mxu0 0.0
  %4543 = vmatpush.msra.mxu0 0.0
  %4544 = vmatpush.msra.mxu0 0.0
  %4545 = vmatpush.msra.mxu0 %v4054
  %4546 = vmatpush.msra.mxu0 %v4051
  %4547 = vmatpush.msra.mxu0 %v4048
  %4548 = vmatpush.msra.mxu0 %v4045
  %4549 = vmatpush.msra.mxu0 %v4020
  %4550 = vmatpush.msra.mxu0 %v4017
  %4551 = vmatpush.msra.mxu0 %v4014
  %4552 = vmatpush.msra.mxu0 %v4011
  %4553 = vmatmul.f32.gmra.mxu0 %v4490
  %v4554 = vpop.f32.mrf.mxu0
  %v4555 = vadd.f32 %v4442, %v4554
  %4556 = vmatmul.f32.gmra.mxu0 %v4493
  %v4557 = vpop.f32.mrf.mxu0
  %v4558 = vadd.f32 %v4445, %v4557
  %4559 = vmatmul.f32.gmra.mxu0 %v4496
  %v4560 = vpop.f32.mrf.mxu0
  %v4561 = vadd.f32 %v4448, %v4560
  %4562 = vmatmul.f32.gmra.mxu0 %v4499
  %v4563 = vpop.f32.mrf.mxu0
  %v4564 = vadd.f32 %v4451, %v4563
  %4565 = vmatmul.f32.gmra.mxu0 %v4502
  %v4566 = vpop.f32.mrf.mxu0
  %v4567 = vadd.f32 %v4454, %v4566
  %4568 = vmatmul.f32.gmra.mxu0 %v4505
  %v4569 = vpop.f32.mrf.mxu0
  %v4570 = vadd.f32 %v4457, %v4569
  %4571 = vmatmul.f32.gmra.mxu0 %v4508
  %v4572 = vpop.f32.mrf.mxu0
  %v4573 = vadd.f32 %v4460, %v4572
  %4574 = vmatmul.f32.gmra.mxu0 %v4511
  %v4575 = vpop.f32.mrf.mxu0
  %v4576 = vadd.f32 %v4463, %v4575
  %4577 = vmatmul.f32.gmra.mxu0 %v4514
  %v4578 = vpop.f32.mrf.mxu0
  %v4579 = vadd.f32 %v4466, %v4578
  %4580 = vmatmul.f32.gmra.mxu0 %v4517
  %v4581 = vpop.f32.mrf.mxu0
  %v4582 = vadd.f32 %v4469, %v4581
  %4583 = vmatmul.f32.gmra.mxu0 %v4520
  %v4584 = vpop.f32.mrf.mxu0
  %v4585 = vadd.f32 %v4472, %v4584
  %4586 = vmatmul.f32.gmra.mxu0 %v4523
  %v4587 = vpop.f32.mrf.mxu0
  %v4588 = vadd.f32 %v4475, %v4587
  %4589 = vmatmul.f32.gmra.mxu0 %v4526
  %v4590 = vpop.f32.mrf.mxu0
  %v4591 = vadd.f32 %v4478, %v4590
  %4592 = vmatmul.f32.gmra.mxu0 %v4529
  %v4593 = vpop.f32.mrf.mxu0
  %v4594 = vadd.f32 %v4481, %v4593
  %4595 = vmatmul.f32.gmra.mxu0 %v4532
  %v4596 = vpop.f32.mrf.mxu0
  %v4597 = vadd.f32 %v4484, %v4596
  %4598 = vmatmul.f32.gmra.mxu0 %v4535
  %v4599 = vpop.f32.mrf.mxu0
  %v4600 = vadd.f32 %v4487, %v4599
  %4601 = vdwg.mxu0
  %v4602 = vld [vmem:[%s24] sm:$0xff]
  %v4603 = vld [vmem:[%s24 + $0x8] sm:$0xff]
  %v4604 = vld [vmem:[%s24 + $0x10] sm:$0xff]
  %v4605 = vld [vmem:[%s24 + $0x18] sm:$0xff]
  %v4606 = vld [vmem:[%s24 + $0x20] sm:$0xff]
  %v4607 = vld [vmem:[%s24 + $0x28] sm:$0xff]
  %v4608 = vld [vmem:[%s24 + $0x30] sm:$0xff]
  %v4609 = vld [vmem:[%s24 + $0x38] sm:$0xff]
  %v4610 = vld [vmem:[%s24 + $0x40] sm:$0xff]
  %v4611 = vld [vmem:[%s24 + $0x48] sm:$0xff]
  %v4612 = vld [vmem:[%s24 + $0x50] sm:$0xff]
  %v4613 = vld [vmem:[%s24 + $0x58] sm:$0xff]
  %v4614 = vld [vmem:[%s24 + $0x60] sm:$0xff]
  %v4615 = vld [vmem:[%s24 + $0x68] sm:$0xff]
  %v4616 = vld [vmem:[%s24 + $0x70] sm:$0xff]
  %v4617 = vld [vmem:[%s24 + $0x78] sm:$0xff]
  %4619 = vset.pattern.permute.xlu0 0
  %4620 = vperm.xlu0 %4619, %v4602
  %v4621 = vpop.permute.xlu0 %4620
  %4624 = vset.pattern.permute.xlu0 0
  %4625 = vperm.xlu0 %4624, %v4603
  %v4626 = vpop.permute.xlu0 %4625
  %4629 = vset.pattern.permute.xlu0 0
  %4630 = vperm.xlu0 %4629, %v4604
  %v4631 = vpop.permute.xlu0 %4630
  %4634 = vset.pattern.permute.xlu0 0
  %4635 = vperm.xlu0 %4634, %v4605
  %v4636 = vpop.permute.xlu0 %4635
  %4639 = vset.pattern.permute.xlu0 0
  %4640 = vperm.xlu0 %4639, %v4606
  %v4641 = vpop.permute.xlu0 %4640
  %4644 = vset.pattern.permute.xlu0 0
  %4645 = vperm.xlu0 %4644, %v4607
  %v4646 = vpop.permute.xlu0 %4645
  %4649 = vset.pattern.permute.xlu0 0
  %4650 = vperm.xlu0 %4649, %v4608
  %v4651 = vpop.permute.xlu0 %4650
  %4654 = vset.pattern.permute.xlu0 0
  %4655 = vperm.xlu0 %4654, %v4609
  %v4656 = vpop.permute.xlu0 %4655
  %4659 = vset.pattern.permute.xlu0 0
  %4660 = vperm.xlu0 %4659, %v4610
  %v4661 = vpop.permute.xlu0 %4660
  %4664 = vset.pattern.permute.xlu0 0
  %4665 = vperm.xlu0 %4664, %v4611
  %v4666 = vpop.permute.xlu0 %4665
  %4669 = vset.pattern.permute.xlu0 0
  %4670 = vperm.xlu0 %4669, %v4612
  %v4671 = vpop.permute.xlu0 %4670
  %4674 = vset.pattern.permute.xlu0 0
  %4675 = vperm.xlu0 %4674, %v4613
  %v4676 = vpop.permute.xlu0 %4675
  %4679 = vset.pattern.permute.xlu0 0
  %4680 = vperm.xlu0 %4679, %v4614
  %v4681 = vpop.permute.xlu0 %4680
  %4684 = vset.pattern.permute.xlu0 0
  %4685 = vperm.xlu0 %4684, %v4615
  %v4686 = vpop.permute.xlu0 %4685
  %4689 = vset.pattern.permute.xlu0 0
  %4690 = vperm.xlu0 %4689, %v4616
  %v4691 = vpop.permute.xlu0 %4690
  %4694 = vset.pattern.permute.xlu0 0
  %4695 = vperm.xlu0 %4694, %v4617
  %v4696 = vpop.permute.xlu0 %4695
  %v4698 = vadd.f32 %v4555, %v4621
  %v4699 = vadd.f32 %v4558, %v4626
  %v4700 = vadd.f32 %v4561, %v4631
  %v4701 = vadd.f32 %v4564, %v4636
  %v4702 = vadd.f32 %v4567, %v4641
  %v4703 = vadd.f32 %v4570, %v4646
  %v4704 = vadd.f32 %v4573, %v4651
  %v4705 = vadd.f32 %v4576, %v4656
  %v4706 = vadd.f32 %v4579, %v4661
  %v4707 = vadd.f32 %v4582, %v4666
  %v4708 = vadd.f32 %v4585, %v4671
  %v4709 = vadd.f32 %v4588, %v4676
  %v4710 = vadd.f32 %v4591, %v4681
  %v4711 = vadd.f32 %v4594, %v4686
  %v4712 = vadd.f32 %v4597, %v4691
  %v4713 = vadd.f32 %v4600, %v4696
  %v4714 = vmax.f32 %v4698, 0.0
  %v4715 = vmax.f32 %v4699, 0.0
  %v4716 = vmax.f32 %v4700, 0.0
  %v4717 = vmax.f32 %v4701, 0.0
  %v4718 = vmax.f32 %v4702, 0.0
  %v4719 = vmax.f32 %v4703, 0.0
  %v4720 = vmax.f32 %v4704, 0.0
  %v4721 = vmax.f32 %v4705, 0.0
  %v4722 = vmax.f32 %v4706, 0.0
  %v4723 = vmax.f32 %v4707, 0.0
  %v4724 = vmax.f32 %v4708, 0.0
  %v4725 = vmax.f32 %v4709, 0.0
  %v4726 = vmax.f32 %v4710, 0.0
  %v4727 = vmax.f32 %v4711, 0.0
  %v4728 = vmax.f32 %v4712, 0.0
  %v4729 = vmax.f32 %v4713, 0.0
  %v4730 = vld [vmem:[%s25] sm:$0x3f]
  %v4731 = vld [vmem:[%s26] sm:$0x3f]
  %4733 = vset.pattern.permute.xlu0 0
  %4734 = vperm.xlu0 %4733, %v4731
  %v4735 = vpop.permute.xlu0 %4734
  %4737 = vmatpush.msra.mxu0 %v4729
  %4738 = vmatpush.msra.mxu0 %v4728
  %4739 = vmatpush.msra.mxu0 %v4727
  %4740 = vmatpush.msra.mxu0 %v4726
  %4741 = vmatpush.msra.mxu0 %v4725
  %4742 = vmatpush.msra.mxu0 %v4724
  %4743 = vmatpush.msra.mxu0 %v4723
  %4744 = vmatpush.msra.mxu0 %v4722
  %4745 = vmatpush.msra.mxu0 %v4721
  %4746 = vmatpush.msra.mxu0 %v4720
  %4747 = vmatpush.msra.mxu0 %v4719
  %4748 = vmatpush.msra.mxu0 %v4718
  %4749 = vmatpush.msra.mxu0 %v4717
  %4750 = vmatpush.msra.mxu0 %v4716
  %4751 = vmatpush.msra.mxu0 %v4715
  %4752 = vmatpush.msra.mxu0 %v4714
  %4753 = vmatmul.f32.gmra.mxu0 %v4730
  %v4754 = vpop.f32.mrf.mxu0
  %v4755 = vadd.f32 %v4735, %v4754
  %4756 = vdwg.mxu0
  %v4757 = vmax.f32 %v4755, 0.0
  %vm4758 = vcmask 13312
  %4759 = vst.msk [vmem:[%s28] sm:$0x3f] %vm4758, %v4757
  // Predicated region
  $region110: #{model_forward.1} parent=0 // pred_check
    _
  $region111: #{model_forward.1} parent=0 // pred_check_branch
    %4761 = sbr.rel (0) target = $region113
  $region112: #{model_forward.1} parent=0 // pred_region
    _
  $region113: #{model_forward.1} parent=0 // pred_fallthru
    _
  // Predicated region
  $region114: #{model_forward.1} parent=0 // pred_check
    _
  $region115: #{model_forward.1} parent=0 // pred_check_branch
    %4763 = sbr.rel (0) target = $region117
  $region116: #{model_forward.1} parent=0 // pred_region
    _
  $region117: #{model_forward.1} parent=0 // pred_fallthru
    _
  // Predicated region
  $region118: #{model_forward.1} parent=0 // pred_check
    _
  $region119: #{model_forward.1} parent=0 // pred_check_branch
    %4765 = sbr.rel (0) target = $region121
  $region120: #{model_forward.1} parent=0 // pred_region
    _
  $region121: #{model_forward.1} parent=0 // pred_fallthru
    _
  // Predicated region
  $region122: #{model_forward.1} parent=0 // pred_check
    _
  $region123: #{model_forward.1} parent=0 // pred_check_branch
    %4767 = sbr.rel (0) target = $region125
  $region124: #{model_forward.1} parent=0 // pred_region
    _
  $region125: #{model_forward.1} parent=0 // pred_fallthru
    _

</llo_original>
